<compile_context>
chip_gen: v5e
topology: v5e:2x2
jax: 0.10.0
libtpu: 0.0.40
codegen_flags: <defaults>
</compile_context>

<pallas_src>
import functools

import jax
import jax.numpy as jnp
import numpy as np
from jax.experimental import pallas as pl
from jax.experimental.pallas import tpu as pltpu


# ---------------------------------------------------------------------------
# In-kernel helper: 3x3 conv, stride 1, padding 1, on a spatially-flattened
# activation value.  a: (H*W, Cin) f32, w_ref: (9, Cin, Cout).
# Returns the raw accumulator (H*W, Cout) f32 (no bias / activation).
# ---------------------------------------------------------------------------
def _conv3x3_same(a, w_ref, col_masks, H, W):
    HW, Cin = a.shape
    Cout = w_ref.shape[-1]

    # (W+1)-row zero pads on both ends: every vertical out-of-bounds tap then
    # reads zeros automatically, so no per-row masks are needed.
    pad = jnp.zeros((W + 1, Cin), dtype=a.dtype)

    acc = jnp.zeros((HW, Cout), dtype=jnp.float32)
    for dx in (-1, 0, 1):
        # Horizontal border: a dx=-1 tap never legally reads input column W-1
        # (a wrapped read always lands there), and a dx=+1 tap never legally
        # reads column 0.  Zeroing that single column of the source makes the
        # horizontal border handling implicit -- 2 mask multiplies total.
        src = a if col_masks[dx] is None else a * col_masks[dx]
        a_ext = jnp.concatenate([pad, src, pad], axis=0)      # (HW + 2W + 2, Cin)
        for ky in range(3):
            dy = ky - 1
            start = (W + 1) + dy * W + dx                     # static offset
            patch = a_ext[start:start + HW, :]                # stride-1 slice
            acc = acc + jnp.dot(patch, w_ref[ky * 3 + (dx + 1)],
                                preferred_element_type=jnp.float32)
    return acc


# ---------------------------------------------------------------------------
# Fused kernel: 1x1 -> 3x3 -> 3x3(stride) with folded-BN epilogues, per image.
# ---------------------------------------------------------------------------
def fused_branch_kernel(*refs, H, W, stride):
    if stride != 1:
        (x_ref, w1_ref, b1_ref, w2_ref, b2_ref,
         w3_ref, b3_ref, sel_ref, out_ref) = refs
    else:
        (x_ref, w1_ref, b1_ref, w2_ref, b2_ref,
         w3_ref, b3_ref, out_ref) = refs
        sel_ref = None

    HW = H * W
    col = jax.lax.broadcasted_iota(jnp.int32, (HW, 1), 0) % W
    col_masks = {
        -1: (col != W - 1).astype(jnp.float32),
        0: None,
        1: (col != 0).astype(jnp.float32),
    }

    # Stage 1: 1x1 conv (+ folded BN scale) + offset + ReLU.  One fat matmul.
    a = jnp.dot(x_ref[...], w1_ref[...], preferred_element_type=jnp.float32)
    a = jnp.maximum(a + b1_ref[...], 0.0)                     # (H*W, C1)

    # Stage 2: 3x3 conv, stride 1, pad 1.
    a = _conv3x3_same(a, w2_ref, col_masks, H, W)
    a = jnp.maximum(a + b2_ref[...], 0.0)                     # (H*W, C2)

    # Stage 3: 3x3 conv, pad 1, given stride (computed at stride 1,
    # subsampled via a constant 0/1 selection matrix on the MXU).
    a = _conv3x3_same(a, w3_ref, col_masks, H, W)             # (H*W, C3)
    if stride != 1:
        a = jnp.dot(sel_ref[...], a, preferred_element_type=jnp.float32)
    a = jnp.maximum(a + b3_ref[...], 0.0)                     # (Ho*Wo, C3)

    out_ref[...] = a.astype(out_ref.dtype)


# ---------------------------------------------------------------------------
# Wrapper: pallas_call plumbing + host-side BN folding / layout.
# ---------------------------------------------------------------------------
def inception_double3x3_branch(x_nchw, params, stride):
    (w1, s1, o1), (w2, s2, o2), (w3, s3, o3) = params
    N, Cin, H, W = x_nchw.shape
    C1, C2, C3 = w1.shape[-1], w2.shape[-1], w3.shape[-1]
    Ho = (H + 2 - 3) // stride + 1
    Wo = (W + 2 - 3) // stride + 1

    # NCHW -> NHWC -> flatten spatial dims (done once in XLA, outside kernel).
    x_flat = jnp.transpose(x_nchw, (0, 2, 3, 1)).reshape(N, H * W, Cin)

    # Fold the BN scale into the conv weights (conv is linear in w).
    w1f = (w1 * s1.reshape(1, 1, 1, C1)).reshape(Cin, C1)
    w2f = (w2 * s2.reshape(1, 1, 1, C2)).reshape(9, C1, C2)
    w3f = (w3 * s3.reshape(1, 1, 1, C3)).reshape(9, C2, C3)

    args = [x_flat, w1f, o1, w2f, o2, w3f, o3]
    in_specs = [
        pl.BlockSpec((None, H * W, Cin), lambda n: (n, 0, 0)),
        pl.BlockSpec((Cin, C1), lambda n: (0, 0)),
        pl.BlockSpec((1, C1), lambda n: (0, 0)),
        pl.BlockSpec((9, C1, C2), lambda n: (0, 0, 0)),
        pl.BlockSpec((1, C2), lambda n: (0, 0)),
        pl.BlockSpec((9, C2, C3), lambda n: (0, 0, 0)),
        pl.BlockSpec((1, C3), lambda n: (0, 0)),
    ]
    if stride != 1:
        # Constant 0/1 selection matrix: row j picks flat position
        # (j // Wo)*stride*W + (j % Wo)*stride of the stride-1 output.
        j = jnp.arange(Ho * Wo)
        src = (j // Wo) * (stride * W) + (j % Wo) * stride
        sel = (src[:, None] == jnp.arange(H * W)[None, :]).astype(jnp.float32)
        args.append(sel)
        in_specs.append(pl.BlockSpec((Ho * Wo, H * W), lambda n: (0, 0)))

    kernel = functools.partial(fused_branch_kernel, H=H, W=W, stride=stride)
    y = pl.pallas_call(
        kernel,
        out_shape=jax.ShapeDtypeStruct((N, Ho * Wo, C3), jnp.float32),
        grid=(N,),
        in_specs=in_specs,
        out_specs=pl.BlockSpec((None, Ho * Wo, C3), lambda n: (n, 0, 0)),
        compiler_params=pltpu.CompilerParams(dimension_semantics=("parallel",)),
    )(*args)

    # (N, Ho*Wo, C3) -> NHWC -> NCHW
    return jnp.transpose(y.reshape(N, Ho, Wo, C3), (0, 3, 1, 2))


# ---------------------------------------------------------------------------
# Parameter construction: conv(weight, bias) + BatchNorm folded to (scale, off)
# ---------------------------------------------------------------------------
def make_conv_bn_params(key, cin, cout, k):
    kw, kb, kg, kbe, km, kv = jax.random.split(key, 6)
    fan_in = cin * k * k
    w = jax.random.normal(kw, (k, k, cin, cout), jnp.float32) / np.sqrt(fan_in)
    b = 0.1 * jax.random.normal(kb, (cout,), jnp.float32)
    gamma = 1.0 + 0.1 * jax.random.normal(kg, (cout,), jnp.float32)
    beta = 0.1 * jax.random.normal(kbe, (cout,), jnp.float32)
    mean = 0.1 * jax.random.normal(km, (cout,), jnp.float32)
    var = jnp.abs(jax.random.normal(kv, (cout,), jnp.float32)) + 0.5
    eps = 1e-5
    scale = gamma / jnp.sqrt(var + eps)                 # per-channel multiplier
    offset = beta + scale * (b - mean)                  # per-channel additive
    return w, scale.reshape(1, cout), offset.reshape(1, cout)


# ---------------------------------------------------------------------------
# Pure-JAX reference for correctness check (unfused, unfolded)
# ---------------------------------------------------------------------------
def _ref_conv_bn_relu(x, w, scale, off, stride, pad):
    y = jax.lax.conv_general_dilated(
        x, w, window_strides=(stride, stride), padding=pad,
        dimension_numbers=("NHWC", "HWIO", "NHWC"))
    y = y * scale.reshape(1, 1, 1, -1) + off.reshape(1, 1, 1, -1)
    return jnp.maximum(y, 0.0)


def reference(x_nchw, params, stride):
    (w1, s1, o1), (w2, s2, o2), (w3, s3, o3) = params
    x = jnp.transpose(x_nchw, (0, 2, 3, 1))
    x = _ref_conv_bn_relu(x, w1, s1, o1, 1, "VALID")
    x = _ref_conv_bn_relu(x, w2, s2, o2, 1, [(1, 1), (1, 1)])
    x = _ref_conv_bn_relu(x, w3, s3, o3, stride, [(1, 1), (1, 1)])
    return jnp.transpose(x, (0, 3, 1, 2))


if __name__ == "__main__":
    # Small shapes consistent with the module: N=2, Cin=4, H=W=16,
    # mid_channels=8, out_channels=8, stride=2 for the last conv.
    N, Cin, H, W = 2, 4, 16, 16
    mid_c, out_c, stride = 8, 8, 2

    key = jax.random.PRNGKey(0)
    kx, k1, k2, k3 = jax.random.split(key, 4)
    x = jax.random.normal(kx, (N, Cin, H, W), jnp.float32)

    params = (
        make_conv_bn_params(k1, Cin, mid_c, 1),
        make_conv_bn_params(k2, mid_c, out_c, 3),
        make_conv_bn_params(k3, out_c, out_c, 3),
    )

    y = inception_double3x3_branch(x, params, stride)
    y = jax.block_until_ready(y)

    y_ref = reference(x, params, stride)
    assert y.shape == (N, out_c, H // stride, W // stride), y.shape
    np.testing.assert_allclose(np.asarray(y), np.asarray(y_ref),
                               rtol=1e-4, atol=1e-4)
    print("KERNEL_OK")
</pallas_src>

<mosaic_0001>
module attributes {stable_mosaic.version = 11 : i64} {
  func.func @fused_branch_kernel(%arg0: i32, %arg1: memref<1x256x4xf32, #tpu.memory_space<vmem>>, %arg2: memref<4x8xf32, #tpu.memory_space<vmem>>, %arg3: memref<1x8xf32, #tpu.memory_space<vmem>>, %arg4: memref<9x8x8xf32, #tpu.memory_space<vmem>>, %arg5: memref<1x8xf32, #tpu.memory_space<vmem>>, %arg6: memref<9x8x8xf32, #tpu.memory_space<vmem>>, %arg7: memref<1x8xf32, #tpu.memory_space<vmem>>, %arg8: memref<64x256xf32, #tpu.memory_space<vmem>>, %arg9: memref<1x64x8xf32, #tpu.memory_space<vmem>>) attributes {dimension_semantics = [#tpu.dimension_semantics<parallel>], iteration_bounds = array<i64: 2>, scalar_prefetch = 0 : i64, scratch_operands = 0 : i64, tpu.core_type = #tpu.core_type<tc>, window_params = [{transform_indices = @transform_0, window_bounds = array<i64: 1, 256, 4>}, {pipeline_mode = #tpu.pipeline_mode<synchronous>, transform_indices = @transform_1, window_bounds = array<i64: 4, 8>}, {pipeline_mode = #tpu.pipeline_mode<synchronous>, transform_indices = @transform_2, window_bounds = array<i64: 1, 8>}, {pipeline_mode = #tpu.pipeline_mode<synchronous>, transform_indices = @transform_3, window_bounds = array<i64: 9, 8, 8>}, {pipeline_mode = #tpu.pipeline_mode<synchronous>, transform_indices = @transform_4, window_bounds = array<i64: 1, 8>}, {pipeline_mode = #tpu.pipeline_mode<synchronous>, transform_indices = @transform_5, window_bounds = array<i64: 9, 8, 8>}, {pipeline_mode = #tpu.pipeline_mode<synchronous>, transform_indices = @transform_6, window_bounds = array<i64: 1, 8>}, {pipeline_mode = #tpu.pipeline_mode<synchronous>, transform_indices = @transform_7, window_bounds = array<i64: 64, 256>}, {transform_indices = @transform_8, window_bounds = array<i64: 1, 64, 8>}]} {
    %0 = tpu.iota {dimensions = array<i32: 0>} : vector<256x1xi32>
    %c16_i32 = arith.constant 16 : i32
    %c0_i32 = arith.constant 0 : i32
    %1 = arith.cmpi eq, %c16_i32, %c0_i32 : i32
    %c1_i32 = arith.constant 1 : i32
    %2 = arith.select %1, %c1_i32, %c16_i32 : i32
    %3 = vector.broadcast %2 : i32 to vector<256x1xi32>
    %4 = arith.remsi %0, %3 : vector<256x1xi32>
    %c0_i32_0 = arith.constant 0 : i32
    %5 = vector.broadcast %c0_i32_0 : i32 to vector<256x1xi32>
    %6 = arith.cmpi ne, %4, %5 : vector<256x1xi32>
    %c0_i32_1 = arith.constant 0 : i32
    %7 = vector.broadcast %c0_i32_1 : i32 to vector<256x1xi32>
    %8 = arith.cmpi slt, %4, %7 : vector<256x1xi32>
    %c0_i32_2 = arith.constant 0 : i32
    %9 = arith.cmpi slt, %2, %c0_i32_2 : i32
    %10 = vector.broadcast %9 : i1 to vector<256x1xi1>
    %11 = vector.broadcast %10 : vector<256x1xi1> to vector<256x1xi1>
    %12 = arith.xori %8, %11 : vector<256x1xi1>
    %13 = arith.andi %12, %6 : vector<256x1xi1>
    %14 = vector.broadcast %2 : i32 to vector<256x1xi32>
    %15 = arith.addi %4, %14 : vector<256x1xi32>
    %16 = arith.select %13, %15, %4 : vector<256x1xi1>, vector<256x1xi32>
    %c15_i32 = arith.constant 15 : i32
    %17 = vector.broadcast %c15_i32 : i32 to vector<256x1xi32>
    %18 = arith.cmpi ne, %16, %17 : vector<256x1xi32>
    %19 = arith.extui %18 : vector<256x1xi1> to vector<256x1xi32>
    %20 = arith.sitofp %19 : vector<256x1xi32> to vector<256x1xf32>
    %c0_i32_3 = arith.constant 0 : i32
    %21 = vector.broadcast %c0_i32_3 : i32 to vector<256x1xi32>
    %22 = arith.cmpi ne, %16, %21 : vector<256x1xi32>
    %23 = arith.extui %22 : vector<256x1xi1> to vector<256x1xi32>
    %24 = arith.sitofp %23 : vector<256x1xi32> to vector<256x1xf32>
    %c0 = arith.constant 0 : index
    %c0_4 = arith.constant 0 : index
    %c0_5 = arith.constant 0 : index
    %25 = vector.load %arg1[%c0, %c0_4, %c0_5] : memref<1x256x4xf32, #tpu.memory_space<vmem>>, vector<1x256x4xf32>
    %26 = vector.shape_cast %25 : vector<1x256x4xf32> to vector<256x4xf32>
    %c0_6 = arith.constant 0 : index
    %c0_7 = arith.constant 0 : index
    %27 = vector.load %arg2[%c0_6, %c0_7] : memref<4x8xf32, #tpu.memory_space<vmem>>, vector<4x8xf32>
    %cst = arith.constant dense<0.000000e+00> : vector<256x8xf32>
    %28 = tpu.matmul %26, %27, %cst {dimension_numbers = #tpu.dot_dimension_numbers<[1], [0], [0], [1], [0, 0, 1, 1], [], []>} : vector<256x4xf32>, vector<4x8xf32>, vector<256x8xf32> -> vector<256x8xf32>
    %c0_8 = arith.constant 0 : index
    %c0_9 = arith.constant 0 : index
    %29 = vector.load %arg3[%c0_8, %c0_9] : memref<1x8xf32, #tpu.memory_space<vmem>>, vector<1x8xf32>
    %30 = vector.broadcast %29 : vector<1x8xf32> to vector<256x8xf32>
    %31 = arith.addf %28, %30 : vector<256x8xf32>
    %cst_10 = arith.constant 0.000000e+00 : f32
    %32 = vector.broadcast %cst_10 : f32 to vector<256x8xf32>
    %33 = arith.maximumf %31, %32 : vector<256x8xf32>
    %cst_11 = arith.constant 0.000000e+00 : f32
    %34 = vector.broadcast %cst_11 : f32 to vector<17x8xf32>
    %cst_12 = arith.constant 0.000000e+00 : f32
    %35 = vector.broadcast %cst_12 : f32 to vector<256x8xf32>
    %36 = vector.broadcast %20 : vector<256x1xf32> to vector<256x8xf32>
    %37 = arith.mulf %33, %36 : vector<256x8xf32>
    %38 = tpu.concatenate %34, %37, %34 in 0 : vector<17x8xf32>, vector<256x8xf32>, vector<17x8xf32> -> vector<290x8xf32>
    %39 = vector.extract_strided_slice %38 {offsets = [0, 0], sizes = [256, 8], strides = [1, 1]} : vector<290x8xf32> to vector<256x8xf32>
    %c0_13 = arith.constant 0 : index
    %c0_14 = arith.constant 0 : index
    %c0_15 = arith.constant 0 : index
    %40 = vector.load %arg4[%c0_13, %c0_14, %c0_15] : memref<9x8x8xf32, #tpu.memory_space<vmem>>, vector<1x8x8xf32>
    %41 = vector.shape_cast %40 : vector<1x8x8xf32> to vector<8x8xf32>
    %cst_16 = arith.constant dense<0.000000e+00> : vector<256x8xf32>
    %42 = tpu.matmul %39, %41, %cst_16 {dimension_numbers = #tpu.dot_dimension_numbers<[1], [0], [0], [1], [0, 0, 1, 1], [], []>} : vector<256x8xf32>, vector<8x8xf32>, vector<256x8xf32> -> vector<256x8xf32>
    %43 = arith.addf %35, %42 : vector<256x8xf32>
    %44 = vector.extract_strided_slice %38 {offsets = [16, 0], sizes = [256, 8], strides = [1, 1]} : vector<290x8xf32> to vector<256x8xf32>
    %c3 = arith.constant 3 : index
    %c0_17 = arith.constant 0 : index
    %c0_18 = arith.constant 0 : index
    %45 = vector.load %arg4[%c3, %c0_17, %c0_18] : memref<9x8x8xf32, #tpu.memory_space<vmem>>, vector<1x8x8xf32>
    %46 = vector.shape_cast %45 : vector<1x8x8xf32> to vector<8x8xf32>
    %cst_19 = arith.constant dense<0.000000e+00> : vector<256x8xf32>
    %47 = tpu.matmul %44, %46, %cst_19 {dimension_numbers = #tpu.dot_dimension_numbers<[1], [0], [0], [1], [0, 0, 1, 1], [], []>} : vector<256x8xf32>, vector<8x8xf32>, vector<256x8xf32> -> vector<256x8xf32>
    %48 = arith.addf %43, %47 : vector<256x8xf32>
    %49 = vector.extract_strided_slice %38 {offsets = [32, 0], sizes = [256, 8], strides = [1, 1]} : vector<290x8xf32> to vector<256x8xf32>
    %c6 = arith.constant 6 : index
    %c0_20 = arith.constant 0 : index
    %c0_21 = arith.constant 0 : index
    %50 = vector.load %arg4[%c6, %c0_20, %c0_21] : memref<9x8x8xf32, #tpu.memory_space<vmem>>, vector<1x8x8xf32>
    %51 = vector.shape_cast %50 : vector<1x8x8xf32> to vector<8x8xf32>
    %cst_22 = arith.constant dense<0.000000e+00> : vector<256x8xf32>
    %52 = tpu.matmul %49, %51, %cst_22 {dimension_numbers = #tpu.dot_dimension_numbers<[1], [0], [0], [1], [0, 0, 1, 1], [], []>} : vector<256x8xf32>, vector<8x8xf32>, vector<256x8xf32> -> vector<256x8xf32>
    %53 = arith.addf %48, %52 : vector<256x8xf32>
    %54 = tpu.concatenate %34, %33, %34 in 0 : vector<17x8xf32>, vector<256x8xf32>, vector<17x8xf32> -> vector<290x8xf32>
    %55 = vector.extract_strided_slice %54 {offsets = [1, 0], sizes = [256, 8], strides = [1, 1]} : vector<290x8xf32> to vector<256x8xf32>
    %c1 = arith.constant 1 : index
    %c0_23 = arith.constant 0 : index
    %c0_24 = arith.constant 0 : index
    %56 = vector.load %arg4[%c1, %c0_23, %c0_24] : memref<9x8x8xf32, #tpu.memory_space<vmem>>, vector<1x8x8xf32>
    %57 = vector.shape_cast %56 : vector<1x8x8xf32> to vector<8x8xf32>
    %cst_25 = arith.constant dense<0.000000e+00> : vector<256x8xf32>
    %58 = tpu.matmul %55, %57, %cst_25 {dimension_numbers = #tpu.dot_dimension_numbers<[1], [0], [0], [1], [0, 0, 1, 1], [], []>} : vector<256x8xf32>, vector<8x8xf32>, vector<256x8xf32> -> vector<256x8xf32>
    %59 = arith.addf %53, %58 : vector<256x8xf32>
    %60 = vector.extract_strided_slice %54 {offsets = [17, 0], sizes = [256, 8], strides = [1, 1]} : vector<290x8xf32> to vector<256x8xf32>
    %c4 = arith.constant 4 : index
    %c0_26 = arith.constant 0 : index
    %c0_27 = arith.constant 0 : index
    %61 = vector.load %arg4[%c4, %c0_26, %c0_27] : memref<9x8x8xf32, #tpu.memory_space<vmem>>, vector<1x8x8xf32>
    %62 = vector.shape_cast %61 : vector<1x8x8xf32> to vector<8x8xf32>
    %cst_28 = arith.constant dense<0.000000e+00> : vector<256x8xf32>
    %63 = tpu.matmul %60, %62, %cst_28 {dimension_numbers = #tpu.dot_dimension_numbers<[1], [0], [0], [1], [0, 0, 1, 1], [], []>} : vector<256x8xf32>, vector<8x8xf32>, vector<256x8xf32> -> vector<256x8xf32>
    %64 = arith.addf %59, %63 : vector<256x8xf32>
    %65 = vector.extract_strided_slice %54 {offsets = [33, 0], sizes = [256, 8], strides = [1, 1]} : vector<290x8xf32> to vector<256x8xf32>
    %c7 = arith.constant 7 : index
    %c0_29 = arith.constant 0 : index
    %c0_30 = arith.constant 0 : index
    %66 = vector.load %arg4[%c7, %c0_29, %c0_30] : memref<9x8x8xf32, #tpu.memory_space<vmem>>, vector<1x8x8xf32>
    %67 = vector.shape_cast %66 : vector<1x8x8xf32> to vector<8x8xf32>
    %cst_31 = arith.constant dense<0.000000e+00> : vector<256x8xf32>
    %68 = tpu.matmul %65, %67, %cst_31 {dimension_numbers = #tpu.dot_dimension_numbers<[1], [0], [0], [1], [0, 0, 1, 1], [], []>} : vector<256x8xf32>, vector<8x8xf32>, vector<256x8xf32> -> vector<256x8xf32>
    %69 = arith.addf %64, %68 : vector<256x8xf32>
    %70 = vector.broadcast %24 : vector<256x1xf32> to vector<256x8xf32>
    %71 = arith.mulf %33, %70 : vector<256x8xf32>
    %72 = tpu.concatenate %34, %71, %34 in 0 : vector<17x8xf32>, vector<256x8xf32>, vector<17x8xf32> -> vector<290x8xf32>
    %73 = vector.extract_strided_slice %72 {offsets = [2, 0], sizes = [256, 8], strides = [1, 1]} : vector<290x8xf32> to vector<256x8xf32>
    %c2 = arith.constant 2 : index
    %c0_32 = arith.constant 0 : index
    %c0_33 = arith.constant 0 : index
    %74 = vector.load %arg4[%c2, %c0_32, %c0_33] : memref<9x8x8xf32, #tpu.memory_space<vmem>>, vector<1x8x8xf32>
    %75 = vector.shape_cast %74 : vector<1x8x8xf32> to vector<8x8xf32>
    %cst_34 = arith.constant dense<0.000000e+00> : vector<256x8xf32>
    %76 = tpu.matmul %73, %75, %cst_34 {dimension_numbers = #tpu.dot_dimension_numbers<[1], [0], [0], [1], [0, 0, 1, 1], [], []>} : vector<256x8xf32>, vector<8x8xf32>, vector<256x8xf32> -> vector<256x8xf32>
    %77 = arith.addf %69, %76 : vector<256x8xf32>
    %78 = vector.extract_strided_slice %72 {offsets = [18, 0], sizes = [256, 8], strides = [1, 1]} : vector<290x8xf32> to vector<256x8xf32>
    %c5 = arith.constant 5 : index
    %c0_35 = arith.constant 0 : index
    %c0_36 = arith.constant 0 : index
    %79 = vector.load %arg4[%c5, %c0_35, %c0_36] : memref<9x8x8xf32, #tpu.memory_space<vmem>>, vector<1x8x8xf32>
    %80 = vector.shape_cast %79 : vector<1x8x8xf32> to vector<8x8xf32>
    %cst_37 = arith.constant dense<0.000000e+00> : vector<256x8xf32>
    %81 = tpu.matmul %78, %80, %cst_37 {dimension_numbers = #tpu.dot_dimension_numbers<[1], [0], [0], [1], [0, 0, 1, 1], [], []>} : vector<256x8xf32>, vector<8x8xf32>, vector<256x8xf32> -> vector<256x8xf32>
    %82 = arith.addf %77, %81 : vector<256x8xf32>
    %83 = vector.extract_strided_slice %72 {offsets = [34, 0], sizes = [256, 8], strides = [1, 1]} : vector<290x8xf32> to vector<256x8xf32>
    %c8 = arith.constant 8 : index
    %c0_38 = arith.constant 0 : index
    %c0_39 = arith.constant 0 : index
    %84 = vector.load %arg4[%c8, %c0_38, %c0_39] : memref<9x8x8xf32, #tpu.memory_space<vmem>>, vector<1x8x8xf32>
    %85 = vector.shape_cast %84 : vector<1x8x8xf32> to vector<8x8xf32>
    %cst_40 = arith.constant dense<0.000000e+00> : vector<256x8xf32>
    %86 = tpu.matmul %83, %85, %cst_40 {dimension_numbers = #tpu.dot_dimension_numbers<[1], [0], [0], [1], [0, 0, 1, 1], [], []>} : vector<256x8xf32>, vector<8x8xf32>, vector<256x8xf32> -> vector<256x8xf32>
    %87 = arith.addf %82, %86 : vector<256x8xf32>
    %c0_41 = arith.constant 0 : index
    %c0_42 = arith.constant 0 : index
    %88 = vector.load %arg5[%c0_41, %c0_42] : memref<1x8xf32, #tpu.memory_space<vmem>>, vector<1x8xf32>
    %89 = vector.broadcast %88 : vector<1x8xf32> to vector<256x8xf32>
    %90 = arith.addf %87, %89 : vector<256x8xf32>
    %cst_43 = arith.constant 0.000000e+00 : f32
    %91 = vector.broadcast %cst_43 : f32 to vector<256x8xf32>
    %92 = arith.maximumf %90, %91 : vector<256x8xf32>
    %cst_44 = arith.constant 0.000000e+00 : f32
    %93 = vector.broadcast %cst_44 : f32 to vector<17x8xf32>
    %cst_45 = arith.constant 0.000000e+00 : f32
    %94 = vector.broadcast %cst_45 : f32 to vector<256x8xf32>
    %95 = vector.broadcast %20 : vector<256x1xf32> to vector<256x8xf32>
    %96 = arith.mulf %92, %95 : vector<256x8xf32>
    %97 = tpu.concatenate %93, %96, %93 in 0 : vector<17x8xf32>, vector<256x8xf32>, vector<17x8xf32> -> vector<290x8xf32>
    %98 = vector.extract_strided_slice %97 {offsets = [0, 0], sizes = [256, 8], strides = [1, 1]} : vector<290x8xf32> to vector<256x8xf32>
    %c0_46 = arith.constant 0 : index
    %c0_47 = arith.constant 0 : index
    %c0_48 = arith.constant 0 : index
    %99 = vector.load %arg6[%c0_46, %c0_47, %c0_48] : memref<9x8x8xf32, #tpu.memory_space<vmem>>, vector<1x8x8xf32>
    %100 = vector.shape_cast %99 : vector<1x8x8xf32> to vector<8x8xf32>
    %cst_49 = arith.constant dense<0.000000e+00> : vector<256x8xf32>
    %101 = tpu.matmul %98, %100, %cst_49 {dimension_numbers = #tpu.dot_dimension_numbers<[1], [0], [0], [1], [0, 0, 1, 1], [], []>} : vector<256x8xf32>, vector<8x8xf32>, vector<256x8xf32> -> vector<256x8xf32>
    %102 = arith.addf %94, %101 : vector<256x8xf32>
    %103 = vector.extract_strided_slice %97 {offsets = [16, 0], sizes = [256, 8], strides = [1, 1]} : vector<290x8xf32> to vector<256x8xf32>
    %c3_50 = arith.constant 3 : index
    %c0_51 = arith.constant 0 : index
    %c0_52 = arith.constant 0 : index
    %104 = vector.load %arg6[%c3_50, %c0_51, %c0_52] : memref<9x8x8xf32, #tpu.memory_space<vmem>>, vector<1x8x8xf32>
    %105 = vector.shape_cast %104 : vector<1x8x8xf32> to vector<8x8xf32>
    %cst_53 = arith.constant dense<0.000000e+00> : vector<256x8xf32>
    %106 = tpu.matmul %103, %105, %cst_53 {dimension_numbers = #tpu.dot_dimension_numbers<[1], [0], [0], [1], [0, 0, 1, 1], [], []>} : vector<256x8xf32>, vector<8x8xf32>, vector<256x8xf32> -> vector<256x8xf32>
    %107 = arith.addf %102, %106 : vector<256x8xf32>
    %108 = vector.extract_strided_slice %97 {offsets = [32, 0], sizes = [256, 8], strides = [1, 1]} : vector<290x8xf32> to vector<256x8xf32>
    %c6_54 = arith.constant 6 : index
    %c0_55 = arith.constant 0 : index
    %c0_56 = arith.constant 0 : index
    %109 = vector.load %arg6[%c6_54, %c0_55, %c0_56] : memref<9x8x8xf32, #tpu.memory_space<vmem>>, vector<1x8x8xf32>
    %110 = vector.shape_cast %109 : vector<1x8x8xf32> to vector<8x8xf32>
    %cst_57 = arith.constant dense<0.000000e+00> : vector<256x8xf32>
    %111 = tpu.matmul %108, %110, %cst_57 {dimension_numbers = #tpu.dot_dimension_numbers<[1], [0], [0], [1], [0, 0, 1, 1], [], []>} : vector<256x8xf32>, vector<8x8xf32>, vector<256x8xf32> -> vector<256x8xf32>
    %112 = arith.addf %107, %111 : vector<256x8xf32>
    %113 = tpu.concatenate %93, %92, %93 in 0 : vector<17x8xf32>, vector<256x8xf32>, vector<17x8xf32> -> vector<290x8xf32>
    %114 = vector.extract_strided_slice %113 {offsets = [1, 0], sizes = [256, 8], strides = [1, 1]} : vector<290x8xf32> to vector<256x8xf32>
    %c1_58 = arith.constant 1 : index
    %c0_59 = arith.constant 0 : index
    %c0_60 = arith.constant 0 : index
    %115 = vector.load %arg6[%c1_58, %c0_59, %c0_60] : memref<9x8x8xf32, #tpu.memory_space<vmem>>, vector<1x8x8xf32>
    %116 = vector.shape_cast %115 : vector<1x8x8xf32> to vector<8x8xf32>
    %cst_61 = arith.constant dense<0.000000e+00> : vector<256x8xf32>
    %117 = tpu.matmul %114, %116, %cst_61 {dimension_numbers = #tpu.dot_dimension_numbers<[1], [0], [0], [1], [0, 0, 1, 1], [], []>} : vector<256x8xf32>, vector<8x8xf32>, vector<256x8xf32> -> vector<256x8xf32>
    %118 = arith.addf %112, %117 : vector<256x8xf32>
    %119 = vector.extract_strided_slice %113 {offsets = [17, 0], sizes = [256, 8], strides = [1, 1]} : vector<290x8xf32> to vector<256x8xf32>
    %c4_62 = arith.constant 4 : index
    %c0_63 = arith.constant 0 : index
    %c0_64 = arith.constant 0 : index
    %120 = vector.load %arg6[%c4_62, %c0_63, %c0_64] : memref<9x8x8xf32, #tpu.memory_space<vmem>>, vector<1x8x8xf32>
    %121 = vector.shape_cast %120 : vector<1x8x8xf32> to vector<8x8xf32>
    %cst_65 = arith.constant dense<0.000000e+00> : vector<256x8xf32>
    %122 = tpu.matmul %119, %121, %cst_65 {dimension_numbers = #tpu.dot_dimension_numbers<[1], [0], [0], [1], [0, 0, 1, 1], [], []>} : vector<256x8xf32>, vector<8x8xf32>, vector<256x8xf32> -> vector<256x8xf32>
    %123 = arith.addf %118, %122 : vector<256x8xf32>
    %124 = vector.extract_strided_slice %113 {offsets = [33, 0], sizes = [256, 8], strides = [1, 1]} : vector<290x8xf32> to vector<256x8xf32>
    %c7_66 = arith.constant 7 : index
    %c0_67 = arith.constant 0 : index
    %c0_68 = arith.constant 0 : index
    %125 = vector.load %arg6[%c7_66, %c0_67, %c0_68] : memref<9x8x8xf32, #tpu.memory_space<vmem>>, vector<1x8x8xf32>
    %126 = vector.shape_cast %125 : vector<1x8x8xf32> to vector<8x8xf32>
    %cst_69 = arith.constant dense<0.000000e+00> : vector<256x8xf32>
    %127 = tpu.matmul %124, %126, %cst_69 {dimension_numbers = #tpu.dot_dimension_numbers<[1], [0], [0], [1], [0, 0, 1, 1], [], []>} : vector<256x8xf32>, vector<8x8xf32>, vector<256x8xf32> -> vector<256x8xf32>
    %128 = arith.addf %123, %127 : vector<256x8xf32>
    %129 = vector.broadcast %24 : vector<256x1xf32> to vector<256x8xf32>
    %130 = arith.mulf %92, %129 : vector<256x8xf32>
    %131 = tpu.concatenate %93, %130, %93 in 0 : vector<17x8xf32>, vector<256x8xf32>, vector<17x8xf32> -> vector<290x8xf32>
    %132 = vector.extract_strided_slice %131 {offsets = [2, 0], sizes = [256, 8], strides = [1, 1]} : vector<290x8xf32> to vector<256x8xf32>
    %c2_70 = arith.constant 2 : index
    %c0_71 = arith.constant 0 : index
    %c0_72 = arith.constant 0 : index
    %133 = vector.load %arg6[%c2_70, %c0_71, %c0_72] : memref<9x8x8xf32, #tpu.memory_space<vmem>>, vector<1x8x8xf32>
    %134 = vector.shape_cast %133 : vector<1x8x8xf32> to vector<8x8xf32>
    %cst_73 = arith.constant dense<0.000000e+00> : vector<256x8xf32>
    %135 = tpu.matmul %132, %134, %cst_73 {dimension_numbers = #tpu.dot_dimension_numbers<[1], [0], [0], [1], [0, 0, 1, 1], [], []>} : vector<256x8xf32>, vector<8x8xf32>, vector<256x8xf32> -> vector<256x8xf32>
    %136 = arith.addf %128, %135 : vector<256x8xf32>
    %137 = vector.extract_strided_slice %131 {offsets = [18, 0], sizes = [256, 8], strides = [1, 1]} : vector<290x8xf32> to vector<256x8xf32>
    %c5_74 = arith.constant 5 : index
    %c0_75 = arith.constant 0 : index
    %c0_76 = arith.constant 0 : index
    %138 = vector.load %arg6[%c5_74, %c0_75, %c0_76] : memref<9x8x8xf32, #tpu.memory_space<vmem>>, vector<1x8x8xf32>
    %139 = vector.shape_cast %138 : vector<1x8x8xf32> to vector<8x8xf32>
    %cst_77 = arith.constant dense<0.000000e+00> : vector<256x8xf32>
    %140 = tpu.matmul %137, %139, %cst_77 {dimension_numbers = #tpu.dot_dimension_numbers<[1], [0], [0], [1], [0, 0, 1, 1], [], []>} : vector<256x8xf32>, vector<8x8xf32>, vector<256x8xf32> -> vector<256x8xf32>
    %141 = arith.addf %136, %140 : vector<256x8xf32>
    %142 = vector.extract_strided_slice %131 {offsets = [34, 0], sizes = [256, 8], strides = [1, 1]} : vector<290x8xf32> to vector<256x8xf32>
    %c8_78 = arith.constant 8 : index
    %c0_79 = arith.constant 0 : index
    %c0_80 = arith.constant 0 : index
    %143 = vector.load %arg6[%c8_78, %c0_79, %c0_80] : memref<9x8x8xf32, #tpu.memory_space<vmem>>, vector<1x8x8xf32>
    %144 = vector.shape_cast %143 : vector<1x8x8xf32> to vector<8x8xf32>
    %cst_81 = arith.constant dense<0.000000e+00> : vector<256x8xf32>
    %145 = tpu.matmul %142, %144, %cst_81 {dimension_numbers = #tpu.dot_dimension_numbers<[1], [0], [0], [1], [0, 0, 1, 1], [], []>} : vector<256x8xf32>, vector<8x8xf32>, vector<256x8xf32> -> vector<256x8xf32>
    %146 = arith.addf %141, %145 : vector<256x8xf32>
    %c0_82 = arith.constant 0 : index
    %c0_83 = arith.constant 0 : index
    %147 = vector.load %arg8[%c0_82, %c0_83] : memref<64x256xf32, #tpu.memory_space<vmem>>, vector<64x256xf32>
    %cst_84 = arith.constant dense<0.000000e+00> : vector<64x8xf32>
    %148 = tpu.matmul %147, %146, %cst_84 {dimension_numbers = #tpu.dot_dimension_numbers<[1], [0], [0], [1], [0, 0, 1, 1], [], []>} : vector<64x256xf32>, vector<256x8xf32>, vector<64x8xf32> -> vector<64x8xf32>
    %c0_85 = arith.constant 0 : index
    %c0_86 = arith.constant 0 : index
    %149 = vector.load %arg7[%c0_85, %c0_86] : memref<1x8xf32, #tpu.memory_space<vmem>>, vector<1x8xf32>
    %150 = vector.broadcast %149 : vector<1x8xf32> to vector<64x8xf32>
    %151 = arith.addf %148, %150 : vector<64x8xf32>
    %cst_87 = arith.constant 0.000000e+00 : f32
    %152 = vector.broadcast %cst_87 : f32 to vector<64x8xf32>
    %153 = arith.maximumf %151, %152 : vector<64x8xf32>
    %c0_88 = arith.constant 0 : index
    %c0_89 = arith.constant 0 : index
    %c0_90 = arith.constant 0 : index
    %154 = vector.load %arg9[%c0_88, %c0_89, %c0_90] : memref<1x64x8xf32, #tpu.memory_space<vmem>>, vector<1x64x8xf32>
    %155 = vector.shape_cast %154 : vector<1x64x8xf32> to vector<64x8xf32>
    %156 = vector.shape_cast %153 : vector<64x8xf32> to vector<1x64x8xf32>
    tpu.vector_store %arg9[%c0_88, %c0_89, %c0_90], %156 {strides = array<i32>} : memref<1x64x8xf32, #tpu.memory_space<vmem>>, vector<1x64x8xf32>,
    return
  }
  func.func @transform_0(%arg0: i32) -> (i32, i32, i32) {
    %c0_i32 = arith.constant 0 : i32
    %c0_i32_0 = arith.constant 0 : i32
    %c0_i32_1 = arith.constant 0 : i32
    return %arg0, %c0_i32, %c0_i32_0 : i32, i32, i32
  }
  func.func @transform_1(%arg0: i32) -> (i32, i32) {
    %c0_i32 = arith.constant 0 : i32
    %c0_i32_0 = arith.constant 0 : i32
    %c0_i32_1 = arith.constant 0 : i32
    return %c0_i32, %c0_i32_0 : i32, i32
  }
  func.func @transform_2(%arg0: i32) -> (i32, i32) {
    %c0_i32 = arith.constant 0 : i32
    %c0_i32_0 = arith.constant 0 : i32
    %c0_i32_1 = arith.constant 0 : i32
    return %c0_i32, %c0_i32_0 : i32, i32
  }
  func.func @transform_3(%arg0: i32) -> (i32, i32, i32) {
    %c0_i32 = arith.constant 0 : i32
    %c0_i32_0 = arith.constant 0 : i32
    %c0_i32_1 = arith.constant 0 : i32
    %c0_i32_2 = arith.constant 0 : i32
    return %c0_i32, %c0_i32_0, %c0_i32_1 : i32, i32, i32
  }
  func.func @transform_4(%arg0: i32) -> (i32, i32) {
    %c0_i32 = arith.constant 0 : i32
    %c0_i32_0 = arith.constant 0 : i32
    %c0_i32_1 = arith.constant 0 : i32
    return %c0_i32, %c0_i32_0 : i32, i32
  }
  func.func @transform_5(%arg0: i32) -> (i32, i32, i32) {
    %c0_i32 = arith.constant 0 : i32
    %c0_i32_0 = arith.constant 0 : i32
    %c0_i32_1 = arith.constant 0 : i32
    %c0_i32_2 = arith.constant 0 : i32
    return %c0_i32, %c0_i32_0, %c0_i32_1 : i32, i32, i32
  }
  func.func @transform_6(%arg0: i32) -> (i32, i32) {
    %c0_i32 = arith.constant 0 : i32
    %c0_i32_0 = arith.constant 0 : i32
    %c0_i32_1 = arith.constant 0 : i32
    return %c0_i32, %c0_i32_0 : i32, i32
  }
  func.func @transform_7(%arg0: i32) -> (i32, i32) {
    %c0_i32 = arith.constant 0 : i32
    %c0_i32_0 = arith.constant 0 : i32
    %c0_i32_1 = arith.constant 0 : i32
    return %c0_i32, %c0_i32_0 : i32, i32
  }
  func.func @transform_8(%arg0: i32) -> (i32, i32, i32) {
    %c0_i32 = arith.constant 0 : i32
    %c0_i32_0 = arith.constant 0 : i32
    %c0_i32_1 = arith.constant 0 : i32
    return %arg0, %c0_i32, %c0_i32_0 : i32, i32, i32
  }
}

</mosaic_0001>

<llo_original>
// kernel: tpu_custom_call.1
$region0: #{tpu_custom_call.1}
  #allocation0 [shape = 'u32[]', space=smem, size = 0x4, offset = 0x4, fixed_abs, tag = 'smem constant byte address 0x4 - core index']
  #allocation1 [shape = 'u32[72,128]{1,0:T(1,128)}', space=vmem, size = 0x9000, scoped, tag = 'internal scratch']
  %s0 = inlined_call_operand.vmem [shape: f32[2,256,4], index: 0, kind: input, shape index: {}]
  %s1 = inlined_call_operand.vmem [shape: f32[4,8], index: 1, kind: input, shape index: {}]
  %s2 = inlined_call_operand.vmem [shape: f32[1,8], index: 2, kind: input, shape index: {}]
  %s3 = inlined_call_operand.vmem [shape: f32[9,8,8], index: 3, kind: input, shape index: {}]
  %s4 = inlined_call_operand.vmem [shape: f32[1,8], index: 4, kind: input, shape index: {}]
  %s5 = inlined_call_operand.vmem [shape: f32[9,8,8], index: 5, kind: input, shape index: {}]
  %s6 = inlined_call_operand.vmem [shape: f32[1,8], index: 6, kind: input, shape index: {}]
  %s7 = inlined_call_operand.vmem [shape: f32[64,256], index: 7, kind: input, shape index: {}]
  %s8 = inlined_call_operand.vmem [shape: f32[2,64,8], index: 8, kind: output, shape index: {}]
  %s9 = sld [smem:[#allocation0]]
  $region65: #{tpu_custom_call.1} parent=0
    _
  %s11 = ssub.s32 1, %s9
  %s12 = scalar_select 0, %s11, %s9
  loop: start=0, step=1, limit=4
  $region2: #{tpu_custom_call.1} parent=0 // loop_pre_header
    _
  $region3: #{tpu_custom_call.1} parent=0 // loop_header
    %s14 = sphi 0, %s18
    %p15 = scmp.ge.s32.totalorder %s14, 4
    %s24 = sphi 0, %s26
    %s27 = sphi 0, %s24
    %s28 = sphi 0, %s27
    %s44 = sphi 0, %s28
    %s48 = sphi 0, %s48
    %s50 = sphi 0, %s48
    %s51 = sphi 0, %s50
    %s65 = sphi 0, %s51
    %s69 = sphi 0, %s69
    %s71 = sphi 0, %s69
    %s72 = sphi 0, %s71
    %s86 = sphi 0, %s72
    %s90 = sphi 0, %s90
    %s92 = sphi 0, %s90
    %s93 = sphi 0, %s92
    %s107 = sphi 0, %s93
    %s111 = sphi 0, %s111
    %s113 = sphi 0, %s111
    %s114 = sphi 0, %s113
    %s128 = sphi 0, %s114
    %s132 = sphi 0, %s132
    %s134 = sphi 0, %s132
    %s135 = sphi 0, %s134
    %s149 = sphi 0, %s135
    %s153 = sphi 0, %s153
    %s155 = sphi 0, %s153
    %s156 = sphi 0, %s155
    %s170 = sphi 0, %s156
    %s174 = sphi 0, %s174
    %s176 = sphi 0, %s174
    %s177 = sphi 0, %s176
    %s191 = sphi 0, %s177
    %s197 = sphi 0, %s199
    %s200 = sphi 0, %s197
    %s201 = sphi 0, %s200
    %s217 = sphi 0, %s201
  $region4: #{tpu_custom_call.1} parent=0 // loop_header_branch
    %17 = sbr.rel (%p15) target = $region8
  $region5: #{tpu_custom_call.1} parent=0 // loop_body
    %s19 = ssub.s32 %s14, 1
    %s20 = ssub.s32 %s14, 2
    %s21 = sadd.s32 %s14, 1
    %s22 = ssub.s32 %s14, %s21
    %p23 = scmp.eq.s32.totalorder %s22, 0
    %s25 = sadd.s32 %s24, 1
    %s26 = scalar_select %p23, %s24, %s25
    %p29 = pneg %p23
    %p30 = scmp.eq.s32.totalorder %s14, 1
    %p31 = por %p29, %p30
    %p32 = scmp.ne.s32.totalorder %s24, %s27
    %p33 = scmp.eq.s32.totalorder %s14, 0
    %p34 = por %p32, %p33
    %p35 = scmp.ne.s32.totalorder %s24, %s27
    %p36 = scmp.eq.s32.totalorder %s19, 1
    %p37 = por %p35, %p36
    %p38 = scmp.ne.s32.totalorder %s27, %s28
    %p39 = scmp.eq.s32.totalorder %s19, 0
    %p40 = por %p38, %p39
    %p41 = scmp.ne.s32.totalorder %s27, %s28
    %p42 = scmp.eq.s32.totalorder %s20, 1
    %p43 = por %p41, %p42
    %p45 = scmp.ne.s32.totalorder %s28, %s44
    %p46 = scmp.eq.s32.totalorder %s20, 0
    %p47 = por %p45, %p46
    %s49 = sadd.s32 %s48, 1
    %p52 = scmp.eq.s32.totalorder %s14, 1
    %p53 = scmp.ne.s32.totalorder %s48, %s50
    %p54 = scmp.eq.s32.totalorder %s14, 0
    %p55 = por %p53, %p54
    %p56 = scmp.ne.s32.totalorder %s48, %s50
    %p57 = scmp.eq.s32.totalorder %s19, 1
    %p58 = por %p56, %p57
    %p59 = scmp.ne.s32.totalorder %s50, %s51
    %p60 = scmp.eq.s32.totalorder %s19, 0
    %p61 = por %p59, %p60
    %p62 = scmp.ne.s32.totalorder %s50, %s51
    %p63 = scmp.eq.s32.totalorder %s20, 1
    %p64 = por %p62, %p63
    %p66 = scmp.ne.s32.totalorder %s51, %s65
    %p67 = scmp.eq.s32.totalorder %s20, 0
    %p68 = por %p66, %p67
    %s70 = sadd.s32 %s69, 1
    %p73 = scmp.eq.s32.totalorder %s14, 1
    %p74 = scmp.ne.s32.totalorder %s69, %s71
    %p75 = scmp.eq.s32.totalorder %s14, 0
    %p76 = por %p74, %p75
    %p77 = scmp.ne.s32.totalorder %s69, %s71
    %p78 = scmp.eq.s32.totalorder %s19, 1
    %p79 = por %p77, %p78
    %p80 = scmp.ne.s32.totalorder %s71, %s72
    %p81 = scmp.eq.s32.totalorder %s19, 0
    %p82 = por %p80, %p81
    %p83 = scmp.ne.s32.totalorder %s71, %s72
    %p84 = scmp.eq.s32.totalorder %s20, 1
    %p85 = por %p83, %p84
    %p87 = scmp.ne.s32.totalorder %s72, %s86
    %p88 = scmp.eq.s32.totalorder %s20, 0
    %p89 = por %p87, %p88
    %s91 = sadd.s32 %s90, 1
    %p94 = scmp.eq.s32.totalorder %s14, 1
    %p95 = scmp.ne.s32.totalorder %s90, %s92
    %p96 = scmp.eq.s32.totalorder %s14, 0
    %p97 = por %p95, %p96
    %p98 = scmp.ne.s32.totalorder %s90, %s92
    %p99 = scmp.eq.s32.totalorder %s19, 1
    %p100 = por %p98, %p99
    %p101 = scmp.ne.s32.totalorder %s92, %s93
    %p102 = scmp.eq.s32.totalorder %s19, 0
    %p103 = por %p101, %p102
    %p104 = scmp.ne.s32.totalorder %s92, %s93
    %p105 = scmp.eq.s32.totalorder %s20, 1
    %p106 = por %p104, %p105
    %p108 = scmp.ne.s32.totalorder %s93, %s107
    %p109 = scmp.eq.s32.totalorder %s20, 0
    %p110 = por %p108, %p109
    %s112 = sadd.s32 %s111, 1
    %p115 = scmp.eq.s32.totalorder %s14, 1
    %p116 = scmp.ne.s32.totalorder %s111, %s113
    %p117 = scmp.eq.s32.totalorder %s14, 0
    %p118 = por %p116, %p117
    %p119 = scmp.ne.s32.totalorder %s111, %s113
    %p120 = scmp.eq.s32.totalorder %s19, 1
    %p121 = por %p119, %p120
    %p122 = scmp.ne.s32.totalorder %s113, %s114
    %p123 = scmp.eq.s32.totalorder %s19, 0
    %p124 = por %p122, %p123
    %p125 = scmp.ne.s32.totalorder %s113, %s114
    %p126 = scmp.eq.s32.totalorder %s20, 1
    %p127 = por %p125, %p126
    %p129 = scmp.ne.s32.totalorder %s114, %s128
    %p130 = scmp.eq.s32.totalorder %s20, 0
    %p131 = por %p129, %p130
    %s133 = sadd.s32 %s132, 1
    %p136 = scmp.eq.s32.totalorder %s14, 1
    %p137 = scmp.ne.s32.totalorder %s132, %s134
    %p138 = scmp.eq.s32.totalorder %s14, 0
    %p139 = por %p137, %p138
    %p140 = scmp.ne.s32.totalorder %s132, %s134
    %p141 = scmp.eq.s32.totalorder %s19, 1
    %p142 = por %p140, %p141
    %p143 = scmp.ne.s32.totalorder %s134, %s135
    %p144 = scmp.eq.s32.totalorder %s19, 0
    %p145 = por %p143, %p144
    %p146 = scmp.ne.s32.totalorder %s134, %s135
    %p147 = scmp.eq.s32.totalorder %s20, 1
    %p148 = por %p146, %p147
    %p150 = scmp.ne.s32.totalorder %s135, %s149
    %p151 = scmp.eq.s32.totalorder %s20, 0
    %p152 = por %p150, %p151
    %s154 = sadd.s32 %s153, 1
    %p157 = scmp.eq.s32.totalorder %s14, 1
    %p158 = scmp.ne.s32.totalorder %s153, %s155
    %p159 = scmp.eq.s32.totalorder %s14, 0
    %p160 = por %p158, %p159
    %p161 = scmp.ne.s32.totalorder %s153, %s155
    %p162 = scmp.eq.s32.totalorder %s19, 1
    %p163 = por %p161, %p162
    %p164 = scmp.ne.s32.totalorder %s155, %s156
    %p165 = scmp.eq.s32.totalorder %s19, 0
    %p166 = por %p164, %p165
    %p167 = scmp.ne.s32.totalorder %s155, %s156
    %p168 = scmp.eq.s32.totalorder %s20, 1
    %p169 = por %p167, %p168
    %p171 = scmp.ne.s32.totalorder %s156, %s170
    %p172 = scmp.eq.s32.totalorder %s20, 0
    %p173 = por %p171, %p172
    %s175 = sadd.s32 %s174, 1
    %p178 = scmp.eq.s32.totalorder %s14, 1
    %p179 = scmp.ne.s32.totalorder %s174, %s176
    %p180 = scmp.eq.s32.totalorder %s14, 0
    %p181 = por %p179, %p180
    %p182 = scmp.ne.s32.totalorder %s174, %s176
    %p183 = scmp.eq.s32.totalorder %s19, 1
    %p184 = por %p182, %p183
    %p185 = scmp.ne.s32.totalorder %s176, %s177
    %p186 = scmp.eq.s32.totalorder %s19, 0
    %p187 = por %p185, %p186
    %p188 = scmp.ne.s32.totalorder %s176, %s177
    %p189 = scmp.eq.s32.totalorder %s20, 1
    %p190 = por %p188, %p189
    %p192 = scmp.ne.s32.totalorder %s177, %s191
    %p193 = scmp.eq.s32.totalorder %s20, 0
    %p194 = por %p192, %p193
    %s195 = ssub.s32 %s14, %s21
    %p196 = scmp.eq.s32.totalorder %s195, 0
    %s198 = sadd.s32 %s197, 1
    %s199 = scalar_select %p196, %s197, %s198
    %p202 = pneg %p196
    %p203 = scmp.eq.s32.totalorder %s14, 1
    %p204 = por %p202, %p203
    %p205 = scmp.ne.s32.totalorder %s197, %s200
    %p206 = scmp.eq.s32.totalorder %s14, 0
    %p207 = por %p205, %p206
    %p208 = scmp.ne.s32.totalorder %s197, %s200
    %p209 = scmp.eq.s32.totalorder %s19, 1
    %p210 = por %p208, %p209
    %p211 = scmp.ne.s32.totalorder %s200, %s201
    %p212 = scmp.eq.s32.totalorder %s19, 0
    %p213 = por %p211, %p212
    %p214 = scmp.ne.s32.totalorder %s200, %s201
    %p215 = scmp.eq.s32.totalorder %s20, 1
    %p216 = por %p214, %p215
    %p218 = scmp.ne.s32.totalorder %s201, %s217
    %p219 = scmp.eq.s32.totalorder %s20, 0
    %p220 = por %p218, %p219
    %p221 = scmp.le.s32.totalorder 1, %s14
    %p222 = scmp.lt.s32.totalorder %s14, 3
    %p223 = pnand %p221, %p222
    %p224 = pneg %p223
    // Predicated region
    $region9: #{tpu_custom_call.1} parent=5 // pred_check
      _
    $region10: #{tpu_custom_call.1} parent=5 // pred_check_branch
      %226 = sbr.rel (%p223) target = $region12
    $region11: #{tpu_custom_call.1} parent=5 // pred_region
      %s227 = ssub.s32 %s14, 1
      // Predicated region
      $region13: #{tpu_custom_call.1} parent=11 // pred_check
        %p228 = pneg %p61
      $region14: #{tpu_custom_call.1} parent=11 // pred_check_branch
        %230 = sbr.rel (%p228) target = $region16
      $region15: #{tpu_custom_call.1} parent=11 // pred_region
        _
      $region16: #{tpu_custom_call.1} parent=11 // pred_fallthru
        _
      // Predicated region
      $region17: #{tpu_custom_call.1} parent=11 // pred_check
        %p231 = pneg %p82
      $region18: #{tpu_custom_call.1} parent=11 // pred_check_branch
        %233 = sbr.rel (%p231) target = $region20
      $region19: #{tpu_custom_call.1} parent=11 // pred_region
        _
      $region20: #{tpu_custom_call.1} parent=11 // pred_fallthru
        _
      // Predicated region
      $region21: #{tpu_custom_call.1} parent=11 // pred_check
        %p234 = pneg %p103
      $region22: #{tpu_custom_call.1} parent=11 // pred_check_branch
        %236 = sbr.rel (%p234) target = $region24
      $region23: #{tpu_custom_call.1} parent=11 // pred_region
        _
      $region24: #{tpu_custom_call.1} parent=11 // pred_fallthru
        _
      // Predicated region
      $region25: #{tpu_custom_call.1} parent=11 // pred_check
        %p237 = pneg %p124
      $region26: #{tpu_custom_call.1} parent=11 // pred_check_branch
        %239 = sbr.rel (%p237) target = $region28
      $region27: #{tpu_custom_call.1} parent=11 // pred_region
        _
      $region28: #{tpu_custom_call.1} parent=11 // pred_fallthru
        _
      // Predicated region
      $region29: #{tpu_custom_call.1} parent=11 // pred_check
        %p240 = pneg %p145
      $region30: #{tpu_custom_call.1} parent=11 // pred_check_branch
        %242 = sbr.rel (%p240) target = $region32
      $region31: #{tpu_custom_call.1} parent=11 // pred_region
        _
      $region32: #{tpu_custom_call.1} parent=11 // pred_fallthru
        _
      // Predicated region
      $region33: #{tpu_custom_call.1} parent=11 // pred_check
        %p243 = pneg %p166
      $region34: #{tpu_custom_call.1} parent=11 // pred_check_branch
        %245 = sbr.rel (%p243) target = $region36
      $region35: #{tpu_custom_call.1} parent=11 // pred_region
        _
      $region36: #{tpu_custom_call.1} parent=11 // pred_fallthru
        _
      // Predicated region
      $region37: #{tpu_custom_call.1} parent=11 // pred_check
        %p246 = pneg %p187
      $region38: #{tpu_custom_call.1} parent=11 // pred_check_branch
        %248 = sbr.rel (%p246) target = $region40
      $region39: #{tpu_custom_call.1} parent=11 // pred_region
        _
      $region40: #{tpu_custom_call.1} parent=11 // pred_fallthru
        _
    $region12: #{tpu_custom_call.1} parent=5 // pred_fallthru
      _
    %p249 = scmp.lt.s32.totalorder %s14, 2
    // Predicated region
    $region41: #{tpu_custom_call.1} parent=5 // pred_check
      %p250 = pneg %p249
    $region42: #{tpu_custom_call.1} parent=5 // pred_check_branch
      %252 = sbr.rel (%p250) target = $region44
    $region43: #{tpu_custom_call.1} parent=5 // pred_region
      // Predicated region
      $region45: #{tpu_custom_call.1} parent=43 // pred_check
        %p253 = pneg %p34
      $region46: #{tpu_custom_call.1} parent=43 // pred_check_branch
        %255 = sbr.rel (%p253) target = $region48
      $region47: #{tpu_custom_call.1} parent=43 // pred_region
        %p256 = scmp.lt.s32.totalorder %s14, 1
        %s257 = scalar_select %p256, %s14, 1
        %s258 = smul.addr %s257, 32
        %s259 = smul.addr %s258, 8
        %s260 = scalar_lea.vmem %s0, %s259
      $region48: #{tpu_custom_call.1} parent=43 // pred_fallthru
        _
    $region44: #{tpu_custom_call.1} parent=5 // pred_fallthru
      _
    %p261 = scmp.le.s32.totalorder 1, %s14
    %p262 = scmp.lt.s32.totalorder %s14, 3
    %p263 = pnand %p261, %p262
    %p264 = pneg %p263
    // Predicated region
    $region49: #{tpu_custom_call.1} parent=5 // pred_check
      _
    $region50: #{tpu_custom_call.1} parent=5 // pred_check_branch
      %266 = sbr.rel (%p263) target = $region52
    $region51: #{tpu_custom_call.1} parent=5 // pred_region
      %s267 = ssub.s32 %s14, 1
      %p268 = scmp.lt.s32.totalorder %s19, 1
      %s269 = scalar_select %p268, %s19, 1
      %s270 = smul.addr %s269, 32
      %s271 = smul.addr %s270, 8
      %s272 = scalar_lea.vmem %s0, %s271
      %p273 = pneg %p40
      %p274 = pneg %p37
      %p275 = pneg %p61
      %p276 = pneg %p58
      %p277 = pneg %p82
      %p278 = pneg %p79
      %p279 = pneg %p103
      %p280 = pneg %p100
      %p281 = pneg %p124
      %p282 = pneg %p121
      %p283 = pneg %p145
      %p284 = pneg %p142
      %p285 = pneg %p166
      %p286 = pneg %p163
      %p287 = pneg %p187
      %p288 = pneg %p184
      %p289 = pneg %p213
      %p290 = pneg %p210
      %p291 = scmp.lt.s32.totalorder %s19, 1
      %s292 = scalar_select %p291, %s19, 1
      %s293 = smul.addr %s292, 8
      %s294 = smul.addr %s293, 8
      %s295 = scalar_lea.vmem %s8, %s294
      %p296 = scmp.lt.s32.totalorder %s19, 1
      %s297 = scalar_select %p296, %s19, 1
      %s298 = smul.addr %s297, 32
      %s299 = smul.addr %s298, 8
      %s300 = scalar_lea.vmem %s0, %s299
      %p301 = scmp.lt.s32.totalorder %s19, 1
      %s302 = scalar_select %p301, %s19, 1
      %s303 = smul.addr %s302, 8
      %s304 = smul.addr %s303, 8
      %s305 = scalar_lea.vmem %s8, %s304
      %v306 = vlaneseq
      %v307 = vshrl.u32 %v306, 7
      %v308 = vadd.s32 %v307, 8
      %v309 = vadd.s32 %v307, 16
      %v310 = vadd.s32 %v307, 24
      %v311 = vadd.s32 %v307, 32
      %v312 = vadd.s32 %v307, 40
      %v313 = vadd.s32 %v307, 48
      %v314 = vadd.s32 %v307, 56
      %v315 = vadd.s32 %v307, 64
      %v316 = vadd.s32 %v307, 72
      %v317 = vadd.s32 %v307, 80
      %v318 = vadd.s32 %v307, 88
      %v319 = vadd.s32 %v307, 96
      %v320 = vadd.s32 %v307, 104
      %v321 = vadd.s32 %v307, 112
      %v322 = vadd.s32 %v307, 120
      %v323 = vadd.s32 %v307, 128
      %v324 = vadd.s32 %v307, 136
      %v325 = vadd.s32 %v307, 144
      %v326 = vadd.s32 %v307, 152
      %v327 = vadd.s32 %v307, 160
      %v328 = vadd.s32 %v307, 168
      %v329 = vadd.s32 %v307, 176
      %v330 = vadd.s32 %v307, 184
      %v331 = vadd.s32 %v307, 192
      %v332 = vadd.s32 %v307, 200
      %v333 = vadd.s32 %v307, 208
      %v334 = vadd.s32 %v307, 216
      %v335 = vadd.s32 %v307, 224
      %v336 = vadd.s32 %v307, 232
      %v337 = vadd.s32 %v307, 240
      %v338 = vadd.s32 %v307, 248
      %vm339 = vcmp.lt.s32.totalorder %v307, 0
      %v340 = vsub.s32 0, %v307
      %v341 = vsel %vm339, %v340, %v307
      %v342 = vshrl.u32 %v341, 4
      %v343 = vand.u32 %v341, 15
      %v344 = vsub.s32 0, %v343
      %v345 = vsel %vm339, %v344, %v343
      %vm346 = vcmp.lt.s32.totalorder %v308, 0
      %v347 = vsub.s32 0, %v308
      %v348 = vsel %vm346, %v347, %v308
      %v349 = vshrl.u32 %v348, 4
      %v350 = vand.u32 %v348, 15
      %v351 = vsub.s32 0, %v350
      %v352 = vsel %vm346, %v351, %v350
      %vm353 = vcmp.lt.s32.totalorder %v309, 0
      %v354 = vsub.s32 0, %v309
      %v355 = vsel %vm353, %v354, %v309
      %v356 = vshrl.u32 %v355, 4
      %v357 = vand.u32 %v355, 15
      %v358 = vsub.s32 0, %v357
      %v359 = vsel %vm353, %v358, %v357
      %vm360 = vcmp.lt.s32.totalorder %v310, 0
      %v361 = vsub.s32 0, %v310
      %v362 = vsel %vm360, %v361, %v310
      %v363 = vshrl.u32 %v362, 4
      %v364 = vand.u32 %v362, 15
      %v365 = vsub.s32 0, %v364
      %v366 = vsel %vm360, %v365, %v364
      %vm367 = vcmp.lt.s32.totalorder %v311, 0
      %v368 = vsub.s32 0, %v311
      %v369 = vsel %vm367, %v368, %v311
      %v370 = vshrl.u32 %v369, 4
      %v371 = vand.u32 %v369, 15
      %v372 = vsub.s32 0, %v371
      %v373 = vsel %vm367, %v372, %v371
      %vm374 = vcmp.lt.s32.totalorder %v312, 0
      %v375 = vsub.s32 0, %v312
      %v376 = vsel %vm374, %v375, %v312
      %v377 = vshrl.u32 %v376, 4
      %v378 = vand.u32 %v376, 15
      %v379 = vsub.s32 0, %v378
      %v380 = vsel %vm374, %v379, %v378
      %vm381 = vcmp.lt.s32.totalorder %v313, 0
      %v382 = vsub.s32 0, %v313
      %v383 = vsel %vm381, %v382, %v313
      %v384 = vshrl.u32 %v383, 4
      %v385 = vand.u32 %v383, 15
      %v386 = vsub.s32 0, %v385
      %v387 = vsel %vm381, %v386, %v385
      %vm388 = vcmp.lt.s32.totalorder %v314, 0
      %v389 = vsub.s32 0, %v314
      %v390 = vsel %vm388, %v389, %v314
      %v391 = vshrl.u32 %v390, 4
      %v392 = vand.u32 %v390, 15
      %v393 = vsub.s32 0, %v392
      %v394 = vsel %vm388, %v393, %v392
      %vm395 = vcmp.lt.s32.totalorder %v315, 0
      %v396 = vsub.s32 0, %v315
      %v397 = vsel %vm395, %v396, %v315
      %v398 = vshrl.u32 %v397, 4
      %v399 = vand.u32 %v397, 15
      %v400 = vsub.s32 0, %v399
      %v401 = vsel %vm395, %v400, %v399
      %vm402 = vcmp.lt.s32.totalorder %v316, 0
      %v403 = vsub.s32 0, %v316
      %v404 = vsel %vm402, %v403, %v316
      %v405 = vshrl.u32 %v404, 4
      %v406 = vand.u32 %v404, 15
      %v407 = vsub.s32 0, %v406
      %v408 = vsel %vm402, %v407, %v406
      %vm409 = vcmp.lt.s32.totalorder %v317, 0
      %v410 = vsub.s32 0, %v317
      %v411 = vsel %vm409, %v410, %v317
      %v412 = vshrl.u32 %v411, 4
      %v413 = vand.u32 %v411, 15
      %v414 = vsub.s32 0, %v413
      %v415 = vsel %vm409, %v414, %v413
      %vm416 = vcmp.lt.s32.totalorder %v318, 0
      %v417 = vsub.s32 0, %v318
      %v418 = vsel %vm416, %v417, %v318
      %v419 = vshrl.u32 %v418, 4
      %v420 = vand.u32 %v418, 15
      %v421 = vsub.s32 0, %v420
      %v422 = vsel %vm416, %v421, %v420
      %vm423 = vcmp.lt.s32.totalorder %v319, 0
      %v424 = vsub.s32 0, %v319
      %v425 = vsel %vm423, %v424, %v319
      %v426 = vshrl.u32 %v425, 4
      %v427 = vand.u32 %v425, 15
      %v428 = vsub.s32 0, %v427
      %v429 = vsel %vm423, %v428, %v427
      %vm430 = vcmp.lt.s32.totalorder %v320, 0
      %v431 = vsub.s32 0, %v320
      %v432 = vsel %vm430, %v431, %v320
      %v433 = vshrl.u32 %v432, 4
      %v434 = vand.u32 %v432, 15
      %v435 = vsub.s32 0, %v434
      %v436 = vsel %vm430, %v435, %v434
      %vm437 = vcmp.lt.s32.totalorder %v321, 0
      %v438 = vsub.s32 0, %v321
      %v439 = vsel %vm437, %v438, %v321
      %v440 = vshrl.u32 %v439, 4
      %v441 = vand.u32 %v439, 15
      %v442 = vsub.s32 0, %v441
      %v443 = vsel %vm437, %v442, %v441
      %vm444 = vcmp.lt.s32.totalorder %v322, 0
      %v445 = vsub.s32 0, %v322
      %v446 = vsel %vm444, %v445, %v322
      %v447 = vshrl.u32 %v446, 4
      %v448 = vand.u32 %v446, 15
      %v449 = vsub.s32 0, %v448
      %v450 = vsel %vm444, %v449, %v448
      %vm451 = vcmp.lt.s32.totalorder %v323, 0
      %v452 = vsub.s32 0, %v323
      %v453 = vsel %vm451, %v452, %v323
      %v454 = vshrl.u32 %v453, 4
      %v455 = vand.u32 %v453, 15
      %v456 = vsub.s32 0, %v455
      %v457 = vsel %vm451, %v456, %v455
      %vm458 = vcmp.lt.s32.totalorder %v324, 0
      %v459 = vsub.s32 0, %v324
      %v460 = vsel %vm458, %v459, %v324
      %v461 = vshrl.u32 %v460, 4
      %v462 = vand.u32 %v460, 15
      %v463 = vsub.s32 0, %v462
      %v464 = vsel %vm458, %v463, %v462
      %vm465 = vcmp.lt.s32.totalorder %v325, 0
      %v466 = vsub.s32 0, %v325
      %v467 = vsel %vm465, %v466, %v325
      %v468 = vshrl.u32 %v467, 4
      %v469 = vand.u32 %v467, 15
      %v470 = vsub.s32 0, %v469
      %v471 = vsel %vm465, %v470, %v469
      %vm472 = vcmp.lt.s32.totalorder %v326, 0
      %v473 = vsub.s32 0, %v326
      %v474 = vsel %vm472, %v473, %v326
      %v475 = vshrl.u32 %v474, 4
      %v476 = vand.u32 %v474, 15
      %v477 = vsub.s32 0, %v476
      %v478 = vsel %vm472, %v477, %v476
      %vm479 = vcmp.lt.s32.totalorder %v327, 0
      %v480 = vsub.s32 0, %v327
      %v481 = vsel %vm479, %v480, %v327
      %v482 = vshrl.u32 %v481, 4
      %v483 = vand.u32 %v481, 15
      %v484 = vsub.s32 0, %v483
      %v485 = vsel %vm479, %v484, %v483
      %vm486 = vcmp.lt.s32.totalorder %v328, 0
      %v487 = vsub.s32 0, %v328
      %v488 = vsel %vm486, %v487, %v328
      %v489 = vshrl.u32 %v488, 4
      %v490 = vand.u32 %v488, 15
      %v491 = vsub.s32 0, %v490
      %v492 = vsel %vm486, %v491, %v490
      %vm493 = vcmp.lt.s32.totalorder %v329, 0
      %v494 = vsub.s32 0, %v329
      %v495 = vsel %vm493, %v494, %v329
      %v496 = vshrl.u32 %v495, 4
      %v497 = vand.u32 %v495, 15
      %v498 = vsub.s32 0, %v497
      %v499 = vsel %vm493, %v498, %v497
      %vm500 = vcmp.lt.s32.totalorder %v330, 0
      %v501 = vsub.s32 0, %v330
      %v502 = vsel %vm500, %v501, %v330
      %v503 = vshrl.u32 %v502, 4
      %v504 = vand.u32 %v502, 15
      %v505 = vsub.s32 0, %v504
      %v506 = vsel %vm500, %v505, %v504
      %vm507 = vcmp.lt.s32.totalorder %v331, 0
      %v508 = vsub.s32 0, %v331
      %v509 = vsel %vm507, %v508, %v331
      %v510 = vshrl.u32 %v509, 4
      %v511 = vand.u32 %v509, 15
      %v512 = vsub.s32 0, %v511
      %v513 = vsel %vm507, %v512, %v511
      %vm514 = vcmp.lt.s32.totalorder %v332, 0
      %v515 = vsub.s32 0, %v332
      %v516 = vsel %vm514, %v515, %v332
      %v517 = vshrl.u32 %v516, 4
      %v518 = vand.u32 %v516, 15
      %v519 = vsub.s32 0, %v518
      %v520 = vsel %vm514, %v519, %v518
      %vm521 = vcmp.lt.s32.totalorder %v333, 0
      %v522 = vsub.s32 0, %v333
      %v523 = vsel %vm521, %v522, %v333
      %v524 = vshrl.u32 %v523, 4
      %v525 = vand.u32 %v523, 15
      %v526 = vsub.s32 0, %v525
      %v527 = vsel %vm521, %v526, %v525
      %vm528 = vcmp.lt.s32.totalorder %v334, 0
      %v529 = vsub.s32 0, %v334
      %v530 = vsel %vm528, %v529, %v334
      %v531 = vshrl.u32 %v530, 4
      %v532 = vand.u32 %v530, 15
      %v533 = vsub.s32 0, %v532
      %v534 = vsel %vm528, %v533, %v532
      %vm535 = vcmp.lt.s32.totalorder %v335, 0
      %v536 = vsub.s32 0, %v335
      %v537 = vsel %vm535, %v536, %v335
      %v538 = vshrl.u32 %v537, 4
      %v539 = vand.u32 %v537, 15
      %v540 = vsub.s32 0, %v539
      %v541 = vsel %vm535, %v540, %v539
      %vm542 = vcmp.lt.s32.totalorder %v336, 0
      %v543 = vsub.s32 0, %v336
      %v544 = vsel %vm542, %v543, %v336
      %v545 = vshrl.u32 %v544, 4
      %v546 = vand.u32 %v544, 15
      %v547 = vsub.s32 0, %v546
      %v548 = vsel %vm542, %v547, %v546
      %vm549 = vcmp.lt.s32.totalorder %v337, 0
      %v550 = vsub.s32 0, %v337
      %v551 = vsel %vm549, %v550, %v337
      %v552 = vshrl.u32 %v551, 4
      %v553 = vand.u32 %v551, 15
      %v554 = vsub.s32 0, %v553
      %v555 = vsel %vm549, %v554, %v553
      %vm556 = vcmp.lt.s32.totalorder %v338, 0
      %v557 = vsub.s32 0, %v338
      %v558 = vsel %vm556, %v557, %v338
      %v559 = vshrl.u32 %v558, 4
      %v560 = vand.u32 %v558, 15
      %v561 = vsub.s32 0, %v560
      %v562 = vsel %vm556, %v561, %v560
      %vm563 = vcmp.ne.s32.totalorder %v345, 0
      %vm564 = vcmp.ne.s32.totalorder %v352, 0
      %vm565 = vcmp.ne.s32.totalorder %v359, 0
      %vm566 = vcmp.ne.s32.totalorder %v366, 0
      %vm567 = vcmp.ne.s32.totalorder %v373, 0
      %vm568 = vcmp.ne.s32.totalorder %v380, 0
      %vm569 = vcmp.ne.s32.totalorder %v387, 0
      %vm570 = vcmp.ne.s32.totalorder %v394, 0
      %vm571 = vcmp.ne.s32.totalorder %v401, 0
      %vm572 = vcmp.ne.s32.totalorder %v408, 0
      %vm573 = vcmp.ne.s32.totalorder %v415, 0
      %vm574 = vcmp.ne.s32.totalorder %v422, 0
      %vm575 = vcmp.ne.s32.totalorder %v429, 0
      %vm576 = vcmp.ne.s32.totalorder %v436, 0
      %vm577 = vcmp.ne.s32.totalorder %v443, 0
      %vm578 = vcmp.ne.s32.totalorder %v450, 0
      %vm579 = vcmp.ne.s32.totalorder %v457, 0
      %vm580 = vcmp.ne.s32.totalorder %v464, 0
      %vm581 = vcmp.ne.s32.totalorder %v471, 0
      %vm582 = vcmp.ne.s32.totalorder %v478, 0
      %vm583 = vcmp.ne.s32.totalorder %v485, 0
      %vm584 = vcmp.ne.s32.totalorder %v492, 0
      %vm585 = vcmp.ne.s32.totalorder %v499, 0
      %vm586 = vcmp.ne.s32.totalorder %v506, 0
      %vm587 = vcmp.ne.s32.totalorder %v513, 0
      %vm588 = vcmp.ne.s32.totalorder %v520, 0
      %vm589 = vcmp.ne.s32.totalorder %v527, 0
      %vm590 = vcmp.ne.s32.totalorder %v534, 0
      %vm591 = vcmp.ne.s32.totalorder %v541, 0
      %vm592 = vcmp.ne.s32.totalorder %v548, 0
      %vm593 = vcmp.ne.s32.totalorder %v555, 0
      %vm594 = vcmp.ne.s32.totalorder %v562, 0
      %vm595 = vcmp.lt.s32.totalorder %v345, 0
      %vm596 = vcmp.lt.s32.totalorder %v352, 0
      %vm597 = vcmp.lt.s32.totalorder %v359, 0
      %vm598 = vcmp.lt.s32.totalorder %v366, 0
      %vm599 = vcmp.lt.s32.totalorder %v373, 0
      %vm600 = vcmp.lt.s32.totalorder %v380, 0
      %vm601 = vcmp.lt.s32.totalorder %v387, 0
      %vm602 = vcmp.lt.s32.totalorder %v394, 0
      %vm603 = vcmp.lt.s32.totalorder %v401, 0
      %vm604 = vcmp.lt.s32.totalorder %v408, 0
      %vm605 = vcmp.lt.s32.totalorder %v415, 0
      %vm606 = vcmp.lt.s32.totalorder %v422, 0
      %vm607 = vcmp.lt.s32.totalorder %v429, 0
      %vm608 = vcmp.lt.s32.totalorder %v436, 0
      %vm609 = vcmp.lt.s32.totalorder %v443, 0
      %vm610 = vcmp.lt.s32.totalorder %v450, 0
      %vm611 = vcmp.lt.s32.totalorder %v457, 0
      %vm612 = vcmp.lt.s32.totalorder %v464, 0
      %vm613 = vcmp.lt.s32.totalorder %v471, 0
      %vm614 = vcmp.lt.s32.totalorder %v478, 0
      %vm615 = vcmp.lt.s32.totalorder %v485, 0
      %vm616 = vcmp.lt.s32.totalorder %v492, 0
      %vm617 = vcmp.lt.s32.totalorder %v499, 0
      %vm618 = vcmp.lt.s32.totalorder %v506, 0
      %vm619 = vcmp.lt.s32.totalorder %v513, 0
      %vm620 = vcmp.lt.s32.totalorder %v520, 0
      %vm621 = vcmp.lt.s32.totalorder %v527, 0
      %vm622 = vcmp.lt.s32.totalorder %v534, 0
      %vm623 = vcmp.lt.s32.totalorder %v541, 0
      %vm624 = vcmp.lt.s32.totalorder %v548, 0
      %vm625 = vcmp.lt.s32.totalorder %v555, 0
      %vm626 = vcmp.lt.s32.totalorder %v562, 0
      %vm627 = vmand %vm595, %vm563
      %vm628 = vmand %vm596, %vm564
      %vm629 = vmand %vm597, %vm565
      %vm630 = vmand %vm598, %vm566
      %vm631 = vmand %vm599, %vm567
      %vm632 = vmand %vm600, %vm568
      %vm633 = vmand %vm601, %vm569
      %vm634 = vmand %vm602, %vm570
      %vm635 = vmand %vm603, %vm571
      %vm636 = vmand %vm604, %vm572
      %vm637 = vmand %vm605, %vm573
      %vm638 = vmand %vm606, %vm574
      %vm639 = vmand %vm607, %vm575
      %vm640 = vmand %vm608, %vm576
      %vm641 = vmand %vm609, %vm577
      %vm642 = vmand %vm610, %vm578
      %vm643 = vmand %vm611, %vm579
      %vm644 = vmand %vm612, %vm580
      %vm645 = vmand %vm613, %vm581
      %vm646 = vmand %vm614, %vm582
      %vm647 = vmand %vm615, %vm583
      %vm648 = vmand %vm616, %vm584
      %vm649 = vmand %vm617, %vm585
      %vm650 = vmand %vm618, %vm586
      %vm651 = vmand %vm619, %vm587
      %vm652 = vmand %vm620, %vm588
      %vm653 = vmand %vm621, %vm589
      %vm654 = vmand %vm622, %vm590
      %vm655 = vmand %vm623, %vm591
      %vm656 = vmand %vm624, %vm592
      %vm657 = vmand %vm625, %vm593
      %vm658 = vmand %vm626, %vm594
      %v659 = vadd.s32 %v345, 16
      %v660 = vadd.s32 %v352, 16
      %v661 = vadd.s32 %v359, 16
      %v662 = vadd.s32 %v366, 16
      %v663 = vadd.s32 %v373, 16
      %v664 = vadd.s32 %v380, 16
      %v665 = vadd.s32 %v387, 16
      %v666 = vadd.s32 %v394, 16
      %v667 = vadd.s32 %v401, 16
      %v668 = vadd.s32 %v408, 16
      %v669 = vadd.s32 %v415, 16
      %v670 = vadd.s32 %v422, 16
      %v671 = vadd.s32 %v429, 16
      %v672 = vadd.s32 %v436, 16
      %v673 = vadd.s32 %v443, 16
      %v674 = vadd.s32 %v450, 16
      %v675 = vadd.s32 %v457, 16
      %v676 = vadd.s32 %v464, 16
      %v677 = vadd.s32 %v471, 16
      %v678 = vadd.s32 %v478, 16
      %v679 = vadd.s32 %v485, 16
      %v680 = vadd.s32 %v492, 16
      %v681 = vadd.s32 %v499, 16
      %v682 = vadd.s32 %v506, 16
      %v683 = vadd.s32 %v513, 16
      %v684 = vadd.s32 %v520, 16
      %v685 = vadd.s32 %v527, 16
      %v686 = vadd.s32 %v534, 16
      %v687 = vadd.s32 %v541, 16
      %v688 = vadd.s32 %v548, 16
      %v689 = vadd.s32 %v555, 16
      %v690 = vadd.s32 %v562, 16
      %v691 = vsel %vm627, %v659, %v345
      %v692 = vsel %vm628, %v660, %v352
      %v693 = vsel %vm629, %v661, %v359
      %v694 = vsel %vm630, %v662, %v366
      %v695 = vsel %vm631, %v663, %v373
      %v696 = vsel %vm632, %v664, %v380
      %v697 = vsel %vm633, %v665, %v387
      %v698 = vsel %vm634, %v666, %v394
      %v699 = vsel %vm635, %v667, %v401
      %v700 = vsel %vm636, %v668, %v408
      %v701 = vsel %vm637, %v669, %v415
      %v702 = vsel %vm638, %v670, %v422
      %v703 = vsel %vm639, %v671, %v429
      %v704 = vsel %vm640, %v672, %v436
      %v705 = vsel %vm641, %v673, %v443
      %v706 = vsel %vm642, %v674, %v450
      %v707 = vsel %vm643, %v675, %v457
      %v708 = vsel %vm644, %v676, %v464
      %v709 = vsel %vm645, %v677, %v471
      %v710 = vsel %vm646, %v678, %v478
      %v711 = vsel %vm647, %v679, %v485
      %v712 = vsel %vm648, %v680, %v492
      %v713 = vsel %vm649, %v681, %v499
      %v714 = vsel %vm650, %v682, %v506
      %v715 = vsel %vm651, %v683, %v513
      %v716 = vsel %vm652, %v684, %v520
      %v717 = vsel %vm653, %v685, %v527
      %v718 = vsel %vm654, %v686, %v534
      %v719 = vsel %vm655, %v687, %v541
      %v720 = vsel %vm656, %v688, %v548
      %v721 = vsel %vm657, %v689, %v555
      %v722 = vsel %vm658, %v690, %v562
      %vm723 = vcmp.ne.s32.totalorder %v691, 15
      %vm724 = vcmp.ne.s32.totalorder %v692, 15
      %vm725 = vcmp.ne.s32.totalorder %v693, 15
      %vm726 = vcmp.ne.s32.totalorder %v694, 15
      %vm727 = vcmp.ne.s32.totalorder %v695, 15
      %vm728 = vcmp.ne.s32.totalorder %v696, 15
      %vm729 = vcmp.ne.s32.totalorder %v697, 15
      %vm730 = vcmp.ne.s32.totalorder %v698, 15
      %vm731 = vcmp.ne.s32.totalorder %v699, 15
      %vm732 = vcmp.ne.s32.totalorder %v700, 15
      %vm733 = vcmp.ne.s32.totalorder %v701, 15
      %vm734 = vcmp.ne.s32.totalorder %v702, 15
      %vm735 = vcmp.ne.s32.totalorder %v703, 15
      %vm736 = vcmp.ne.s32.totalorder %v704, 15
      %vm737 = vcmp.ne.s32.totalorder %v705, 15
      %vm738 = vcmp.ne.s32.totalorder %v706, 15
      %vm739 = vcmp.ne.s32.totalorder %v707, 15
      %vm740 = vcmp.ne.s32.totalorder %v708, 15
      %vm741 = vcmp.ne.s32.totalorder %v709, 15
      %vm742 = vcmp.ne.s32.totalorder %v710, 15
      %vm743 = vcmp.ne.s32.totalorder %v711, 15
      %vm744 = vcmp.ne.s32.totalorder %v712, 15
      %vm745 = vcmp.ne.s32.totalorder %v713, 15
      %vm746 = vcmp.ne.s32.totalorder %v714, 15
      %vm747 = vcmp.ne.s32.totalorder %v715, 15
      %vm748 = vcmp.ne.s32.totalorder %v716, 15
      %vm749 = vcmp.ne.s32.totalorder %v717, 15
      %vm750 = vcmp.ne.s32.totalorder %v718, 15
      %vm751 = vcmp.ne.s32.totalorder %v719, 15
      %vm752 = vcmp.ne.s32.totalorder %v720, 15
      %vm753 = vcmp.ne.s32.totalorder %v721, 15
      %vm754 = vcmp.ne.s32.totalorder %v722, 15
      %v755 = vsel %vm723, 1, 0
      %v756 = vsel %vm724, 1, 0
      %v757 = vsel %vm725, 1, 0
      %v758 = vsel %vm726, 1, 0
      %v759 = vsel %vm727, 1, 0
      %v760 = vsel %vm728, 1, 0
      %v761 = vsel %vm729, 1, 0
      %v762 = vsel %vm730, 1, 0
      %v763 = vsel %vm731, 1, 0
      %v764 = vsel %vm732, 1, 0
      %v765 = vsel %vm733, 1, 0
      %v766 = vsel %vm734, 1, 0
      %v767 = vsel %vm735, 1, 0
      %v768 = vsel %vm736, 1, 0
      %v769 = vsel %vm737, 1, 0
      %v770 = vsel %vm738, 1, 0
      %v771 = vsel %vm739, 1, 0
      %v772 = vsel %vm740, 1, 0
      %v773 = vsel %vm741, 1, 0
      %v774 = vsel %vm742, 1, 0
      %v775 = vsel %vm743, 1, 0
      %v776 = vsel %vm744, 1, 0
      %v777 = vsel %vm745, 1, 0
      %v778 = vsel %vm746, 1, 0
      %v779 = vsel %vm747, 1, 0
      %v780 = vsel %vm748, 1, 0
      %v781 = vsel %vm749, 1, 0
      %v782 = vsel %vm750, 1, 0
      %v783 = vsel %vm751, 1, 0
      %v784 = vsel %vm752, 1, 0
      %v785 = vsel %vm753, 1, 0
      %v786 = vsel %vm754, 1, 0
      %v787 = vcvt.s32.f32 %v755
      %v788 = vcvt.s32.f32 %v756
      %v789 = vcvt.s32.f32 %v757
      %v790 = vcvt.s32.f32 %v758
      %v791 = vcvt.s32.f32 %v759
      %v792 = vcvt.s32.f32 %v760
      %v793 = vcvt.s32.f32 %v761
      %v794 = vcvt.s32.f32 %v762
      %v795 = vcvt.s32.f32 %v763
      %v796 = vcvt.s32.f32 %v764
      %v797 = vcvt.s32.f32 %v765
      %v798 = vcvt.s32.f32 %v766
      %v799 = vcvt.s32.f32 %v767
      %v800 = vcvt.s32.f32 %v768
      %v801 = vcvt.s32.f32 %v769
      %v802 = vcvt.s32.f32 %v770
      %v803 = vcvt.s32.f32 %v771
      %v804 = vcvt.s32.f32 %v772
      %v805 = vcvt.s32.f32 %v773
      %v806 = vcvt.s32.f32 %v774
      %v807 = vcvt.s32.f32 %v775
      %v808 = vcvt.s32.f32 %v776
      %v809 = vcvt.s32.f32 %v777
      %v810 = vcvt.s32.f32 %v778
      %v811 = vcvt.s32.f32 %v779
      %v812 = vcvt.s32.f32 %v780
      %v813 = vcvt.s32.f32 %v781
      %v814 = vcvt.s32.f32 %v782
      %v815 = vcvt.s32.f32 %v783
      %v816 = vcvt.s32.f32 %v784
      %v817 = vcvt.s32.f32 %v785
      %v818 = vcvt.s32.f32 %v786
      %vm819 = vcmp.ne.s32.totalorder %v691, 0
      %vm820 = vcmp.ne.s32.totalorder %v692, 0
      %vm821 = vcmp.ne.s32.totalorder %v693, 0
      %vm822 = vcmp.ne.s32.totalorder %v694, 0
      %vm823 = vcmp.ne.s32.totalorder %v695, 0
      %vm824 = vcmp.ne.s32.totalorder %v696, 0
      %vm825 = vcmp.ne.s32.totalorder %v697, 0
      %vm826 = vcmp.ne.s32.totalorder %v698, 0
      %vm827 = vcmp.ne.s32.totalorder %v699, 0
      %vm828 = vcmp.ne.s32.totalorder %v700, 0
      %vm829 = vcmp.ne.s32.totalorder %v701, 0
      %vm830 = vcmp.ne.s32.totalorder %v702, 0
      %vm831 = vcmp.ne.s32.totalorder %v703, 0
      %vm832 = vcmp.ne.s32.totalorder %v704, 0
      %vm833 = vcmp.ne.s32.totalorder %v705, 0
      %vm834 = vcmp.ne.s32.totalorder %v706, 0
      %vm835 = vcmp.ne.s32.totalorder %v707, 0
      %vm836 = vcmp.ne.s32.totalorder %v708, 0
      %vm837 = vcmp.ne.s32.totalorder %v709, 0
      %vm838 = vcmp.ne.s32.totalorder %v710, 0
      %vm839 = vcmp.ne.s32.totalorder %v711, 0
      %vm840 = vcmp.ne.s32.totalorder %v712, 0
      %vm841 = vcmp.ne.s32.totalorder %v713, 0
      %vm842 = vcmp.ne.s32.totalorder %v714, 0
      %vm843 = vcmp.ne.s32.totalorder %v715, 0
      %vm844 = vcmp.ne.s32.totalorder %v716, 0
      %vm845 = vcmp.ne.s32.totalorder %v717, 0
      %vm846 = vcmp.ne.s32.totalorder %v718, 0
      %vm847 = vcmp.ne.s32.totalorder %v719, 0
      %vm848 = vcmp.ne.s32.totalorder %v720, 0
      %vm849 = vcmp.ne.s32.totalorder %v721, 0
      %vm850 = vcmp.ne.s32.totalorder %v722, 0
      %v851 = vsel %vm819, 1, 0
      %v852 = vsel %vm820, 1, 0
      %v853 = vsel %vm821, 1, 0
      %v854 = vsel %vm822, 1, 0
      %v855 = vsel %vm823, 1, 0
      %v856 = vsel %vm824, 1, 0
      %v857 = vsel %vm825, 1, 0
      %v858 = vsel %vm826, 1, 0
      %v859 = vsel %vm827, 1, 0
      %v860 = vsel %vm828, 1, 0
      %v861 = vsel %vm829, 1, 0
      %v862 = vsel %vm830, 1, 0
      %v863 = vsel %vm831, 1, 0
      %v864 = vsel %vm832, 1, 0
      %v865 = vsel %vm833, 1, 0
      %v866 = vsel %vm834, 1, 0
      %v867 = vsel %vm835, 1, 0
      %v868 = vsel %vm836, 1, 0
      %v869 = vsel %vm837, 1, 0
      %v870 = vsel %vm838, 1, 0
      %v871 = vsel %vm839, 1, 0
      %v872 = vsel %vm840, 1, 0
      %v873 = vsel %vm841, 1, 0
      %v874 = vsel %vm842, 1, 0
      %v875 = vsel %vm843, 1, 0
      %v876 = vsel %vm844, 1, 0
      %v877 = vsel %vm845, 1, 0
      %v878 = vsel %vm846, 1, 0
      %v879 = vsel %vm847, 1, 0
      %v880 = vsel %vm848, 1, 0
      %v881 = vsel %vm849, 1, 0
      %v882 = vsel %vm850, 1, 0
      %v883 = vcvt.s32.f32 %v851
      %v884 = vcvt.s32.f32 %v852
      %v885 = vcvt.s32.f32 %v853
      %v886 = vcvt.s32.f32 %v854
      %v887 = vcvt.s32.f32 %v855
      %v888 = vcvt.s32.f32 %v856
      %v889 = vcvt.s32.f32 %v857
      %v890 = vcvt.s32.f32 %v858
      %v891 = vcvt.s32.f32 %v859
      %v892 = vcvt.s32.f32 %v860
      %v893 = vcvt.s32.f32 %v861
      %v894 = vcvt.s32.f32 %v862
      %v895 = vcvt.s32.f32 %v863
      %v896 = vcvt.s32.f32 %v864
      %v897 = vcvt.s32.f32 %v865
      %v898 = vcvt.s32.f32 %v866
      %v899 = vcvt.s32.f32 %v867
      %v900 = vcvt.s32.f32 %v868
      %v901 = vcvt.s32.f32 %v869
      %v902 = vcvt.s32.f32 %v870
      %v903 = vcvt.s32.f32 %v871
      %v904 = vcvt.s32.f32 %v872
      %v905 = vcvt.s32.f32 %v873
      %v906 = vcvt.s32.f32 %v874
      %v907 = vcvt.s32.f32 %v875
      %v908 = vcvt.s32.f32 %v876
      %v909 = vcvt.s32.f32 %v877
      %v910 = vcvt.s32.f32 %v878
      %v911 = vcvt.s32.f32 %v879
      %v912 = vcvt.s32.f32 %v880
      %v913 = vcvt.s32.f32 %v881
      %v914 = vcvt.s32.f32 %v882
      %v915 = vld [vmem:[%s300] sm:$0xff]
      %v916 = vld [vmem:[%s300 + $0x8] sm:$0xff]
      %v917 = vld [vmem:[%s300 + $0x10] sm:$0xff]
      %v918 = vld [vmem:[%s300 + $0x18] sm:$0xff]
      %v919 = vld [vmem:[%s300 + $0x20] sm:$0xff]
      %v920 = vld [vmem:[%s300 + $0x28] sm:$0xff]
      %v921 = vld [vmem:[%s300 + $0x30] sm:$0xff]
      %v922 = vld [vmem:[%s300 + $0x38] sm:$0xff]
      %v923 = vld [vmem:[%s300 + $0x40] sm:$0xff]
      %v924 = vld [vmem:[%s300 + $0x48] sm:$0xff]
      %v925 = vld [vmem:[%s300 + $0x50] sm:$0xff]
      %v926 = vld [vmem:[%s300 + $0x58] sm:$0xff]
      %v927 = vld [vmem:[%s300 + $0x60] sm:$0xff]
      %v928 = vld [vmem:[%s300 + $0x68] sm:$0xff]
      %v929 = vld [vmem:[%s300 + $0x70] sm:$0xff]
      %v930 = vld [vmem:[%s300 + $0x78] sm:$0xff]
      %v931 = vld [vmem:[%s300 + $0x80] sm:$0xff]
      %v932 = vld [vmem:[%s300 + $0x88] sm:$0xff]
      %v933 = vld [vmem:[%s300 + $0x90] sm:$0xff]
      %v934 = vld [vmem:[%s300 + $0x98] sm:$0xff]
      %v935 = vld [vmem:[%s300 + $0xa0] sm:$0xff]
      %v936 = vld [vmem:[%s300 + $0xa8] sm:$0xff]
      %v937 = vld [vmem:[%s300 + $0xb0] sm:$0xff]
      %v938 = vld [vmem:[%s300 + $0xb8] sm:$0xff]
      %v939 = vld [vmem:[%s300 + $0xc0] sm:$0xff]
      %v940 = vld [vmem:[%s300 + $0xc8] sm:$0xff]
      %v941 = vld [vmem:[%s300 + $0xd0] sm:$0xff]
      %v942 = vld [vmem:[%s300 + $0xd8] sm:$0xff]
      %v943 = vld [vmem:[%s300 + $0xe0] sm:$0xff]
      %v944 = vld [vmem:[%s300 + $0xe8] sm:$0xff]
      %v945 = vld [vmem:[%s300 + $0xf0] sm:$0xff]
      %v946 = vld [vmem:[%s300 + $0xf8] sm:$0xff]
      %v947 = vld [vmem:[%s1] sm:$0xf]
      %v948 = vld [vmem:[%s2] sm:$0x1]
      %v950 = vperm.slane %v948, 0
      %vm952 = vcmask 31744
      %v954 = vsel %vm952, %v915, 0
      %v957 = vsel %vm952, %v916, 0
      %v960 = vsel %vm952, %v917, 0
      %v963 = vsel %vm952, %v918, 0
      %v966 = vsel %vm952, %v919, 0
      %v969 = vsel %vm952, %v920, 0
      %v972 = vsel %vm952, %v921, 0
      %v975 = vsel %vm952, %v922, 0
      %v978 = vsel %vm952, %v923, 0
      %v981 = vsel %vm952, %v924, 0
      %v984 = vsel %vm952, %v925, 0
      %v987 = vsel %vm952, %v926, 0
      %v990 = vsel %vm952, %v927, 0
      %v993 = vsel %vm952, %v928, 0
      %v996 = vsel %vm952, %v929, 0
      %v999 = vsel %vm952, %v930, 0
      %v1002 = vsel %vm952, %v931, 0
      %v1005 = vsel %vm952, %v932, 0
      %v1008 = vsel %vm952, %v933, 0
      %v1011 = vsel %vm952, %v934, 0
      %v1014 = vsel %vm952, %v935, 0
      %v1017 = vsel %vm952, %v936, 0
      %v1020 = vsel %vm952, %v937, 0
      %v1023 = vsel %vm952, %v938, 0
      %v1026 = vsel %vm952, %v939, 0
      %v1029 = vsel %vm952, %v940, 0
      %v1032 = vsel %vm952, %v941, 0
      %v1035 = vsel %vm952, %v942, 0
      %v1038 = vsel %vm952, %v943, 0
      %v1041 = vsel %vm952, %v944, 0
      %v1044 = vsel %vm952, %v945, 0
      %v1047 = vsel %vm952, %v946, 0
      %vm1049 = vcmask 1043456
      %v1051 = vsel %vm1049, %v947, 0
      %1053 = vmatpush.msra.mxu0 0.0
      %1054 = vmatpush.msra.mxu0 0.0
      %1055 = vmatpush.msra.mxu0 0.0
      %1056 = vmatpush.msra.mxu0 0.0
      %1057 = vmatpush.msra.mxu0 0.0
      %1058 = vmatpush.msra.mxu0 0.0
      %1059 = vmatpush.msra.mxu0 0.0
      %1060 = vmatpush.msra.mxu0 0.0
      %1061 = vmatpush.msra.mxu0 0.0
      %1062 = vmatpush.msra.mxu0 0.0
      %1063 = vmatpush.msra.mxu0 0.0
      %1064 = vmatpush.msra.mxu0 0.0
      %1065 = vmatpush.msra.mxu0 0.0
      %1066 = vmatpush.msra.mxu0 0.0
      %1067 = vmatpush.msra.mxu0 0.0
      %1068 = vmatpush.msra.mxu0 %v1051
      %1069 = vmatmul.f32.gmra.mxu0 %v954
      %v1070 = vpop.f32.mrf.mxu0
      %v1071 = vadd.f32 %v950, %v1070
      %1072 = vmatmul.f32.gmra.mxu0 %v957
      %v1073 = vpop.f32.mrf.mxu0
      %v1074 = vadd.f32 %v950, %v1073
      %1075 = vmatmul.f32.gmra.mxu0 %v960
      %v1076 = vpop.f32.mrf.mxu0
      %v1077 = vadd.f32 %v950, %v1076
      %1078 = vmatmul.f32.gmra.mxu0 %v963
      %v1079 = vpop.f32.mrf.mxu0
      %v1080 = vadd.f32 %v950, %v1079
      %1081 = vmatmul.f32.gmra.mxu0 %v966
      %v1082 = vpop.f32.mrf.mxu0
      %v1083 = vadd.f32 %v950, %v1082
      %1084 = vmatmul.f32.gmra.mxu0 %v969
      %v1085 = vpop.f32.mrf.mxu0
      %v1086 = vadd.f32 %v950, %v1085
      %1087 = vmatmul.f32.gmra.mxu0 %v972
      %v1088 = vpop.f32.mrf.mxu0
      %v1089 = vadd.f32 %v950, %v1088
      %1090 = vmatmul.f32.gmra.mxu0 %v975
      %v1091 = vpop.f32.mrf.mxu0
      %v1092 = vadd.f32 %v950, %v1091
      %1093 = vmatmul.f32.gmra.mxu0 %v978
      %v1094 = vpop.f32.mrf.mxu0
      %v1095 = vadd.f32 %v950, %v1094
      %1096 = vmatmul.f32.gmra.mxu0 %v981
      %v1097 = vpop.f32.mrf.mxu0
      %v1098 = vadd.f32 %v950, %v1097
      %1099 = vmatmul.f32.gmra.mxu0 %v984
      %v1100 = vpop.f32.mrf.mxu0
      %v1101 = vadd.f32 %v950, %v1100
      %1102 = vmatmul.f32.gmra.mxu0 %v987
      %v1103 = vpop.f32.mrf.mxu0
      %v1104 = vadd.f32 %v950, %v1103
      %1105 = vmatmul.f32.gmra.mxu0 %v990
      %v1106 = vpop.f32.mrf.mxu0
      %v1107 = vadd.f32 %v950, %v1106
      %1108 = vmatmul.f32.gmra.mxu0 %v993
      %v1109 = vpop.f32.mrf.mxu0
      %v1110 = vadd.f32 %v950, %v1109
      %1111 = vmatmul.f32.gmra.mxu0 %v996
      %v1112 = vpop.f32.mrf.mxu0
      %v1113 = vadd.f32 %v950, %v1112
      %1114 = vmatmul.f32.gmra.mxu0 %v999
      %v1115 = vpop.f32.mrf.mxu0
      %v1116 = vadd.f32 %v950, %v1115
      %1117 = vmatmul.f32.gmra.mxu0 %v1002
      %v1118 = vpop.f32.mrf.mxu0
      %v1119 = vadd.f32 %v950, %v1118
      %1120 = vmatmul.f32.gmra.mxu0 %v1005
      %v1121 = vpop.f32.mrf.mxu0
      %v1122 = vadd.f32 %v950, %v1121
      %1123 = vmatmul.f32.gmra.mxu0 %v1008
      %v1124 = vpop.f32.mrf.mxu0
      %v1125 = vadd.f32 %v950, %v1124
      %1126 = vmatmul.f32.gmra.mxu0 %v1011
      %v1127 = vpop.f32.mrf.mxu0
      %v1128 = vadd.f32 %v950, %v1127
      %1129 = vmatmul.f32.gmra.mxu0 %v1014
      %v1130 = vpop.f32.mrf.mxu0
      %v1131 = vadd.f32 %v950, %v1130
      %1132 = vmatmul.f32.gmra.mxu0 %v1017
      %v1133 = vpop.f32.mrf.mxu0
      %v1134 = vadd.f32 %v950, %v1133
      %1135 = vmatmul.f32.gmra.mxu0 %v1020
      %v1136 = vpop.f32.mrf.mxu0
      %v1137 = vadd.f32 %v950, %v1136
      %1138 = vmatmul.f32.gmra.mxu0 %v1023
      %v1139 = vpop.f32.mrf.mxu0
      %v1140 = vadd.f32 %v950, %v1139
      %1141 = vmatmul.f32.gmra.mxu0 %v1026
      %v1142 = vpop.f32.mrf.mxu0
      %v1143 = vadd.f32 %v950, %v1142
      %1144 = vmatmul.f32.gmra.mxu0 %v1029
      %v1145 = vpop.f32.mrf.mxu0
      %v1146 = vadd.f32 %v950, %v1145
      %1147 = vmatmul.f32.gmra.mxu0 %v1032
      %v1148 = vpop.f32.mrf.mxu0
      %v1149 = vadd.f32 %v950, %v1148
      %1150 = vmatmul.f32.gmra.mxu0 %v1035
      %v1151 = vpop.f32.mrf.mxu0
      %v1152 = vadd.f32 %v950, %v1151
      %1153 = vmatmul.f32.gmra.mxu0 %v1038
      %v1154 = vpop.f32.mrf.mxu0
      %v1155 = vadd.f32 %v950, %v1154
      %1156 = vmatmul.f32.gmra.mxu0 %v1041
      %v1157 = vpop.f32.mrf.mxu0
      %v1158 = vadd.f32 %v950, %v1157
      %1159 = vmatmul.f32.gmra.mxu0 %v1044
      %v1160 = vpop.f32.mrf.mxu0
      %v1161 = vadd.f32 %v950, %v1160
      %1162 = vmatmul.f32.gmra.mxu0 %v1047
      %v1163 = vpop.f32.mrf.mxu0
      %v1164 = vadd.f32 %v950, %v1163
      %1165 = vdwg.mxu0
      %v1166 = vmax.f32 %v1071, 0.0
      %v1167 = vmax.f32 %v1074, 0.0
      %v1168 = vmax.f32 %v1077, 0.0
      %v1169 = vmax.f32 %v1080, 0.0
      %v1170 = vmax.f32 %v1083, 0.0
      %v1171 = vmax.f32 %v1086, 0.0
      %v1172 = vmax.f32 %v1089, 0.0
      %v1173 = vmax.f32 %v1092, 0.0
      %v1174 = vmax.f32 %v1095, 0.0
      %v1175 = vmax.f32 %v1098, 0.0
      %v1176 = vmax.f32 %v1101, 0.0
      %v1177 = vmax.f32 %v1104, 0.0
      %v1178 = vmax.f32 %v1107, 0.0
      %v1179 = vmax.f32 %v1110, 0.0
      %v1180 = vmax.f32 %v1113, 0.0
      %v1181 = vmax.f32 %v1116, 0.0
      %v1182 = vmax.f32 %v1119, 0.0
      %v1183 = vmax.f32 %v1122, 0.0
      %v1184 = vmax.f32 %v1125, 0.0
      %v1185 = vmax.f32 %v1128, 0.0
      %v1186 = vmax.f32 %v1131, 0.0
      %v1187 = vmax.f32 %v1134, 0.0
      %v1188 = vmax.f32 %v1137, 0.0
      %v1189 = vmax.f32 %v1140, 0.0
      %v1190 = vmax.f32 %v1143, 0.0
      %v1191 = vmax.f32 %v1146, 0.0
      %v1192 = vmax.f32 %v1149, 0.0
      %v1193 = vmax.f32 %v1152, 0.0
      %v1194 = vmax.f32 %v1155, 0.0
      %v1195 = vmax.f32 %v1158, 0.0
      %v1196 = vmax.f32 %v1161, 0.0
      %v1197 = vmax.f32 %v1164, 0.0
      %v1198 = vmul.f32 %v1166, %v787
      %v1199 = vmul.f32 %v1167, %v788
      %v1200 = vmul.f32 %v1168, %v789
      %v1201 = vmul.f32 %v1169, %v790
      %v1202 = vmul.f32 %v1170, %v791
      %v1203 = vmul.f32 %v1171, %v792
      %v1204 = vmul.f32 %v1172, %v793
      %v1205 = vmul.f32 %v1173, %v794
      %v1206 = vmul.f32 %v1174, %v795
      %v1207 = vmul.f32 %v1175, %v796
      %v1208 = vmul.f32 %v1176, %v797
      %v1209 = vmul.f32 %v1177, %v798
      %v1210 = vmul.f32 %v1178, %v799
      %v1211 = vmul.f32 %v1179, %v800
      %v1212 = vmul.f32 %v1180, %v801
      %v1213 = vmul.f32 %v1181, %v802
      %v1214 = vmul.f32 %v1182, %v803
      %v1215 = vmul.f32 %v1183, %v804
      %v1216 = vmul.f32 %v1184, %v805
      %v1217 = vmul.f32 %v1185, %v806
      %v1218 = vmul.f32 %v1186, %v807
      %v1219 = vmul.f32 %v1187, %v808
      %v1220 = vmul.f32 %v1188, %v809
      %v1221 = vmul.f32 %v1189, %v810
      %v1222 = vmul.f32 %v1190, %v811
      %v1223 = vmul.f32 %v1191, %v812
      %v1224 = vmul.f32 %v1192, %v813
      %v1225 = vmul.f32 %v1193, %v814
      %v1226 = vmul.f32 %v1194, %v815
      %v1227 = vmul.f32 %v1195, %v816
      %v1228 = vmul.f32 %v1196, %v817
      %v1229 = vmul.f32 %v1197, %v818
      %vm1262 = vcmask 1040384
      %v1263 = vrot.slane %v1198, 7
      %v1264 = vrot.slane %v1199, 7
      %v1265 = vsel %vm1262, %v1263, %v1264
      %v1266 = vrot.slane %v1200, 7
      %v1267 = vsel %vm1262, %v1264, %v1266
      %v1268 = vrot.slane %v1201, 7
      %v1269 = vsel %vm1262, %v1266, %v1268
      %v1270 = vrot.slane %v1202, 7
      %v1271 = vsel %vm1262, %v1268, %v1270
      %v1272 = vrot.slane %v1203, 7
      %v1273 = vsel %vm1262, %v1270, %v1272
      %v1274 = vrot.slane %v1204, 7
      %v1275 = vsel %vm1262, %v1272, %v1274
      %v1276 = vrot.slane %v1205, 7
      %v1277 = vsel %vm1262, %v1274, %v1276
      %v1278 = vrot.slane %v1206, 7
      %v1279 = vsel %vm1262, %v1276, %v1278
      %v1280 = vrot.slane %v1207, 7
      %v1281 = vsel %vm1262, %v1278, %v1280
      %v1282 = vrot.slane %v1208, 7
      %v1283 = vsel %vm1262, %v1280, %v1282
      %v1284 = vrot.slane %v1209, 7
      %v1285 = vsel %vm1262, %v1282, %v1284
      %v1286 = vrot.slane %v1210, 7
      %v1287 = vsel %vm1262, %v1284, %v1286
      %v1288 = vrot.slane %v1211, 7
      %v1289 = vsel %vm1262, %v1286, %v1288
      %v1290 = vrot.slane %v1212, 7
      %v1291 = vsel %vm1262, %v1288, %v1290
      %v1292 = vrot.slane %v1213, 7
      %v1293 = vsel %vm1262, %v1290, %v1292
      %v1294 = vrot.slane %v1214, 7
      %v1295 = vsel %vm1262, %v1292, %v1294
      %v1296 = vrot.slane %v1215, 7
      %v1297 = vsel %vm1262, %v1294, %v1296
      %v1298 = vrot.slane %v1216, 7
      %v1299 = vsel %vm1262, %v1296, %v1298
      %v1300 = vrot.slane %v1217, 7
      %v1301 = vsel %vm1262, %v1298, %v1300
      %v1302 = vrot.slane %v1218, 7
      %v1303 = vsel %vm1262, %v1300, %v1302
      %v1304 = vrot.slane %v1219, 7
      %v1305 = vsel %vm1262, %v1302, %v1304
      %v1306 = vrot.slane %v1220, 7
      %v1307 = vsel %vm1262, %v1304, %v1306
      %v1308 = vrot.slane %v1221, 7
      %v1309 = vsel %vm1262, %v1306, %v1308
      %v1310 = vrot.slane %v1222, 7
      %v1311 = vsel %vm1262, %v1308, %v1310
      %v1312 = vrot.slane %v1223, 7
      %v1313 = vsel %vm1262, %v1310, %v1312
      %v1314 = vrot.slane %v1224, 7
      %v1315 = vsel %vm1262, %v1312, %v1314
      %v1316 = vrot.slane %v1225, 7
      %v1317 = vsel %vm1262, %v1314, %v1316
      %v1318 = vrot.slane %v1226, 7
      %v1319 = vsel %vm1262, %v1316, %v1318
      %v1320 = vrot.slane %v1227, 7
      %v1321 = vsel %vm1262, %v1318, %v1320
      %v1322 = vrot.slane %v1228, 7
      %v1323 = vsel %vm1262, %v1320, %v1322
      %v1324 = vrot.slane %v1229, 7
      %v1325 = vsel %vm1262, %v1322, %v1324
      %v1328 = vsel %vm1262, 0.0, %v1263
      %v1329 = vsel %vm1262, %v1324, 0.0
      %v1330 = vld [vmem:[%s3] sm:$0xff]
      %s1331 = scalar_lea.vmem %s3, 24
      %v1332 = vld [vmem:[%s1331] sm:$0xff]
      %vm1333 = vcmask 64512
      %v1335 = vsel %vm1333, %v1328, 0
      %v1337 = vsel %vm1333, %v1265, 0
      %v1339 = vsel %vm1333, %v1267, 0
      %v1341 = vsel %vm1333, %v1269, 0
      %v1343 = vsel %vm1333, %v1271, 0
      %v1345 = vsel %vm1333, %v1273, 0
      %v1347 = vsel %vm1333, %v1275, 0
      %v1349 = vsel %vm1333, %v1277, 0
      %v1351 = vsel %vm1333, %v1279, 0
      %v1353 = vsel %vm1333, %v1281, 0
      %v1355 = vsel %vm1333, %v1283, 0
      %v1357 = vsel %vm1333, %v1285, 0
      %v1359 = vsel %vm1333, %v1287, 0
      %v1361 = vsel %vm1333, %v1289, 0
      %v1363 = vsel %vm1333, %v1291, 0
      %v1365 = vsel %vm1333, %v1293, 0
      %v1367 = vsel %vm1333, %v1295, 0
      %v1369 = vsel %vm1333, %v1297, 0
      %v1371 = vsel %vm1333, %v1299, 0
      %v1373 = vsel %vm1333, %v1301, 0
      %v1375 = vsel %vm1333, %v1303, 0
      %v1377 = vsel %vm1333, %v1305, 0
      %v1379 = vsel %vm1333, %v1307, 0
      %v1381 = vsel %vm1333, %v1309, 0
      %v1383 = vsel %vm1333, %v1311, 0
      %v1385 = vsel %vm1333, %v1313, 0
      %v1387 = vsel %vm1333, %v1315, 0
      %v1389 = vsel %vm1333, %v1317, 0
      %v1391 = vsel %vm1333, %v1319, 0
      %v1393 = vsel %vm1333, %v1321, 0
      %v1395 = vsel %vm1333, %v1323, 0
      %v1397 = vsel %vm1333, %v1325, 0
      %1399 = vmatpush.msra.mxu0 0.0
      %1400 = vmatpush.msra.mxu0 0.0
      %1401 = vmatpush.msra.mxu0 0.0
      %1402 = vmatpush.msra.mxu0 0.0
      %1403 = vmatpush.msra.mxu0 0.0
      %1404 = vmatpush.msra.mxu0 0.0
      %1405 = vmatpush.msra.mxu0 0.0
      %1406 = vmatpush.msra.mxu0 0.0
      %1407 = vmatpush.msra.mxu0 0.0
      %1408 = vmatpush.msra.mxu0 0.0
      %1409 = vmatpush.msra.mxu0 0.0
      %1410 = vmatpush.msra.mxu0 0.0
      %1411 = vmatpush.msra.mxu0 0.0
      %1412 = vmatpush.msra.mxu0 0.0
      %1413 = vmatpush.msra.mxu0 0.0
      %1414 = vmatpush.msra.mxu0 %v1332
      %1415 = vmatmul.f32.gmra.mxu0 %v1335
      %v1416 = vpop.f32.mrf.mxu0
      %v1417 = vadd.f32 0.0, %v1416
      %1418 = vmatmul.f32.gmra.mxu0 %v1337
      %v1419 = vpop.f32.mrf.mxu0
      %v1420 = vadd.f32 0.0, %v1419
      %1421 = vmatmul.f32.gmra.mxu0 %v1339
      %v1422 = vpop.f32.mrf.mxu0
      %v1423 = vadd.f32 0.0, %v1422
      %1424 = vmatmul.f32.gmra.mxu0 %v1341
      %v1425 = vpop.f32.mrf.mxu0
      %v1426 = vadd.f32 0.0, %v1425
      %1427 = vmatmul.f32.gmra.mxu0 %v1343
      %v1428 = vpop.f32.mrf.mxu0
      %v1429 = vadd.f32 0.0, %v1428
      %1430 = vmatmul.f32.gmra.mxu0 %v1345
      %v1431 = vpop.f32.mrf.mxu0
      %v1432 = vadd.f32 0.0, %v1431
      %1433 = vmatmul.f32.gmra.mxu0 %v1347
      %v1434 = vpop.f32.mrf.mxu0
      %v1435 = vadd.f32 0.0, %v1434
      %1436 = vmatmul.f32.gmra.mxu0 %v1349
      %v1437 = vpop.f32.mrf.mxu0
      %v1438 = vadd.f32 0.0, %v1437
      %1439 = vmatmul.f32.gmra.mxu0 %v1351
      %v1440 = vpop.f32.mrf.mxu0
      %v1441 = vadd.f32 0.0, %v1440
      %1442 = vmatmul.f32.gmra.mxu0 %v1353
      %v1443 = vpop.f32.mrf.mxu0
      %v1444 = vadd.f32 0.0, %v1443
      %1445 = vmatmul.f32.gmra.mxu0 %v1355
      %v1446 = vpop.f32.mrf.mxu0
      %v1447 = vadd.f32 0.0, %v1446
      %1448 = vmatmul.f32.gmra.mxu0 %v1357
      %v1449 = vpop.f32.mrf.mxu0
      %v1450 = vadd.f32 0.0, %v1449
      %1451 = vmatmul.f32.gmra.mxu0 %v1359
      %v1452 = vpop.f32.mrf.mxu0
      %v1453 = vadd.f32 0.0, %v1452
      %1454 = vmatmul.f32.gmra.mxu0 %v1361
      %v1455 = vpop.f32.mrf.mxu0
      %v1456 = vadd.f32 0.0, %v1455
      %1457 = vmatmul.f32.gmra.mxu0 %v1363
      %v1458 = vpop.f32.mrf.mxu0
      %v1459 = vadd.f32 0.0, %v1458
      %1460 = vmatmul.f32.gmra.mxu0 %v1365
      %v1461 = vpop.f32.mrf.mxu0
      %v1462 = vadd.f32 0.0, %v1461
      %1463 = vmatmul.f32.gmra.mxu0 %v1367
      %v1464 = vpop.f32.mrf.mxu0
      %v1465 = vadd.f32 0.0, %v1464
      %1466 = vmatmul.f32.gmra.mxu0 %v1369
      %v1467 = vpop.f32.mrf.mxu0
      %v1468 = vadd.f32 0.0, %v1467
      %1469 = vmatmul.f32.gmra.mxu0 %v1371
      %v1470 = vpop.f32.mrf.mxu0
      %v1471 = vadd.f32 0.0, %v1470
      %1472 = vmatmul.f32.gmra.mxu0 %v1373
      %v1473 = vpop.f32.mrf.mxu0
      %v1474 = vadd.f32 0.0, %v1473
      %1475 = vmatmul.f32.gmra.mxu0 %v1375
      %v1476 = vpop.f32.mrf.mxu0
      %v1477 = vadd.f32 0.0, %v1476
      %1478 = vmatmul.f32.gmra.mxu0 %v1377
      %v1479 = vpop.f32.mrf.mxu0
      %v1480 = vadd.f32 0.0, %v1479
      %1481 = vmatmul.f32.gmra.mxu0 %v1379
      %v1482 = vpop.f32.mrf.mxu0
      %v1483 = vadd.f32 0.0, %v1482
      %1484 = vmatmul.f32.gmra.mxu0 %v1381
      %v1485 = vpop.f32.mrf.mxu0
      %v1486 = vadd.f32 0.0, %v1485
      %1487 = vmatmul.f32.gmra.mxu0 %v1383
      %v1488 = vpop.f32.mrf.mxu0
      %v1489 = vadd.f32 0.0, %v1488
      %1490 = vmatmul.f32.gmra.mxu0 %v1385
      %v1491 = vpop.f32.mrf.mxu0
      %v1492 = vadd.f32 0.0, %v1491
      %1493 = vmatmul.f32.gmra.mxu0 %v1387
      %v1494 = vpop.f32.mrf.mxu0
      %v1495 = vadd.f32 0.0, %v1494
      %1496 = vmatmul.f32.gmra.mxu0 %v1389
      %v1497 = vpop.f32.mrf.mxu0
      %v1498 = vadd.f32 0.0, %v1497
      %1499 = vmatmul.f32.gmra.mxu0 %v1391
      %v1500 = vpop.f32.mrf.mxu0
      %v1501 = vadd.f32 0.0, %v1500
      %1502 = vmatmul.f32.gmra.mxu0 %v1393
      %v1503 = vpop.f32.mrf.mxu0
      %v1504 = vadd.f32 0.0, %v1503
      %1505 = vmatmul.f32.gmra.mxu0 %v1395
      %v1506 = vpop.f32.mrf.mxu0
      %v1507 = vadd.f32 0.0, %v1506
      %1508 = vmatmul.f32.gmra.mxu0 %v1397
      %v1509 = vpop.f32.mrf.mxu0
      %v1510 = vadd.f32 0.0, %v1509
      %1511 = vdwg.mxu0
      %v1513 = vsel %vm1333, 0.0, 0
      %1515 = vmatpush.msra.mxu0 0.0
      %1516 = vmatpush.msra.mxu0 0.0
      %1517 = vmatpush.msra.mxu0 0.0
      %1518 = vmatpush.msra.mxu0 0.0
      %1519 = vmatpush.msra.mxu0 0.0
      %1520 = vmatpush.msra.mxu0 0.0
      %1521 = vmatpush.msra.mxu0 0.0
      %1522 = vmatpush.msra.mxu0 0.0
      %1523 = vmatpush.msra.mxu0 0.0
      %1524 = vmatpush.msra.mxu0 0.0
      %1525 = vmatpush.msra.mxu0 0.0
      %1526 = vmatpush.msra.mxu0 0.0
      %1527 = vmatpush.msra.mxu0 0.0
      %1528 = vmatpush.msra.mxu0 0.0
      %1529 = vmatpush.msra.mxu0 0.0
      %1530 = vmatpush.msra.mxu0 %v1330
      %1531 = vmatmul.f32.gmra.mxu0 %v1513
      %v1532 = vpop.f32.mrf.mxu0
      %v1533 = vadd.f32 %v1417, %v1532
      %1534 = vmatmul.f32.gmra.mxu0 %v1513
      %v1535 = vpop.f32.mrf.mxu0
      %v1536 = vadd.f32 %v1420, %v1535
      %1537 = vmatmul.f32.gmra.mxu0 %v1335
      %v1538 = vpop.f32.mrf.mxu0
      %v1539 = vadd.f32 %v1423, %v1538
      %1540 = vmatmul.f32.gmra.mxu0 %v1337
      %v1541 = vpop.f32.mrf.mxu0
      %v1542 = vadd.f32 %v1426, %v1541
      %1543 = vmatmul.f32.gmra.mxu0 %v1339
      %v1544 = vpop.f32.mrf.mxu0
      %v1545 = vadd.f32 %v1429, %v1544
      %1546 = vmatmul.f32.gmra.mxu0 %v1341
      %v1547 = vpop.f32.mrf.mxu0
      %v1548 = vadd.f32 %v1432, %v1547
      %1549 = vmatmul.f32.gmra.mxu0 %v1343
      %v1550 = vpop.f32.mrf.mxu0
      %v1551 = vadd.f32 %v1435, %v1550
      %1552 = vmatmul.f32.gmra.mxu0 %v1345
      %v1553 = vpop.f32.mrf.mxu0
      %v1554 = vadd.f32 %v1438, %v1553
      %1555 = vmatmul.f32.gmra.mxu0 %v1347
      %v1556 = vpop.f32.mrf.mxu0
      %v1557 = vadd.f32 %v1441, %v1556
      %1558 = vmatmul.f32.gmra.mxu0 %v1349
      %v1559 = vpop.f32.mrf.mxu0
      %v1560 = vadd.f32 %v1444, %v1559
      %1561 = vmatmul.f32.gmra.mxu0 %v1351
      %v1562 = vpop.f32.mrf.mxu0
      %v1563 = vadd.f32 %v1447, %v1562
      %1564 = vmatmul.f32.gmra.mxu0 %v1353
      %v1565 = vpop.f32.mrf.mxu0
      %v1566 = vadd.f32 %v1450, %v1565
      %1567 = vmatmul.f32.gmra.mxu0 %v1355
      %v1568 = vpop.f32.mrf.mxu0
      %v1569 = vadd.f32 %v1453, %v1568
      %1570 = vmatmul.f32.gmra.mxu0 %v1357
      %v1571 = vpop.f32.mrf.mxu0
      %v1572 = vadd.f32 %v1456, %v1571
      %1573 = vmatmul.f32.gmra.mxu0 %v1359
      %v1574 = vpop.f32.mrf.mxu0
      %v1575 = vadd.f32 %v1459, %v1574
      %1576 = vmatmul.f32.gmra.mxu0 %v1361
      %v1577 = vpop.f32.mrf.mxu0
      %v1578 = vadd.f32 %v1462, %v1577
      %1579 = vmatmul.f32.gmra.mxu0 %v1363
      %v1580 = vpop.f32.mrf.mxu0
      %v1581 = vadd.f32 %v1465, %v1580
      %1582 = vmatmul.f32.gmra.mxu0 %v1365
      %v1583 = vpop.f32.mrf.mxu0
      %v1584 = vadd.f32 %v1468, %v1583
      %1585 = vmatmul.f32.gmra.mxu0 %v1367
      %v1586 = vpop.f32.mrf.mxu0
      %v1587 = vadd.f32 %v1471, %v1586
      %1588 = vmatmul.f32.gmra.mxu0 %v1369
      %v1589 = vpop.f32.mrf.mxu0
      %v1590 = vadd.f32 %v1474, %v1589
      %1591 = vmatmul.f32.gmra.mxu0 %v1371
      %v1592 = vpop.f32.mrf.mxu0
      %v1593 = vadd.f32 %v1477, %v1592
      %1594 = vmatmul.f32.gmra.mxu0 %v1373
      %v1595 = vpop.f32.mrf.mxu0
      %v1596 = vadd.f32 %v1480, %v1595
      %1597 = vmatmul.f32.gmra.mxu0 %v1375
      %v1598 = vpop.f32.mrf.mxu0
      %v1599 = vadd.f32 %v1483, %v1598
      %1600 = vmatmul.f32.gmra.mxu0 %v1377
      %v1601 = vpop.f32.mrf.mxu0
      %v1602 = vadd.f32 %v1486, %v1601
      %1603 = vmatmul.f32.gmra.mxu0 %v1379
      %v1604 = vpop.f32.mrf.mxu0
      %v1605 = vadd.f32 %v1489, %v1604
      %1606 = vmatmul.f32.gmra.mxu0 %v1381
      %v1607 = vpop.f32.mrf.mxu0
      %v1608 = vadd.f32 %v1492, %v1607
      %1609 = vmatmul.f32.gmra.mxu0 %v1383
      %v1610 = vpop.f32.mrf.mxu0
      %v1611 = vadd.f32 %v1495, %v1610
      %1612 = vmatmul.f32.gmra.mxu0 %v1385
      %v1613 = vpop.f32.mrf.mxu0
      %v1614 = vadd.f32 %v1498, %v1613
      %1615 = vmatmul.f32.gmra.mxu0 %v1387
      %v1616 = vpop.f32.mrf.mxu0
      %v1617 = vadd.f32 %v1501, %v1616
      %1618 = vmatmul.f32.gmra.mxu0 %v1389
      %v1619 = vpop.f32.mrf.mxu0
      %v1620 = vadd.f32 %v1504, %v1619
      %1621 = vmatmul.f32.gmra.mxu0 %v1391
      %v1622 = vpop.f32.mrf.mxu0
      %v1623 = vadd.f32 %v1507, %v1622
      %1624 = vmatmul.f32.gmra.mxu0 %v1393
      %v1625 = vpop.f32.mrf.mxu0
      %v1626 = vadd.f32 %v1510, %v1625
      %1627 = vdwg.mxu0
      %s1628 = scalar_lea.vmem %s3, 48
      %v1629 = vld [vmem:[%s1628] sm:$0xff]
      %v1631 = vsel %vm1333, %v1329, 0
      %1633 = vmatpush.msra.mxu0 0.0
      %1634 = vmatpush.msra.mxu0 0.0
      %1635 = vmatpush.msra.mxu0 0.0
      %1636 = vmatpush.msra.mxu0 0.0
      %1637 = vmatpush.msra.mxu0 0.0
      %1638 = vmatpush.msra.mxu0 0.0
      %1639 = vmatpush.msra.mxu0 0.0
      %1640 = vmatpush.msra.mxu0 0.0
      %1641 = vmatpush.msra.mxu0 0.0
      %1642 = vmatpush.msra.mxu0 0.0
      %1643 = vmatpush.msra.mxu0 0.0
      %1644 = vmatpush.msra.mxu0 0.0
      %1645 = vmatpush.msra.mxu0 0.0
      %1646 = vmatpush.msra.mxu0 0.0
      %1647 = vmatpush.msra.mxu0 0.0
      %1648 = vmatpush.msra.mxu0 %v1629
      %1649 = vmatmul.f32.gmra.mxu0 %v1339
      %v1650 = vpop.f32.mrf.mxu0
      %v1651 = vadd.f32 0.0, %v1650
      %1652 = vmatmul.f32.gmra.mxu0 %v1341
      %v1653 = vpop.f32.mrf.mxu0
      %v1654 = vadd.f32 0.0, %v1653
      %1655 = vmatmul.f32.gmra.mxu0 %v1343
      %v1656 = vpop.f32.mrf.mxu0
      %v1657 = vadd.f32 0.0, %v1656
      %1658 = vmatmul.f32.gmra.mxu0 %v1345
      %v1659 = vpop.f32.mrf.mxu0
      %v1660 = vadd.f32 0.0, %v1659
      %1661 = vmatmul.f32.gmra.mxu0 %v1347
      %v1662 = vpop.f32.mrf.mxu0
      %v1663 = vadd.f32 0.0, %v1662
      %1664 = vmatmul.f32.gmra.mxu0 %v1349
      %v1665 = vpop.f32.mrf.mxu0
      %v1666 = vadd.f32 0.0, %v1665
      %1667 = vmatmul.f32.gmra.mxu0 %v1351
      %v1668 = vpop.f32.mrf.mxu0
      %v1669 = vadd.f32 0.0, %v1668
      %1670 = vmatmul.f32.gmra.mxu0 %v1353
      %v1671 = vpop.f32.mrf.mxu0
      %v1672 = vadd.f32 0.0, %v1671
      %1673 = vmatmul.f32.gmra.mxu0 %v1355
      %v1674 = vpop.f32.mrf.mxu0
      %v1675 = vadd.f32 0.0, %v1674
      %1676 = vmatmul.f32.gmra.mxu0 %v1357
      %v1677 = vpop.f32.mrf.mxu0
      %v1678 = vadd.f32 0.0, %v1677
      %1679 = vmatmul.f32.gmra.mxu0 %v1359
      %v1680 = vpop.f32.mrf.mxu0
      %v1681 = vadd.f32 0.0, %v1680
      %1682 = vmatmul.f32.gmra.mxu0 %v1361
      %v1683 = vpop.f32.mrf.mxu0
      %v1684 = vadd.f32 0.0, %v1683
      %1685 = vmatmul.f32.gmra.mxu0 %v1363
      %v1686 = vpop.f32.mrf.mxu0
      %v1687 = vadd.f32 0.0, %v1686
      %1688 = vmatmul.f32.gmra.mxu0 %v1365
      %v1689 = vpop.f32.mrf.mxu0
      %v1690 = vadd.f32 0.0, %v1689
      %1691 = vmatmul.f32.gmra.mxu0 %v1367
      %v1692 = vpop.f32.mrf.mxu0
      %v1693 = vadd.f32 0.0, %v1692
      %1694 = vmatmul.f32.gmra.mxu0 %v1369
      %v1695 = vpop.f32.mrf.mxu0
      %v1696 = vadd.f32 0.0, %v1695
      %1697 = vmatmul.f32.gmra.mxu0 %v1371
      %v1698 = vpop.f32.mrf.mxu0
      %v1699 = vadd.f32 0.0, %v1698
      %1700 = vmatmul.f32.gmra.mxu0 %v1373
      %v1701 = vpop.f32.mrf.mxu0
      %v1702 = vadd.f32 0.0, %v1701
      %1703 = vmatmul.f32.gmra.mxu0 %v1375
      %v1704 = vpop.f32.mrf.mxu0
      %v1705 = vadd.f32 0.0, %v1704
      %1706 = vmatmul.f32.gmra.mxu0 %v1377
      %v1707 = vpop.f32.mrf.mxu0
      %v1708 = vadd.f32 0.0, %v1707
      %1709 = vmatmul.f32.gmra.mxu0 %v1379
      %v1710 = vpop.f32.mrf.mxu0
      %v1711 = vadd.f32 0.0, %v1710
      %1712 = vmatmul.f32.gmra.mxu0 %v1381
      %v1713 = vpop.f32.mrf.mxu0
      %v1714 = vadd.f32 0.0, %v1713
      %1715 = vmatmul.f32.gmra.mxu0 %v1383
      %v1716 = vpop.f32.mrf.mxu0
      %v1717 = vadd.f32 0.0, %v1716
      %1718 = vmatmul.f32.gmra.mxu0 %v1385
      %v1719 = vpop.f32.mrf.mxu0
      %v1720 = vadd.f32 0.0, %v1719
      %1721 = vmatmul.f32.gmra.mxu0 %v1387
      %v1722 = vpop.f32.mrf.mxu0
      %v1723 = vadd.f32 0.0, %v1722
      %1724 = vmatmul.f32.gmra.mxu0 %v1389
      %v1725 = vpop.f32.mrf.mxu0
      %v1726 = vadd.f32 0.0, %v1725
      %1727 = vmatmul.f32.gmra.mxu0 %v1391
      %v1728 = vpop.f32.mrf.mxu0
      %v1729 = vadd.f32 0.0, %v1728
      %1730 = vmatmul.f32.gmra.mxu0 %v1393
      %v1731 = vpop.f32.mrf.mxu0
      %v1732 = vadd.f32 0.0, %v1731
      %1733 = vmatmul.f32.gmra.mxu0 %v1395
      %v1734 = vpop.f32.mrf.mxu0
      %v1735 = vadd.f32 0.0, %v1734
      %1736 = vmatmul.f32.gmra.mxu0 %v1397
      %v1737 = vpop.f32.mrf.mxu0
      %v1738 = vadd.f32 0.0, %v1737
      %1739 = vmatmul.f32.gmra.mxu0 %v1631
      %v1740 = vpop.f32.mrf.mxu0
      %v1741 = vadd.f32 0.0, %v1740
      %1742 = vmatmul.f32.gmra.mxu0 %v1513
      %v1743 = vpop.f32.mrf.mxu0
      %v1744 = vadd.f32 0.0, %v1743
      %1745 = vdwg.mxu0
      %v1746 = vadd.f32 %v1533, %v1651
      %v1747 = vadd.f32 %v1536, %v1654
      %v1748 = vadd.f32 %v1539, %v1657
      %v1749 = vadd.f32 %v1542, %v1660
      %v1750 = vadd.f32 %v1545, %v1663
      %v1751 = vadd.f32 %v1548, %v1666
      %v1752 = vadd.f32 %v1551, %v1669
      %v1753 = vadd.f32 %v1554, %v1672
      %v1754 = vadd.f32 %v1557, %v1675
      %v1755 = vadd.f32 %v1560, %v1678
      %v1756 = vadd.f32 %v1563, %v1681
      %v1757 = vadd.f32 %v1566, %v1684
      %v1758 = vadd.f32 %v1569, %v1687
      %v1759 = vadd.f32 %v1572, %v1690
      %v1760 = vadd.f32 %v1575, %v1693
      %v1761 = vadd.f32 %v1578, %v1696
      %v1762 = vadd.f32 %v1581, %v1699
      %v1763 = vadd.f32 %v1584, %v1702
      %v1764 = vadd.f32 %v1587, %v1705
      %v1765 = vadd.f32 %v1590, %v1708
      %v1766 = vadd.f32 %v1593, %v1711
      %v1767 = vadd.f32 %v1596, %v1714
      %v1768 = vadd.f32 %v1599, %v1717
      %v1769 = vadd.f32 %v1602, %v1720
      %v1770 = vadd.f32 %v1605, %v1723
      %v1771 = vadd.f32 %v1608, %v1726
      %v1772 = vadd.f32 %v1611, %v1729
      %v1773 = vadd.f32 %v1614, %v1732
      %v1774 = vadd.f32 %v1617, %v1735
      %v1775 = vadd.f32 %v1620, %v1738
      %v1776 = vadd.f32 %v1623, %v1741
      %v1777 = vadd.f32 %v1626, %v1744
      %v1810 = vrot.slane %v1166, 7
      %v1811 = vrot.slane %v1167, 7
      %v1812 = vsel %vm1262, %v1810, %v1811
      %v1813 = vrot.slane %v1168, 7
      %v1814 = vsel %vm1262, %v1811, %v1813
      %v1815 = vrot.slane %v1169, 7
      %v1816 = vsel %vm1262, %v1813, %v1815
      %v1817 = vrot.slane %v1170, 7
      %v1818 = vsel %vm1262, %v1815, %v1817
      %v1819 = vrot.slane %v1171, 7
      %v1820 = vsel %vm1262, %v1817, %v1819
      %v1821 = vrot.slane %v1172, 7
      %v1822 = vsel %vm1262, %v1819, %v1821
      %v1823 = vrot.slane %v1173, 7
      %v1824 = vsel %vm1262, %v1821, %v1823
      %v1825 = vrot.slane %v1174, 7
      %v1826 = vsel %vm1262, %v1823, %v1825
      %v1827 = vrot.slane %v1175, 7
      %v1828 = vsel %vm1262, %v1825, %v1827
      %v1829 = vrot.slane %v1176, 7
      %v1830 = vsel %vm1262, %v1827, %v1829
      %v1831 = vrot.slane %v1177, 7
      %v1832 = vsel %vm1262, %v1829, %v1831
      %v1833 = vrot.slane %v1178, 7
      %v1834 = vsel %vm1262, %v1831, %v1833
      %v1835 = vrot.slane %v1179, 7
      %v1836 = vsel %vm1262, %v1833, %v1835
      %v1837 = vrot.slane %v1180, 7
      %v1838 = vsel %vm1262, %v1835, %v1837
      %v1839 = vrot.slane %v1181, 7
      %v1840 = vsel %vm1262, %v1837, %v1839
      %v1841 = vrot.slane %v1182, 7
      %v1842 = vsel %vm1262, %v1839, %v1841
      %v1843 = vrot.slane %v1183, 7
      %v1844 = vsel %vm1262, %v1841, %v1843
      %v1845 = vrot.slane %v1184, 7
      %v1846 = vsel %vm1262, %v1843, %v1845
      %v1847 = vrot.slane %v1185, 7
      %v1848 = vsel %vm1262, %v1845, %v1847
      %v1849 = vrot.slane %v1186, 7
      %v1850 = vsel %vm1262, %v1847, %v1849
      %v1851 = vrot.slane %v1187, 7
      %v1852 = vsel %vm1262, %v1849, %v1851
      %v1853 = vrot.slane %v1188, 7
      %v1854 = vsel %vm1262, %v1851, %v1853
      %v1855 = vrot.slane %v1189, 7
      %v1856 = vsel %vm1262, %v1853, %v1855
      %v1857 = vrot.slane %v1190, 7
      %v1858 = vsel %vm1262, %v1855, %v1857
      %v1859 = vrot.slane %v1191, 7
      %v1860 = vsel %vm1262, %v1857, %v1859
      %v1861 = vrot.slane %v1192, 7
      %v1862 = vsel %vm1262, %v1859, %v1861
      %v1863 = vrot.slane %v1193, 7
      %v1864 = vsel %vm1262, %v1861, %v1863
      %v1865 = vrot.slane %v1194, 7
      %v1866 = vsel %vm1262, %v1863, %v1865
      %v1867 = vrot.slane %v1195, 7
      %v1868 = vsel %vm1262, %v1865, %v1867
      %v1869 = vrot.slane %v1196, 7
      %v1870 = vsel %vm1262, %v1867, %v1869
      %v1871 = vrot.slane %v1197, 7
      %v1872 = vsel %vm1262, %v1869, %v1871
      %v1875 = vsel %vm1262, 0.0, %v1810
      %v1876 = vsel %vm1262, %v1871, 0.0
      %s1877 = scalar_lea.vmem %s3, 8
      %v1878 = vld [vmem:[%s1877] sm:$0xff]
      %vm1880 = vcmask 1046528
      %v1881 = vrot.slane 0.0, 1
      %v1882 = vsel %vm1880, %v1881, %v1881
      %v1883 = vrot.slane %v1875, 1
      %v1884 = vsel %vm1880, %v1881, %v1883
      %v1885 = vrot.slane %v1812, 1
      %v1886 = vsel %vm1880, %v1883, %v1885
      %v1887 = vrot.slane %v1814, 1
      %v1888 = vsel %vm1880, %v1885, %v1887
      %v1889 = vrot.slane %v1816, 1
      %v1890 = vsel %vm1880, %v1887, %v1889
      %v1891 = vrot.slane %v1818, 1
      %v1892 = vsel %vm1880, %v1889, %v1891
      %v1893 = vrot.slane %v1820, 1
      %v1894 = vsel %vm1880, %v1891, %v1893
      %v1895 = vrot.slane %v1822, 1
      %v1896 = vsel %vm1880, %v1893, %v1895
      %v1897 = vrot.slane %v1824, 1
      %v1898 = vsel %vm1880, %v1895, %v1897
      %v1899 = vrot.slane %v1826, 1
      %v1900 = vsel %vm1880, %v1897, %v1899
      %v1901 = vrot.slane %v1828, 1
      %v1902 = vsel %vm1880, %v1899, %v1901
      %v1903 = vrot.slane %v1830, 1
      %v1904 = vsel %vm1880, %v1901, %v1903
      %v1905 = vrot.slane %v1832, 1
      %v1906 = vsel %vm1880, %v1903, %v1905
      %v1907 = vrot.slane %v1834, 1
      %v1908 = vsel %vm1880, %v1905, %v1907
      %v1909 = vrot.slane %v1836, 1
      %v1910 = vsel %vm1880, %v1907, %v1909
      %v1911 = vrot.slane %v1838, 1
      %v1912 = vsel %vm1880, %v1909, %v1911
      %v1913 = vrot.slane %v1840, 1
      %v1914 = vsel %vm1880, %v1911, %v1913
      %v1915 = vrot.slane %v1842, 1
      %v1916 = vsel %vm1880, %v1913, %v1915
      %v1917 = vrot.slane %v1844, 1
      %v1918 = vsel %vm1880, %v1915, %v1917
      %v1919 = vrot.slane %v1846, 1
      %v1920 = vsel %vm1880, %v1917, %v1919
      %v1921 = vrot.slane %v1848, 1
      %v1922 = vsel %vm1880, %v1919, %v1921
      %v1923 = vrot.slane %v1850, 1
      %v1924 = vsel %vm1880, %v1921, %v1923
      %v1925 = vrot.slane %v1852, 1
      %v1926 = vsel %vm1880, %v1923, %v1925
      %v1927 = vrot.slane %v1854, 1
      %v1928 = vsel %vm1880, %v1925, %v1927
      %v1929 = vrot.slane %v1856, 1
      %v1930 = vsel %vm1880, %v1927, %v1929
      %v1931 = vrot.slane %v1858, 1
      %v1932 = vsel %vm1880, %v1929, %v1931
      %v1933 = vrot.slane %v1860, 1
      %v1934 = vsel %vm1880, %v1931, %v1933
      %v1935 = vrot.slane %v1862, 1
      %v1936 = vsel %vm1880, %v1933, %v1935
      %v1937 = vrot.slane %v1864, 1
      %v1938 = vsel %vm1880, %v1935, %v1937
      %v1939 = vrot.slane %v1866, 1
      %v1940 = vsel %vm1880, %v1937, %v1939
      %v1941 = vrot.slane %v1868, 1
      %v1942 = vsel %vm1880, %v1939, %v1941
      %v1943 = vrot.slane %v1870, 1
      %v1944 = vsel %vm1880, %v1941, %v1943
      %v1945 = vsel %vm1333, %v1882, 0
      %v1947 = vsel %vm1333, %v1884, 0
      %v1949 = vsel %vm1333, %v1886, 0
      %v1951 = vsel %vm1333, %v1888, 0
      %v1953 = vsel %vm1333, %v1890, 0
      %v1955 = vsel %vm1333, %v1892, 0
      %v1957 = vsel %vm1333, %v1894, 0
      %v1959 = vsel %vm1333, %v1896, 0
      %v1961 = vsel %vm1333, %v1898, 0
      %v1963 = vsel %vm1333, %v1900, 0
      %v1965 = vsel %vm1333, %v1902, 0
      %v1967 = vsel %vm1333, %v1904, 0
      %v1969 = vsel %vm1333, %v1906, 0
      %v1971 = vsel %vm1333, %v1908, 0
      %v1973 = vsel %vm1333, %v1910, 0
      %v1975 = vsel %vm1333, %v1912, 0
      %v1977 = vsel %vm1333, %v1914, 0
      %v1979 = vsel %vm1333, %v1916, 0
      %v1981 = vsel %vm1333, %v1918, 0
      %v1983 = vsel %vm1333, %v1920, 0
      %v1985 = vsel %vm1333, %v1922, 0
      %v1987 = vsel %vm1333, %v1924, 0
      %v1989 = vsel %vm1333, %v1926, 0
      %v1991 = vsel %vm1333, %v1928, 0
      %v1993 = vsel %vm1333, %v1930, 0
      %v1995 = vsel %vm1333, %v1932, 0
      %v1997 = vsel %vm1333, %v1934, 0
      %v1999 = vsel %vm1333, %v1936, 0
      %v2001 = vsel %vm1333, %v1938, 0
      %v2003 = vsel %vm1333, %v1940, 0
      %v2005 = vsel %vm1333, %v1942, 0
      %v2007 = vsel %vm1333, %v1944, 0
      %2009 = vmatpush.msra.mxu0 0.0
      %2010 = vmatpush.msra.mxu0 0.0
      %2011 = vmatpush.msra.mxu0 0.0
      %2012 = vmatpush.msra.mxu0 0.0
      %2013 = vmatpush.msra.mxu0 0.0
      %2014 = vmatpush.msra.mxu0 0.0
      %2015 = vmatpush.msra.mxu0 0.0
      %2016 = vmatpush.msra.mxu0 0.0
      %2017 = vmatpush.msra.mxu0 0.0
      %2018 = vmatpush.msra.mxu0 0.0
      %2019 = vmatpush.msra.mxu0 0.0
      %2020 = vmatpush.msra.mxu0 0.0
      %2021 = vmatpush.msra.mxu0 0.0
      %2022 = vmatpush.msra.mxu0 0.0
      %2023 = vmatpush.msra.mxu0 0.0
      %2024 = vmatpush.msra.mxu0 %v1878
      %2025 = vmatmul.f32.gmra.mxu0 %v1945
      %v2026 = vpop.f32.mrf.mxu0
      %v2027 = vadd.f32 0.0, %v2026
      %2028 = vmatmul.f32.gmra.mxu0 %v1947
      %v2029 = vpop.f32.mrf.mxu0
      %v2030 = vadd.f32 0.0, %v2029
      %2031 = vmatmul.f32.gmra.mxu0 %v1949
      %v2032 = vpop.f32.mrf.mxu0
      %v2033 = vadd.f32 0.0, %v2032
      %2034 = vmatmul.f32.gmra.mxu0 %v1951
      %v2035 = vpop.f32.mrf.mxu0
      %v2036 = vadd.f32 0.0, %v2035
      %2037 = vmatmul.f32.gmra.mxu0 %v1953
      %v2038 = vpop.f32.mrf.mxu0
      %v2039 = vadd.f32 0.0, %v2038
      %2040 = vmatmul.f32.gmra.mxu0 %v1955
      %v2041 = vpop.f32.mrf.mxu0
      %v2042 = vadd.f32 0.0, %v2041
      %2043 = vmatmul.f32.gmra.mxu0 %v1957
      %v2044 = vpop.f32.mrf.mxu0
      %v2045 = vadd.f32 0.0, %v2044
      %2046 = vmatmul.f32.gmra.mxu0 %v1959
      %v2047 = vpop.f32.mrf.mxu0
      %v2048 = vadd.f32 0.0, %v2047
      %2049 = vmatmul.f32.gmra.mxu0 %v1961
      %v2050 = vpop.f32.mrf.mxu0
      %v2051 = vadd.f32 0.0, %v2050
      %2052 = vmatmul.f32.gmra.mxu0 %v1963
      %v2053 = vpop.f32.mrf.mxu0
      %v2054 = vadd.f32 0.0, %v2053
      %2055 = vmatmul.f32.gmra.mxu0 %v1965
      %v2056 = vpop.f32.mrf.mxu0
      %v2057 = vadd.f32 0.0, %v2056
      %2058 = vmatmul.f32.gmra.mxu0 %v1967
      %v2059 = vpop.f32.mrf.mxu0
      %v2060 = vadd.f32 0.0, %v2059
      %2061 = vmatmul.f32.gmra.mxu0 %v1969
      %v2062 = vpop.f32.mrf.mxu0
      %v2063 = vadd.f32 0.0, %v2062
      %2064 = vmatmul.f32.gmra.mxu0 %v1971
      %v2065 = vpop.f32.mrf.mxu0
      %v2066 = vadd.f32 0.0, %v2065
      %2067 = vmatmul.f32.gmra.mxu0 %v1973
      %v2068 = vpop.f32.mrf.mxu0
      %v2069 = vadd.f32 0.0, %v2068
      %2070 = vmatmul.f32.gmra.mxu0 %v1975
      %v2071 = vpop.f32.mrf.mxu0
      %v2072 = vadd.f32 0.0, %v2071
      %2073 = vmatmul.f32.gmra.mxu0 %v1977
      %v2074 = vpop.f32.mrf.mxu0
      %v2075 = vadd.f32 0.0, %v2074
      %2076 = vmatmul.f32.gmra.mxu0 %v1979
      %v2077 = vpop.f32.mrf.mxu0
      %v2078 = vadd.f32 0.0, %v2077
      %2079 = vmatmul.f32.gmra.mxu0 %v1981
      %v2080 = vpop.f32.mrf.mxu0
      %v2081 = vadd.f32 0.0, %v2080
      %2082 = vmatmul.f32.gmra.mxu0 %v1983
      %v2083 = vpop.f32.mrf.mxu0
      %v2084 = vadd.f32 0.0, %v2083
      %2085 = vmatmul.f32.gmra.mxu0 %v1985
      %v2086 = vpop.f32.mrf.mxu0
      %v2087 = vadd.f32 0.0, %v2086
      %2088 = vmatmul.f32.gmra.mxu0 %v1987
      %v2089 = vpop.f32.mrf.mxu0
      %v2090 = vadd.f32 0.0, %v2089
      %2091 = vmatmul.f32.gmra.mxu0 %v1989
      %v2092 = vpop.f32.mrf.mxu0
      %v2093 = vadd.f32 0.0, %v2092
      %2094 = vmatmul.f32.gmra.mxu0 %v1991
      %v2095 = vpop.f32.mrf.mxu0
      %v2096 = vadd.f32 0.0, %v2095
      %2097 = vmatmul.f32.gmra.mxu0 %v1993
      %v2098 = vpop.f32.mrf.mxu0
      %v2099 = vadd.f32 0.0, %v2098
      %2100 = vmatmul.f32.gmra.mxu0 %v1995
      %v2101 = vpop.f32.mrf.mxu0
      %v2102 = vadd.f32 0.0, %v2101
      %2103 = vmatmul.f32.gmra.mxu0 %v1997
      %v2104 = vpop.f32.mrf.mxu0
      %v2105 = vadd.f32 0.0, %v2104
      %2106 = vmatmul.f32.gmra.mxu0 %v1999
      %v2107 = vpop.f32.mrf.mxu0
      %v2108 = vadd.f32 0.0, %v2107
      %2109 = vmatmul.f32.gmra.mxu0 %v2001
      %v2110 = vpop.f32.mrf.mxu0
      %v2111 = vadd.f32 0.0, %v2110
      %2112 = vmatmul.f32.gmra.mxu0 %v2003
      %v2113 = vpop.f32.mrf.mxu0
      %v2114 = vadd.f32 0.0, %v2113
      %2115 = vmatmul.f32.gmra.mxu0 %v2005
      %v2116 = vpop.f32.mrf.mxu0
      %v2117 = vadd.f32 0.0, %v2116
      %2118 = vmatmul.f32.gmra.mxu0 %v2007
      %v2119 = vpop.f32.mrf.mxu0
      %v2120 = vadd.f32 0.0, %v2119
      %2121 = vdwg.mxu0
      %v2122 = vadd.f32 %v1746, %v2027
      %v2123 = vadd.f32 %v1747, %v2030
      %v2124 = vadd.f32 %v1748, %v2033
      %v2125 = vadd.f32 %v1749, %v2036
      %v2126 = vadd.f32 %v1750, %v2039
      %v2127 = vadd.f32 %v1751, %v2042
      %v2128 = vadd.f32 %v1752, %v2045
      %v2129 = vadd.f32 %v1753, %v2048
      %v2130 = vadd.f32 %v1754, %v2051
      %v2131 = vadd.f32 %v1755, %v2054
      %v2132 = vadd.f32 %v1756, %v2057
      %v2133 = vadd.f32 %v1757, %v2060
      %v2134 = vadd.f32 %v1758, %v2063
      %v2135 = vadd.f32 %v1759, %v2066
      %v2136 = vadd.f32 %v1760, %v2069
      %v2137 = vadd.f32 %v1761, %v2072
      %v2138 = vadd.f32 %v1762, %v2075
      %v2139 = vadd.f32 %v1763, %v2078
      %v2140 = vadd.f32 %v1764, %v2081
      %v2141 = vadd.f32 %v1765, %v2084
      %v2142 = vadd.f32 %v1766, %v2087
      %v2143 = vadd.f32 %v1767, %v2090
      %v2144 = vadd.f32 %v1768, %v2093
      %v2145 = vadd.f32 %v1769, %v2096
      %v2146 = vadd.f32 %v1770, %v2099
      %v2147 = vadd.f32 %v1771, %v2102
      %v2148 = vadd.f32 %v1772, %v2105
      %v2149 = vadd.f32 %v1773, %v2108
      %v2150 = vadd.f32 %v1774, %v2111
      %v2151 = vadd.f32 %v1775, %v2114
      %v2152 = vadd.f32 %v1776, %v2117
      %v2153 = vadd.f32 %v1777, %v2120
      %s2154 = scalar_lea.vmem %s3, 32
      %v2155 = vld [vmem:[%s2154] sm:$0xff]
      %v2157 = vrot.slane %v1872, 1
      %v2158 = vsel %vm1880, %v1943, %v2157
      %v2159 = vrot.slane %v1876, 1
      %v2160 = vsel %vm1880, %v2157, %v2159
      %v2161 = vsel %vm1333, %v2158, 0
      %v2163 = vsel %vm1333, %v2160, 0
      %2165 = vmatpush.msra.mxu0 0.0
      %2166 = vmatpush.msra.mxu0 0.0
      %2167 = vmatpush.msra.mxu0 0.0
      %2168 = vmatpush.msra.mxu0 0.0
      %2169 = vmatpush.msra.mxu0 0.0
      %2170 = vmatpush.msra.mxu0 0.0
      %2171 = vmatpush.msra.mxu0 0.0
      %2172 = vmatpush.msra.mxu0 0.0
      %2173 = vmatpush.msra.mxu0 0.0
      %2174 = vmatpush.msra.mxu0 0.0
      %2175 = vmatpush.msra.mxu0 0.0
      %2176 = vmatpush.msra.mxu0 0.0
      %2177 = vmatpush.msra.mxu0 0.0
      %2178 = vmatpush.msra.mxu0 0.0
      %2179 = vmatpush.msra.mxu0 0.0
      %2180 = vmatpush.msra.mxu0 %v2155
      %2181 = vmatmul.f32.gmra.mxu0 %v1949
      %v2182 = vpop.f32.mrf.mxu0
      %v2183 = vadd.f32 0.0, %v2182
      %2184 = vmatmul.f32.gmra.mxu0 %v1951
      %v2185 = vpop.f32.mrf.mxu0
      %v2186 = vadd.f32 0.0, %v2185
      %2187 = vmatmul.f32.gmra.mxu0 %v1953
      %v2188 = vpop.f32.mrf.mxu0
      %v2189 = vadd.f32 0.0, %v2188
      %2190 = vmatmul.f32.gmra.mxu0 %v1955
      %v2191 = vpop.f32.mrf.mxu0
      %v2192 = vadd.f32 0.0, %v2191
      %2193 = vmatmul.f32.gmra.mxu0 %v1957
      %v2194 = vpop.f32.mrf.mxu0
      %v2195 = vadd.f32 0.0, %v2194
      %2196 = vmatmul.f32.gmra.mxu0 %v1959
      %v2197 = vpop.f32.mrf.mxu0
      %v2198 = vadd.f32 0.0, %v2197
      %2199 = vmatmul.f32.gmra.mxu0 %v1961
      %v2200 = vpop.f32.mrf.mxu0
      %v2201 = vadd.f32 0.0, %v2200
      %2202 = vmatmul.f32.gmra.mxu0 %v1963
      %v2203 = vpop.f32.mrf.mxu0
      %v2204 = vadd.f32 0.0, %v2203
      %2205 = vmatmul.f32.gmra.mxu0 %v1965
      %v2206 = vpop.f32.mrf.mxu0
      %v2207 = vadd.f32 0.0, %v2206
      %2208 = vmatmul.f32.gmra.mxu0 %v1967
      %v2209 = vpop.f32.mrf.mxu0
      %v2210 = vadd.f32 0.0, %v2209
      %2211 = vmatmul.f32.gmra.mxu0 %v1969
      %v2212 = vpop.f32.mrf.mxu0
      %v2213 = vadd.f32 0.0, %v2212
      %2214 = vmatmul.f32.gmra.mxu0 %v1971
      %v2215 = vpop.f32.mrf.mxu0
      %v2216 = vadd.f32 0.0, %v2215
      %2217 = vmatmul.f32.gmra.mxu0 %v1973
      %v2218 = vpop.f32.mrf.mxu0
      %v2219 = vadd.f32 0.0, %v2218
      %2220 = vmatmul.f32.gmra.mxu0 %v1975
      %v2221 = vpop.f32.mrf.mxu0
      %v2222 = vadd.f32 0.0, %v2221
      %2223 = vmatmul.f32.gmra.mxu0 %v1977
      %v2224 = vpop.f32.mrf.mxu0
      %v2225 = vadd.f32 0.0, %v2224
      %2226 = vmatmul.f32.gmra.mxu0 %v1979
      %v2227 = vpop.f32.mrf.mxu0
      %v2228 = vadd.f32 0.0, %v2227
      %2229 = vmatmul.f32.gmra.mxu0 %v1981
      %v2230 = vpop.f32.mrf.mxu0
      %v2231 = vadd.f32 0.0, %v2230
      %2232 = vmatmul.f32.gmra.mxu0 %v1983
      %v2233 = vpop.f32.mrf.mxu0
      %v2234 = vadd.f32 0.0, %v2233
      %2235 = vmatmul.f32.gmra.mxu0 %v1985
      %v2236 = vpop.f32.mrf.mxu0
      %v2237 = vadd.f32 0.0, %v2236
      %2238 = vmatmul.f32.gmra.mxu0 %v1987
      %v2239 = vpop.f32.mrf.mxu0
      %v2240 = vadd.f32 0.0, %v2239
      %2241 = vmatmul.f32.gmra.mxu0 %v1989
      %v2242 = vpop.f32.mrf.mxu0
      %v2243 = vadd.f32 0.0, %v2242
      %2244 = vmatmul.f32.gmra.mxu0 %v1991
      %v2245 = vpop.f32.mrf.mxu0
      %v2246 = vadd.f32 0.0, %v2245
      %2247 = vmatmul.f32.gmra.mxu0 %v1993
      %v2248 = vpop.f32.mrf.mxu0
      %v2249 = vadd.f32 0.0, %v2248
      %2250 = vmatmul.f32.gmra.mxu0 %v1995
      %v2251 = vpop.f32.mrf.mxu0
      %v2252 = vadd.f32 0.0, %v2251
      %2253 = vmatmul.f32.gmra.mxu0 %v1997
      %v2254 = vpop.f32.mrf.mxu0
      %v2255 = vadd.f32 0.0, %v2254
      %2256 = vmatmul.f32.gmra.mxu0 %v1999
      %v2257 = vpop.f32.mrf.mxu0
      %v2258 = vadd.f32 0.0, %v2257
      %2259 = vmatmul.f32.gmra.mxu0 %v2001
      %v2260 = vpop.f32.mrf.mxu0
      %v2261 = vadd.f32 0.0, %v2260
      %2262 = vmatmul.f32.gmra.mxu0 %v2003
      %v2263 = vpop.f32.mrf.mxu0
      %v2264 = vadd.f32 0.0, %v2263
      %2265 = vmatmul.f32.gmra.mxu0 %v2005
      %v2266 = vpop.f32.mrf.mxu0
      %v2267 = vadd.f32 0.0, %v2266
      %2268 = vmatmul.f32.gmra.mxu0 %v2007
      %v2269 = vpop.f32.mrf.mxu0
      %v2270 = vadd.f32 0.0, %v2269
      %2271 = vmatmul.f32.gmra.mxu0 %v2161
      %v2272 = vpop.f32.mrf.mxu0
      %v2273 = vadd.f32 0.0, %v2272
      %2274 = vmatmul.f32.gmra.mxu0 %v2163
      %v2275 = vpop.f32.mrf.mxu0
      %v2276 = vadd.f32 0.0, %v2275
      %2277 = vdwg.mxu0
      %v2278 = vadd.f32 %v2122, %v2183
      %v2279 = vadd.f32 %v2123, %v2186
      %v2280 = vadd.f32 %v2124, %v2189
      %v2281 = vadd.f32 %v2125, %v2192
      %v2282 = vadd.f32 %v2126, %v2195
      %v2283 = vadd.f32 %v2127, %v2198
      %v2284 = vadd.f32 %v2128, %v2201
      %v2285 = vadd.f32 %v2129, %v2204
      %v2286 = vadd.f32 %v2130, %v2207
      %v2287 = vadd.f32 %v2131, %v2210
      %v2288 = vadd.f32 %v2132, %v2213
      %v2289 = vadd.f32 %v2133, %v2216
      %v2290 = vadd.f32 %v2134, %v2219
      %v2291 = vadd.f32 %v2135, %v2222
      %v2292 = vadd.f32 %v2136, %v2225
      %v2293 = vadd.f32 %v2137, %v2228
      %v2294 = vadd.f32 %v2138, %v2231
      %v2295 = vadd.f32 %v2139, %v2234
      %v2296 = vadd.f32 %v2140, %v2237
      %v2297 = vadd.f32 %v2141, %v2240
      %v2298 = vadd.f32 %v2142, %v2243
      %v2299 = vadd.f32 %v2143, %v2246
      %v2300 = vadd.f32 %v2144, %v2249
      %v2301 = vadd.f32 %v2145, %v2252
      %v2302 = vadd.f32 %v2146, %v2255
      %v2303 = vadd.f32 %v2147, %v2258
      %v2304 = vadd.f32 %v2148, %v2261
      %v2305 = vadd.f32 %v2149, %v2264
      %v2306 = vadd.f32 %v2150, %v2267
      %v2307 = vadd.f32 %v2151, %v2270
      %v2308 = vadd.f32 %v2152, %v2273
      %v2309 = vadd.f32 %v2153, %v2276
      %s2310 = scalar_lea.vmem %s3, 56
      %v2311 = vld [vmem:[%s2310] sm:$0xff]
      %v2312 = vsel %vm1880, %v2159, %v1881
      %v2313 = vsel %vm1333, %v2312, 0
      %2315 = vmatpush.msra.mxu0 0.0
      %2316 = vmatpush.msra.mxu0 0.0
      %2317 = vmatpush.msra.mxu0 0.0
      %2318 = vmatpush.msra.mxu0 0.0
      %2319 = vmatpush.msra.mxu0 0.0
      %2320 = vmatpush.msra.mxu0 0.0
      %2321 = vmatpush.msra.mxu0 0.0
      %2322 = vmatpush.msra.mxu0 0.0
      %2323 = vmatpush.msra.mxu0 0.0
      %2324 = vmatpush.msra.mxu0 0.0
      %2325 = vmatpush.msra.mxu0 0.0
      %2326 = vmatpush.msra.mxu0 0.0
      %2327 = vmatpush.msra.mxu0 0.0
      %2328 = vmatpush.msra.mxu0 0.0
      %2329 = vmatpush.msra.mxu0 0.0
      %2330 = vmatpush.msra.mxu0 %v2311
      %2331 = vmatmul.f32.gmra.mxu0 %v1953
      %v2332 = vpop.f32.mrf.mxu0
      %v2333 = vadd.f32 0.0, %v2332
      %2334 = vmatmul.f32.gmra.mxu0 %v1955
      %v2335 = vpop.f32.mrf.mxu0
      %v2336 = vadd.f32 0.0, %v2335
      %2337 = vmatmul.f32.gmra.mxu0 %v1957
      %v2338 = vpop.f32.mrf.mxu0
      %v2339 = vadd.f32 0.0, %v2338
      %2340 = vmatmul.f32.gmra.mxu0 %v1959
      %v2341 = vpop.f32.mrf.mxu0
      %v2342 = vadd.f32 0.0, %v2341
      %2343 = vmatmul.f32.gmra.mxu0 %v1961
      %v2344 = vpop.f32.mrf.mxu0
      %v2345 = vadd.f32 0.0, %v2344
      %2346 = vmatmul.f32.gmra.mxu0 %v1963
      %v2347 = vpop.f32.mrf.mxu0
      %v2348 = vadd.f32 0.0, %v2347
      %2349 = vmatmul.f32.gmra.mxu0 %v1965
      %v2350 = vpop.f32.mrf.mxu0
      %v2351 = vadd.f32 0.0, %v2350
      %2352 = vmatmul.f32.gmra.mxu0 %v1967
      %v2353 = vpop.f32.mrf.mxu0
      %v2354 = vadd.f32 0.0, %v2353
      %2355 = vmatmul.f32.gmra.mxu0 %v1969
      %v2356 = vpop.f32.mrf.mxu0
      %v2357 = vadd.f32 0.0, %v2356
      %2358 = vmatmul.f32.gmra.mxu0 %v1971
      %v2359 = vpop.f32.mrf.mxu0
      %v2360 = vadd.f32 0.0, %v2359
      %2361 = vmatmul.f32.gmra.mxu0 %v1973
      %v2362 = vpop.f32.mrf.mxu0
      %v2363 = vadd.f32 0.0, %v2362
      %2364 = vmatmul.f32.gmra.mxu0 %v1975
      %v2365 = vpop.f32.mrf.mxu0
      %v2366 = vadd.f32 0.0, %v2365
      %2367 = vmatmul.f32.gmra.mxu0 %v1977
      %v2368 = vpop.f32.mrf.mxu0
      %v2369 = vadd.f32 0.0, %v2368
      %2370 = vmatmul.f32.gmra.mxu0 %v1979
      %v2371 = vpop.f32.mrf.mxu0
      %v2372 = vadd.f32 0.0, %v2371
      %2373 = vmatmul.f32.gmra.mxu0 %v1981
      %v2374 = vpop.f32.mrf.mxu0
      %v2375 = vadd.f32 0.0, %v2374
      %2376 = vmatmul.f32.gmra.mxu0 %v1983
      %v2377 = vpop.f32.mrf.mxu0
      %v2378 = vadd.f32 0.0, %v2377
      %2379 = vmatmul.f32.gmra.mxu0 %v1985
      %v2380 = vpop.f32.mrf.mxu0
      %v2381 = vadd.f32 0.0, %v2380
      %2382 = vmatmul.f32.gmra.mxu0 %v1987
      %v2383 = vpop.f32.mrf.mxu0
      %v2384 = vadd.f32 0.0, %v2383
      %2385 = vmatmul.f32.gmra.mxu0 %v1989
      %v2386 = vpop.f32.mrf.mxu0
      %v2387 = vadd.f32 0.0, %v2386
      %2388 = vmatmul.f32.gmra.mxu0 %v1991
      %v2389 = vpop.f32.mrf.mxu0
      %v2390 = vadd.f32 0.0, %v2389
      %2391 = vmatmul.f32.gmra.mxu0 %v1993
      %v2392 = vpop.f32.mrf.mxu0
      %v2393 = vadd.f32 0.0, %v2392
      %2394 = vmatmul.f32.gmra.mxu0 %v1995
      %v2395 = vpop.f32.mrf.mxu0
      %v2396 = vadd.f32 0.0, %v2395
      %2397 = vmatmul.f32.gmra.mxu0 %v1997
      %v2398 = vpop.f32.mrf.mxu0
      %v2399 = vadd.f32 0.0, %v2398
      %2400 = vmatmul.f32.gmra.mxu0 %v1999
      %v2401 = vpop.f32.mrf.mxu0
      %v2402 = vadd.f32 0.0, %v2401
      %2403 = vmatmul.f32.gmra.mxu0 %v2001
      %v2404 = vpop.f32.mrf.mxu0
      %v2405 = vadd.f32 0.0, %v2404
      %2406 = vmatmul.f32.gmra.mxu0 %v2003
      %v2407 = vpop.f32.mrf.mxu0
      %v2408 = vadd.f32 0.0, %v2407
      %2409 = vmatmul.f32.gmra.mxu0 %v2005
      %v2410 = vpop.f32.mrf.mxu0
      %v2411 = vadd.f32 0.0, %v2410
      %2412 = vmatmul.f32.gmra.mxu0 %v2007
      %v2413 = vpop.f32.mrf.mxu0
      %v2414 = vadd.f32 0.0, %v2413
      %2415 = vmatmul.f32.gmra.mxu0 %v2161
      %v2416 = vpop.f32.mrf.mxu0
      %v2417 = vadd.f32 0.0, %v2416
      %2418 = vmatmul.f32.gmra.mxu0 %v2163
      %v2419 = vpop.f32.mrf.mxu0
      %v2420 = vadd.f32 0.0, %v2419
      %2421 = vmatmul.f32.gmra.mxu0 %v2313
      %v2422 = vpop.f32.mrf.mxu0
      %v2423 = vadd.f32 0.0, %v2422
      %2424 = vmatmul.f32.gmra.mxu0 %v1945
      %v2425 = vpop.f32.mrf.mxu0
      %v2426 = vadd.f32 0.0, %v2425
      %2427 = vdwg.mxu0
      %v2428 = vadd.f32 %v2278, %v2333
      %v2429 = vadd.f32 %v2279, %v2336
      %v2430 = vadd.f32 %v2280, %v2339
      %v2431 = vadd.f32 %v2281, %v2342
      %v2432 = vadd.f32 %v2282, %v2345
      %v2433 = vadd.f32 %v2283, %v2348
      %v2434 = vadd.f32 %v2284, %v2351
      %v2435 = vadd.f32 %v2285, %v2354
      %v2436 = vadd.f32 %v2286, %v2357
      %v2437 = vadd.f32 %v2287, %v2360
      %v2438 = vadd.f32 %v2288, %v2363
      %v2439 = vadd.f32 %v2289, %v2366
      %v2440 = vadd.f32 %v2290, %v2369
      %v2441 = vadd.f32 %v2291, %v2372
      %v2442 = vadd.f32 %v2292, %v2375
      %v2443 = vadd.f32 %v2293, %v2378
      %v2444 = vadd.f32 %v2294, %v2381
      %v2445 = vadd.f32 %v2295, %v2384
      %v2446 = vadd.f32 %v2296, %v2387
      %v2447 = vadd.f32 %v2297, %v2390
      %v2448 = vadd.f32 %v2298, %v2393
      %v2449 = vadd.f32 %v2299, %v2396
      %v2450 = vadd.f32 %v2300, %v2399
      %v2451 = vadd.f32 %v2301, %v2402
      %v2452 = vadd.f32 %v2302, %v2405
      %v2453 = vadd.f32 %v2303, %v2408
      %v2454 = vadd.f32 %v2304, %v2411
      %v2455 = vadd.f32 %v2305, %v2414
      %v2456 = vadd.f32 %v2306, %v2417
      %v2457 = vadd.f32 %v2307, %v2420
      %v2458 = vadd.f32 %v2308, %v2423
      %v2459 = vadd.f32 %v2309, %v2426
      %v2460 = vmul.f32 %v1166, %v883
      %v2461 = vmul.f32 %v1167, %v884
      %v2462 = vmul.f32 %v1168, %v885
      %v2463 = vmul.f32 %v1169, %v886
      %v2464 = vmul.f32 %v1170, %v887
      %v2465 = vmul.f32 %v1171, %v888
      %v2466 = vmul.f32 %v1172, %v889
      %v2467 = vmul.f32 %v1173, %v890
      %v2468 = vmul.f32 %v1174, %v891
      %v2469 = vmul.f32 %v1175, %v892
      %v2470 = vmul.f32 %v1176, %v893
      %v2471 = vmul.f32 %v1177, %v894
      %v2472 = vmul.f32 %v1178, %v895
      %v2473 = vmul.f32 %v1179, %v896
      %v2474 = vmul.f32 %v1180, %v897
      %v2475 = vmul.f32 %v1181, %v898
      %v2476 = vmul.f32 %v1182, %v899
      %v2477 = vmul.f32 %v1183, %v900
      %v2478 = vmul.f32 %v1184, %v901
      %v2479 = vmul.f32 %v1185, %v902
      %v2480 = vmul.f32 %v1186, %v903
      %v2481 = vmul.f32 %v1187, %v904
      %v2482 = vmul.f32 %v1188, %v905
      %v2483 = vmul.f32 %v1189, %v906
      %v2484 = vmul.f32 %v1190, %v907
      %v2485 = vmul.f32 %v1191, %v908
      %v2486 = vmul.f32 %v1192, %v909
      %v2487 = vmul.f32 %v1193, %v910
      %v2488 = vmul.f32 %v1194, %v911
      %v2489 = vmul.f32 %v1195, %v912
      %v2490 = vmul.f32 %v1196, %v913
      %v2491 = vmul.f32 %v1197, %v914
      %v2524 = vrot.slane %v2460, 7
      %v2525 = vrot.slane %v2461, 7
      %v2526 = vsel %vm1262, %v2524, %v2525
      %v2527 = vrot.slane %v2462, 7
      %v2528 = vsel %vm1262, %v2525, %v2527
      %v2529 = vrot.slane %v2463, 7
      %v2530 = vsel %vm1262, %v2527, %v2529
      %v2531 = vrot.slane %v2464, 7
      %v2532 = vsel %vm1262, %v2529, %v2531
      %v2533 = vrot.slane %v2465, 7
      %v2534 = vsel %vm1262, %v2531, %v2533
      %v2535 = vrot.slane %v2466, 7
      %v2536 = vsel %vm1262, %v2533, %v2535
      %v2537 = vrot.slane %v2467, 7
      %v2538 = vsel %vm1262, %v2535, %v2537
      %v2539 = vrot.slane %v2468, 7
      %v2540 = vsel %vm1262, %v2537, %v2539
      %v2541 = vrot.slane %v2469, 7
      %v2542 = vsel %vm1262, %v2539, %v2541
      %v2543 = vrot.slane %v2470, 7
      %v2544 = vsel %vm1262, %v2541, %v2543
      %v2545 = vrot.slane %v2471, 7
      %v2546 = vsel %vm1262, %v2543, %v2545
      %v2547 = vrot.slane %v2472, 7
      %v2548 = vsel %vm1262, %v2545, %v2547
      %v2549 = vrot.slane %v2473, 7
      %v2550 = vsel %vm1262, %v2547, %v2549
      %v2551 = vrot.slane %v2474, 7
      %v2552 = vsel %vm1262, %v2549, %v2551
      %v2553 = vrot.slane %v2475, 7
      %v2554 = vsel %vm1262, %v2551, %v2553
      %v2555 = vrot.slane %v2476, 7
      %v2556 = vsel %vm1262, %v2553, %v2555
      %v2557 = vrot.slane %v2477, 7
      %v2558 = vsel %vm1262, %v2555, %v2557
      %v2559 = vrot.slane %v2478, 7
      %v2560 = vsel %vm1262, %v2557, %v2559
      %v2561 = vrot.slane %v2479, 7
      %v2562 = vsel %vm1262, %v2559, %v2561
      %v2563 = vrot.slane %v2480, 7
      %v2564 = vsel %vm1262, %v2561, %v2563
      %v2565 = vrot.slane %v2481, 7
      %v2566 = vsel %vm1262, %v2563, %v2565
      %v2567 = vrot.slane %v2482, 7
      %v2568 = vsel %vm1262, %v2565, %v2567
      %v2569 = vrot.slane %v2483, 7
      %v2570 = vsel %vm1262, %v2567, %v2569
      %v2571 = vrot.slane %v2484, 7
      %v2572 = vsel %vm1262, %v2569, %v2571
      %v2573 = vrot.slane %v2485, 7
      %v2574 = vsel %vm1262, %v2571, %v2573
      %v2575 = vrot.slane %v2486, 7
      %v2576 = vsel %vm1262, %v2573, %v2575
      %v2577 = vrot.slane %v2487, 7
      %v2578 = vsel %vm1262, %v2575, %v2577
      %v2579 = vrot.slane %v2488, 7
      %v2580 = vsel %vm1262, %v2577, %v2579
      %v2581 = vrot.slane %v2489, 7
      %v2582 = vsel %vm1262, %v2579, %v2581
      %v2583 = vrot.slane %v2490, 7
      %v2584 = vsel %vm1262, %v2581, %v2583
      %v2585 = vrot.slane %v2491, 7
      %v2586 = vsel %vm1262, %v2583, %v2585
      %v2589 = vsel %vm1262, 0.0, %v2524
      %v2590 = vsel %vm1262, %v2585, 0.0
      %s2591 = scalar_lea.vmem %s3, 16
      %v2592 = vld [vmem:[%s2591] sm:$0xff]
      %vm2594 = vcmask 1045504
      %v2595 = vrot.slane 0.0, 2
      %v2596 = vsel %vm2594, %v2595, %v2595
      %v2597 = vrot.slane %v2589, 2
      %v2598 = vsel %vm2594, %v2595, %v2597
      %v2599 = vrot.slane %v2526, 2
      %v2600 = vsel %vm2594, %v2597, %v2599
      %v2601 = vrot.slane %v2528, 2
      %v2602 = vsel %vm2594, %v2599, %v2601
      %v2603 = vrot.slane %v2530, 2
      %v2604 = vsel %vm2594, %v2601, %v2603
      %v2605 = vrot.slane %v2532, 2
      %v2606 = vsel %vm2594, %v2603, %v2605
      %v2607 = vrot.slane %v2534, 2
      %v2608 = vsel %vm2594, %v2605, %v2607
      %v2609 = vrot.slane %v2536, 2
      %v2610 = vsel %vm2594, %v2607, %v2609
      %v2611 = vrot.slane %v2538, 2
      %v2612 = vsel %vm2594, %v2609, %v2611
      %v2613 = vrot.slane %v2540, 2
      %v2614 = vsel %vm2594, %v2611, %v2613
      %v2615 = vrot.slane %v2542, 2
      %v2616 = vsel %vm2594, %v2613, %v2615
      %v2617 = vrot.slane %v2544, 2
      %v2618 = vsel %vm2594, %v2615, %v2617
      %v2619 = vrot.slane %v2546, 2
      %v2620 = vsel %vm2594, %v2617, %v2619
      %v2621 = vrot.slane %v2548, 2
      %v2622 = vsel %vm2594, %v2619, %v2621
      %v2623 = vrot.slane %v2550, 2
      %v2624 = vsel %vm2594, %v2621, %v2623
      %v2625 = vrot.slane %v2552, 2
      %v2626 = vsel %vm2594, %v2623, %v2625
      %v2627 = vrot.slane %v2554, 2
      %v2628 = vsel %vm2594, %v2625, %v2627
      %v2629 = vrot.slane %v2556, 2
      %v2630 = vsel %vm2594, %v2627, %v2629
      %v2631 = vrot.slane %v2558, 2
      %v2632 = vsel %vm2594, %v2629, %v2631
      %v2633 = vrot.slane %v2560, 2
      %v2634 = vsel %vm2594, %v2631, %v2633
      %v2635 = vrot.slane %v2562, 2
      %v2636 = vsel %vm2594, %v2633, %v2635
      %v2637 = vrot.slane %v2564, 2
      %v2638 = vsel %vm2594, %v2635, %v2637
      %v2639 = vrot.slane %v2566, 2
      %v2640 = vsel %vm2594, %v2637, %v2639
      %v2641 = vrot.slane %v2568, 2
      %v2642 = vsel %vm2594, %v2639, %v2641
      %v2643 = vrot.slane %v2570, 2
      %v2644 = vsel %vm2594, %v2641, %v2643
      %v2645 = vrot.slane %v2572, 2
      %v2646 = vsel %vm2594, %v2643, %v2645
      %v2647 = vrot.slane %v2574, 2
      %v2648 = vsel %vm2594, %v2645, %v2647
      %v2649 = vrot.slane %v2576, 2
      %v2650 = vsel %vm2594, %v2647, %v2649
      %v2651 = vrot.slane %v2578, 2
      %v2652 = vsel %vm2594, %v2649, %v2651
      %v2653 = vrot.slane %v2580, 2
      %v2654 = vsel %vm2594, %v2651, %v2653
      %v2655 = vrot.slane %v2582, 2
      %v2656 = vsel %vm2594, %v2653, %v2655
      %v2657 = vrot.slane %v2584, 2
      %v2658 = vsel %vm2594, %v2655, %v2657
      %v2659 = vsel %vm1333, %v2596, 0
      %v2661 = vsel %vm1333, %v2598, 0
      %v2663 = vsel %vm1333, %v2600, 0
      %v2665 = vsel %vm1333, %v2602, 0
      %v2667 = vsel %vm1333, %v2604, 0
      %v2669 = vsel %vm1333, %v2606, 0
      %v2671 = vsel %vm1333, %v2608, 0
      %v2673 = vsel %vm1333, %v2610, 0
      %v2675 = vsel %vm1333, %v2612, 0
      %v2677 = vsel %vm1333, %v2614, 0
      %v2679 = vsel %vm1333, %v2616, 0
      %v2681 = vsel %vm1333, %v2618, 0
      %v2683 = vsel %vm1333, %v2620, 0
      %v2685 = vsel %vm1333, %v2622, 0
      %v2687 = vsel %vm1333, %v2624, 0
      %v2689 = vsel %vm1333, %v2626, 0
      %v2691 = vsel %vm1333, %v2628, 0
      %v2693 = vsel %vm1333, %v2630, 0
      %v2695 = vsel %vm1333, %v2632, 0
      %v2697 = vsel %vm1333, %v2634, 0
      %v2699 = vsel %vm1333, %v2636, 0
      %v2701 = vsel %vm1333, %v2638, 0
      %v2703 = vsel %vm1333, %v2640, 0
      %v2705 = vsel %vm1333, %v2642, 0
      %v2707 = vsel %vm1333, %v2644, 0
      %v2709 = vsel %vm1333, %v2646, 0
      %v2711 = vsel %vm1333, %v2648, 0
      %v2713 = vsel %vm1333, %v2650, 0
      %v2715 = vsel %vm1333, %v2652, 0
      %v2717 = vsel %vm1333, %v2654, 0
      %v2719 = vsel %vm1333, %v2656, 0
      %v2721 = vsel %vm1333, %v2658, 0
      %2723 = vmatpush.msra.mxu0 0.0
      %2724 = vmatpush.msra.mxu0 0.0
      %2725 = vmatpush.msra.mxu0 0.0
      %2726 = vmatpush.msra.mxu0 0.0
      %2727 = vmatpush.msra.mxu0 0.0
      %2728 = vmatpush.msra.mxu0 0.0
      %2729 = vmatpush.msra.mxu0 0.0
      %2730 = vmatpush.msra.mxu0 0.0
      %2731 = vmatpush.msra.mxu0 0.0
      %2732 = vmatpush.msra.mxu0 0.0
      %2733 = vmatpush.msra.mxu0 0.0
      %2734 = vmatpush.msra.mxu0 0.0
      %2735 = vmatpush.msra.mxu0 0.0
      %2736 = vmatpush.msra.mxu0 0.0
      %2737 = vmatpush.msra.mxu0 0.0
      %2738 = vmatpush.msra.mxu0 %v2592
      %2739 = vmatmul.f32.gmra.mxu0 %v2659
      %v2740 = vpop.f32.mrf.mxu0
      %v2741 = vadd.f32 0.0, %v2740
      %2742 = vmatmul.f32.gmra.mxu0 %v2661
      %v2743 = vpop.f32.mrf.mxu0
      %v2744 = vadd.f32 0.0, %v2743
      %2745 = vmatmul.f32.gmra.mxu0 %v2663
      %v2746 = vpop.f32.mrf.mxu0
      %v2747 = vadd.f32 0.0, %v2746
      %2748 = vmatmul.f32.gmra.mxu0 %v2665
      %v2749 = vpop.f32.mrf.mxu0
      %v2750 = vadd.f32 0.0, %v2749
      %2751 = vmatmul.f32.gmra.mxu0 %v2667
      %v2752 = vpop.f32.mrf.mxu0
      %v2753 = vadd.f32 0.0, %v2752
      %2754 = vmatmul.f32.gmra.mxu0 %v2669
      %v2755 = vpop.f32.mrf.mxu0
      %v2756 = vadd.f32 0.0, %v2755
      %2757 = vmatmul.f32.gmra.mxu0 %v2671
      %v2758 = vpop.f32.mrf.mxu0
      %v2759 = vadd.f32 0.0, %v2758
      %2760 = vmatmul.f32.gmra.mxu0 %v2673
      %v2761 = vpop.f32.mrf.mxu0
      %v2762 = vadd.f32 0.0, %v2761
      %2763 = vmatmul.f32.gmra.mxu0 %v2675
      %v2764 = vpop.f32.mrf.mxu0
      %v2765 = vadd.f32 0.0, %v2764
      %2766 = vmatmul.f32.gmra.mxu0 %v2677
      %v2767 = vpop.f32.mrf.mxu0
      %v2768 = vadd.f32 0.0, %v2767
      %2769 = vmatmul.f32.gmra.mxu0 %v2679
      %v2770 = vpop.f32.mrf.mxu0
      %v2771 = vadd.f32 0.0, %v2770
      %2772 = vmatmul.f32.gmra.mxu0 %v2681
      %v2773 = vpop.f32.mrf.mxu0
      %v2774 = vadd.f32 0.0, %v2773
      %2775 = vmatmul.f32.gmra.mxu0 %v2683
      %v2776 = vpop.f32.mrf.mxu0
      %v2777 = vadd.f32 0.0, %v2776
      %2778 = vmatmul.f32.gmra.mxu0 %v2685
      %v2779 = vpop.f32.mrf.mxu0
      %v2780 = vadd.f32 0.0, %v2779
      %2781 = vmatmul.f32.gmra.mxu0 %v2687
      %v2782 = vpop.f32.mrf.mxu0
      %v2783 = vadd.f32 0.0, %v2782
      %2784 = vmatmul.f32.gmra.mxu0 %v2689
      %v2785 = vpop.f32.mrf.mxu0
      %v2786 = vadd.f32 0.0, %v2785
      %2787 = vmatmul.f32.gmra.mxu0 %v2691
      %v2788 = vpop.f32.mrf.mxu0
      %v2789 = vadd.f32 0.0, %v2788
      %2790 = vmatmul.f32.gmra.mxu0 %v2693
      %v2791 = vpop.f32.mrf.mxu0
      %v2792 = vadd.f32 0.0, %v2791
      %2793 = vmatmul.f32.gmra.mxu0 %v2695
      %v2794 = vpop.f32.mrf.mxu0
      %v2795 = vadd.f32 0.0, %v2794
      %2796 = vmatmul.f32.gmra.mxu0 %v2697
      %v2797 = vpop.f32.mrf.mxu0
      %v2798 = vadd.f32 0.0, %v2797
      %2799 = vmatmul.f32.gmra.mxu0 %v2699
      %v2800 = vpop.f32.mrf.mxu0
      %v2801 = vadd.f32 0.0, %v2800
      %2802 = vmatmul.f32.gmra.mxu0 %v2701
      %v2803 = vpop.f32.mrf.mxu0
      %v2804 = vadd.f32 0.0, %v2803
      %2805 = vmatmul.f32.gmra.mxu0 %v2703
      %v2806 = vpop.f32.mrf.mxu0
      %v2807 = vadd.f32 0.0, %v2806
      %2808 = vmatmul.f32.gmra.mxu0 %v2705
      %v2809 = vpop.f32.mrf.mxu0
      %v2810 = vadd.f32 0.0, %v2809
      %2811 = vmatmul.f32.gmra.mxu0 %v2707
      %v2812 = vpop.f32.mrf.mxu0
      %v2813 = vadd.f32 0.0, %v2812
      %2814 = vmatmul.f32.gmra.mxu0 %v2709
      %v2815 = vpop.f32.mrf.mxu0
      %v2816 = vadd.f32 0.0, %v2815
      %2817 = vmatmul.f32.gmra.mxu0 %v2711
      %v2818 = vpop.f32.mrf.mxu0
      %v2819 = vadd.f32 0.0, %v2818
      %2820 = vmatmul.f32.gmra.mxu0 %v2713
      %v2821 = vpop.f32.mrf.mxu0
      %v2822 = vadd.f32 0.0, %v2821
      %2823 = vmatmul.f32.gmra.mxu0 %v2715
      %v2824 = vpop.f32.mrf.mxu0
      %v2825 = vadd.f32 0.0, %v2824
      %2826 = vmatmul.f32.gmra.mxu0 %v2717
      %v2827 = vpop.f32.mrf.mxu0
      %v2828 = vadd.f32 0.0, %v2827
      %2829 = vmatmul.f32.gmra.mxu0 %v2719
      %v2830 = vpop.f32.mrf.mxu0
      %v2831 = vadd.f32 0.0, %v2830
      %2832 = vmatmul.f32.gmra.mxu0 %v2721
      %v2833 = vpop.f32.mrf.mxu0
      %v2834 = vadd.f32 0.0, %v2833
      %2835 = vdwg.mxu0
      %v2836 = vadd.f32 %v2428, %v2741
      %v2837 = vadd.f32 %v2429, %v2744
      %v2838 = vadd.f32 %v2430, %v2747
      %v2839 = vadd.f32 %v2431, %v2750
      %v2840 = vadd.f32 %v2432, %v2753
      %v2841 = vadd.f32 %v2433, %v2756
      %v2842 = vadd.f32 %v2434, %v2759
      %v2843 = vadd.f32 %v2435, %v2762
      %v2844 = vadd.f32 %v2436, %v2765
      %v2845 = vadd.f32 %v2437, %v2768
      %v2846 = vadd.f32 %v2438, %v2771
      %v2847 = vadd.f32 %v2439, %v2774
      %v2848 = vadd.f32 %v2440, %v2777
      %v2849 = vadd.f32 %v2441, %v2780
      %v2850 = vadd.f32 %v2442, %v2783
      %v2851 = vadd.f32 %v2443, %v2786
      %v2852 = vadd.f32 %v2444, %v2789
      %v2853 = vadd.f32 %v2445, %v2792
      %v2854 = vadd.f32 %v2446, %v2795
      %v2855 = vadd.f32 %v2447, %v2798
      %v2856 = vadd.f32 %v2448, %v2801
      %v2857 = vadd.f32 %v2449, %v2804
      %v2858 = vadd.f32 %v2450, %v2807
      %v2859 = vadd.f32 %v2451, %v2810
      %v2860 = vadd.f32 %v2452, %v2813
      %v2861 = vadd.f32 %v2453, %v2816
      %v2862 = vadd.f32 %v2454, %v2819
      %v2863 = vadd.f32 %v2455, %v2822
      %v2864 = vadd.f32 %v2456, %v2825
      %v2865 = vadd.f32 %v2457, %v2828
      %v2866 = vadd.f32 %v2458, %v2831
      %v2867 = vadd.f32 %v2459, %v2834
      %s2868 = scalar_lea.vmem %s3, 40
      %v2869 = vld [vmem:[%s2868] sm:$0xff]
      %v2871 = vrot.slane %v2586, 2
      %v2872 = vsel %vm2594, %v2657, %v2871
      %v2873 = vrot.slane %v2590, 2
      %v2874 = vsel %vm2594, %v2871, %v2873
      %v2875 = vsel %vm1333, %v2872, 0
      %v2877 = vsel %vm1333, %v2874, 0
      %2879 = vmatpush.msra.mxu0 0.0
      %2880 = vmatpush.msra.mxu0 0.0
      %2881 = vmatpush.msra.mxu0 0.0
      %2882 = vmatpush.msra.mxu0 0.0
      %2883 = vmatpush.msra.mxu0 0.0
      %2884 = vmatpush.msra.mxu0 0.0
      %2885 = vmatpush.msra.mxu0 0.0
      %2886 = vmatpush.msra.mxu0 0.0
      %2887 = vmatpush.msra.mxu0 0.0
      %2888 = vmatpush.msra.mxu0 0.0
      %2889 = vmatpush.msra.mxu0 0.0
      %2890 = vmatpush.msra.mxu0 0.0
      %2891 = vmatpush.msra.mxu0 0.0
      %2892 = vmatpush.msra.mxu0 0.0
      %2893 = vmatpush.msra.mxu0 0.0
      %2894 = vmatpush.msra.mxu0 %v2869
      %2895 = vmatmul.f32.gmra.mxu0 %v2663
      %v2896 = vpop.f32.mrf.mxu0
      %v2897 = vadd.f32 0.0, %v2896
      %2898 = vmatmul.f32.gmra.mxu0 %v2665
      %v2899 = vpop.f32.mrf.mxu0
      %v2900 = vadd.f32 0.0, %v2899
      %2901 = vmatmul.f32.gmra.mxu0 %v2667
      %v2902 = vpop.f32.mrf.mxu0
      %v2903 = vadd.f32 0.0, %v2902
      %2904 = vmatmul.f32.gmra.mxu0 %v2669
      %v2905 = vpop.f32.mrf.mxu0
      %v2906 = vadd.f32 0.0, %v2905
      %2907 = vmatmul.f32.gmra.mxu0 %v2671
      %v2908 = vpop.f32.mrf.mxu0
      %v2909 = vadd.f32 0.0, %v2908
      %2910 = vmatmul.f32.gmra.mxu0 %v2673
      %v2911 = vpop.f32.mrf.mxu0
      %v2912 = vadd.f32 0.0, %v2911
      %2913 = vmatmul.f32.gmra.mxu0 %v2675
      %v2914 = vpop.f32.mrf.mxu0
      %v2915 = vadd.f32 0.0, %v2914
      %2916 = vmatmul.f32.gmra.mxu0 %v2677
      %v2917 = vpop.f32.mrf.mxu0
      %v2918 = vadd.f32 0.0, %v2917
      %2919 = vmatmul.f32.gmra.mxu0 %v2679
      %v2920 = vpop.f32.mrf.mxu0
      %v2921 = vadd.f32 0.0, %v2920
      %2922 = vmatmul.f32.gmra.mxu0 %v2681
      %v2923 = vpop.f32.mrf.mxu0
      %v2924 = vadd.f32 0.0, %v2923
      %2925 = vmatmul.f32.gmra.mxu0 %v2683
      %v2926 = vpop.f32.mrf.mxu0
      %v2927 = vadd.f32 0.0, %v2926
      %2928 = vmatmul.f32.gmra.mxu0 %v2685
      %v2929 = vpop.f32.mrf.mxu0
      %v2930 = vadd.f32 0.0, %v2929
      %2931 = vmatmul.f32.gmra.mxu0 %v2687
      %v2932 = vpop.f32.mrf.mxu0
      %v2933 = vadd.f32 0.0, %v2932
      %2934 = vmatmul.f32.gmra.mxu0 %v2689
      %v2935 = vpop.f32.mrf.mxu0
      %v2936 = vadd.f32 0.0, %v2935
      %2937 = vmatmul.f32.gmra.mxu0 %v2691
      %v2938 = vpop.f32.mrf.mxu0
      %v2939 = vadd.f32 0.0, %v2938
      %2940 = vmatmul.f32.gmra.mxu0 %v2693
      %v2941 = vpop.f32.mrf.mxu0
      %v2942 = vadd.f32 0.0, %v2941
      %2943 = vmatmul.f32.gmra.mxu0 %v2695
      %v2944 = vpop.f32.mrf.mxu0
      %v2945 = vadd.f32 0.0, %v2944
      %2946 = vmatmul.f32.gmra.mxu0 %v2697
      %v2947 = vpop.f32.mrf.mxu0
      %v2948 = vadd.f32 0.0, %v2947
      %2949 = vmatmul.f32.gmra.mxu0 %v2699
      %v2950 = vpop.f32.mrf.mxu0
      %v2951 = vadd.f32 0.0, %v2950
      %2952 = vmatmul.f32.gmra.mxu0 %v2701
      %v2953 = vpop.f32.mrf.mxu0
      %v2954 = vadd.f32 0.0, %v2953
      %2955 = vmatmul.f32.gmra.mxu0 %v2703
      %v2956 = vpop.f32.mrf.mxu0
      %v2957 = vadd.f32 0.0, %v2956
      %2958 = vmatmul.f32.gmra.mxu0 %v2705
      %v2959 = vpop.f32.mrf.mxu0
      %v2960 = vadd.f32 0.0, %v2959
      %2961 = vmatmul.f32.gmra.mxu0 %v2707
      %v2962 = vpop.f32.mrf.mxu0
      %v2963 = vadd.f32 0.0, %v2962
      %2964 = vmatmul.f32.gmra.mxu0 %v2709
      %v2965 = vpop.f32.mrf.mxu0
      %v2966 = vadd.f32 0.0, %v2965
      %2967 = vmatmul.f32.gmra.mxu0 %v2711
      %v2968 = vpop.f32.mrf.mxu0
      %v2969 = vadd.f32 0.0, %v2968
      %2970 = vmatmul.f32.gmra.mxu0 %v2713
      %v2971 = vpop.f32.mrf.mxu0
      %v2972 = vadd.f32 0.0, %v2971
      %2973 = vmatmul.f32.gmra.mxu0 %v2715
      %v2974 = vpop.f32.mrf.mxu0
      %v2975 = vadd.f32 0.0, %v2974
      %2976 = vmatmul.f32.gmra.mxu0 %v2717
      %v2977 = vpop.f32.mrf.mxu0
      %v2978 = vadd.f32 0.0, %v2977
      %2979 = vmatmul.f32.gmra.mxu0 %v2719
      %v2980 = vpop.f32.mrf.mxu0
      %v2981 = vadd.f32 0.0, %v2980
      %2982 = vmatmul.f32.gmra.mxu0 %v2721
      %v2983 = vpop.f32.mrf.mxu0
      %v2984 = vadd.f32 0.0, %v2983
      %2985 = vmatmul.f32.gmra.mxu0 %v2875
      %v2986 = vpop.f32.mrf.mxu0
      %v2987 = vadd.f32 0.0, %v2986
      %2988 = vmatmul.f32.gmra.mxu0 %v2877
      %v2989 = vpop.f32.mrf.mxu0
      %v2990 = vadd.f32 0.0, %v2989
      %2991 = vdwg.mxu0
      %v2992 = vadd.f32 %v2836, %v2897
      %v2993 = vadd.f32 %v2837, %v2900
      %v2994 = vadd.f32 %v2838, %v2903
      %v2995 = vadd.f32 %v2839, %v2906
      %v2996 = vadd.f32 %v2840, %v2909
      %v2997 = vadd.f32 %v2841, %v2912
      %v2998 = vadd.f32 %v2842, %v2915
      %v2999 = vadd.f32 %v2843, %v2918
      %v3000 = vadd.f32 %v2844, %v2921
      %v3001 = vadd.f32 %v2845, %v2924
      %v3002 = vadd.f32 %v2846, %v2927
      %v3003 = vadd.f32 %v2847, %v2930
      %v3004 = vadd.f32 %v2848, %v2933
      %v3005 = vadd.f32 %v2849, %v2936
      %v3006 = vadd.f32 %v2850, %v2939
      %v3007 = vadd.f32 %v2851, %v2942
      %v3008 = vadd.f32 %v2852, %v2945
      %v3009 = vadd.f32 %v2853, %v2948
      %v3010 = vadd.f32 %v2854, %v2951
      %v3011 = vadd.f32 %v2855, %v2954
      %v3012 = vadd.f32 %v2856, %v2957
      %v3013 = vadd.f32 %v2857, %v2960
      %v3014 = vadd.f32 %v2858, %v2963
      %v3015 = vadd.f32 %v2859, %v2966
      %v3016 = vadd.f32 %v2860, %v2969
      %v3017 = vadd.f32 %v2861, %v2972
      %v3018 = vadd.f32 %v2862, %v2975
      %v3019 = vadd.f32 %v2863, %v2978
      %v3020 = vadd.f32 %v2864, %v2981
      %v3021 = vadd.f32 %v2865, %v2984
      %v3022 = vadd.f32 %v2866, %v2987
      %v3023 = vadd.f32 %v2867, %v2990
      %s3024 = scalar_lea.vmem %s3, 64
      %v3025 = vld [vmem:[%s3024] sm:$0xff]
      %v3026 = vsel %vm2594, %v2873, %v2595
      %v3027 = vsel %vm1333, %v3026, 0
      %3029 = vmatpush.msra.mxu0 0.0
      %3030 = vmatpush.msra.mxu0 0.0
      %3031 = vmatpush.msra.mxu0 0.0
      %3032 = vmatpush.msra.mxu0 0.0
      %3033 = vmatpush.msra.mxu0 0.0
      %3034 = vmatpush.msra.mxu0 0.0
      %3035 = vmatpush.msra.mxu0 0.0
      %3036 = vmatpush.msra.mxu0 0.0
      %3037 = vmatpush.msra.mxu0 0.0
      %3038 = vmatpush.msra.mxu0 0.0
      %3039 = vmatpush.msra.mxu0 0.0
      %3040 = vmatpush.msra.mxu0 0.0
      %3041 = vmatpush.msra.mxu0 0.0
      %3042 = vmatpush.msra.mxu0 0.0
      %3043 = vmatpush.msra.mxu0 0.0
      %3044 = vmatpush.msra.mxu0 %v3025
      %3045 = vmatmul.f32.gmra.mxu0 %v2667
      %v3046 = vpop.f32.mrf.mxu0
      %v3047 = vadd.f32 0.0, %v3046
      %3048 = vmatmul.f32.gmra.mxu0 %v2669
      %v3049 = vpop.f32.mrf.mxu0
      %v3050 = vadd.f32 0.0, %v3049
      %3051 = vmatmul.f32.gmra.mxu0 %v2671
      %v3052 = vpop.f32.mrf.mxu0
      %v3053 = vadd.f32 0.0, %v3052
      %3054 = vmatmul.f32.gmra.mxu0 %v2673
      %v3055 = vpop.f32.mrf.mxu0
      %v3056 = vadd.f32 0.0, %v3055
      %3057 = vmatmul.f32.gmra.mxu0 %v2675
      %v3058 = vpop.f32.mrf.mxu0
      %v3059 = vadd.f32 0.0, %v3058
      %3060 = vmatmul.f32.gmra.mxu0 %v2677
      %v3061 = vpop.f32.mrf.mxu0
      %v3062 = vadd.f32 0.0, %v3061
      %3063 = vmatmul.f32.gmra.mxu0 %v2679
      %v3064 = vpop.f32.mrf.mxu0
      %v3065 = vadd.f32 0.0, %v3064
      %3066 = vmatmul.f32.gmra.mxu0 %v2681
      %v3067 = vpop.f32.mrf.mxu0
      %v3068 = vadd.f32 0.0, %v3067
      %3069 = vmatmul.f32.gmra.mxu0 %v2683
      %v3070 = vpop.f32.mrf.mxu0
      %v3071 = vadd.f32 0.0, %v3070
      %3072 = vmatmul.f32.gmra.mxu0 %v2685
      %v3073 = vpop.f32.mrf.mxu0
      %v3074 = vadd.f32 0.0, %v3073
      %3075 = vmatmul.f32.gmra.mxu0 %v2687
      %v3076 = vpop.f32.mrf.mxu0
      %v3077 = vadd.f32 0.0, %v3076
      %3078 = vmatmul.f32.gmra.mxu0 %v2689
      %v3079 = vpop.f32.mrf.mxu0
      %v3080 = vadd.f32 0.0, %v3079
      %3081 = vmatmul.f32.gmra.mxu0 %v2691
      %v3082 = vpop.f32.mrf.mxu0
      %v3083 = vadd.f32 0.0, %v3082
      %3084 = vmatmul.f32.gmra.mxu0 %v2693
      %v3085 = vpop.f32.mrf.mxu0
      %v3086 = vadd.f32 0.0, %v3085
      %3087 = vmatmul.f32.gmra.mxu0 %v2695
      %v3088 = vpop.f32.mrf.mxu0
      %v3089 = vadd.f32 0.0, %v3088
      %3090 = vmatmul.f32.gmra.mxu0 %v2697
      %v3091 = vpop.f32.mrf.mxu0
      %v3092 = vadd.f32 0.0, %v3091
      %3093 = vmatmul.f32.gmra.mxu0 %v2699
      %v3094 = vpop.f32.mrf.mxu0
      %v3095 = vadd.f32 0.0, %v3094
      %3096 = vmatmul.f32.gmra.mxu0 %v2701
      %v3097 = vpop.f32.mrf.mxu0
      %v3098 = vadd.f32 0.0, %v3097
      %3099 = vmatmul.f32.gmra.mxu0 %v2703
      %v3100 = vpop.f32.mrf.mxu0
      %v3101 = vadd.f32 0.0, %v3100
      %3102 = vmatmul.f32.gmra.mxu0 %v2705
      %v3103 = vpop.f32.mrf.mxu0
      %v3104 = vadd.f32 0.0, %v3103
      %3105 = vmatmul.f32.gmra.mxu0 %v2707
      %v3106 = vpop.f32.mrf.mxu0
      %v3107 = vadd.f32 0.0, %v3106
      %3108 = vmatmul.f32.gmra.mxu0 %v2709
      %v3109 = vpop.f32.mrf.mxu0
      %v3110 = vadd.f32 0.0, %v3109
      %3111 = vmatmul.f32.gmra.mxu0 %v2711
      %v3112 = vpop.f32.mrf.mxu0
      %v3113 = vadd.f32 0.0, %v3112
      %3114 = vmatmul.f32.gmra.mxu0 %v2713
      %v3115 = vpop.f32.mrf.mxu0
      %v3116 = vadd.f32 0.0, %v3115
      %3117 = vmatmul.f32.gmra.mxu0 %v2715
      %v3118 = vpop.f32.mrf.mxu0
      %v3119 = vadd.f32 0.0, %v3118
      %3120 = vmatmul.f32.gmra.mxu0 %v2717
      %v3121 = vpop.f32.mrf.mxu0
      %v3122 = vadd.f32 0.0, %v3121
      %3123 = vmatmul.f32.gmra.mxu0 %v2719
      %v3124 = vpop.f32.mrf.mxu0
      %v3125 = vadd.f32 0.0, %v3124
      %3126 = vmatmul.f32.gmra.mxu0 %v2721
      %v3127 = vpop.f32.mrf.mxu0
      %v3128 = vadd.f32 0.0, %v3127
      %3129 = vmatmul.f32.gmra.mxu0 %v2875
      %v3130 = vpop.f32.mrf.mxu0
      %v3131 = vadd.f32 0.0, %v3130
      %3132 = vmatmul.f32.gmra.mxu0 %v2877
      %v3133 = vpop.f32.mrf.mxu0
      %v3134 = vadd.f32 0.0, %v3133
      %3135 = vmatmul.f32.gmra.mxu0 %v3027
      %v3136 = vpop.f32.mrf.mxu0
      %v3137 = vadd.f32 0.0, %v3136
      %3138 = vmatmul.f32.gmra.mxu0 %v2659
      %v3139 = vpop.f32.mrf.mxu0
      %v3140 = vadd.f32 0.0, %v3139
      %3141 = vdwg.mxu0
      %v3142 = vadd.f32 %v2992, %v3047
      %v3143 = vadd.f32 %v2993, %v3050
      %v3144 = vadd.f32 %v2994, %v3053
      %v3145 = vadd.f32 %v2995, %v3056
      %v3146 = vadd.f32 %v2996, %v3059
      %v3147 = vadd.f32 %v2997, %v3062
      %v3148 = vadd.f32 %v2998, %v3065
      %v3149 = vadd.f32 %v2999, %v3068
      %v3150 = vadd.f32 %v3000, %v3071
      %v3151 = vadd.f32 %v3001, %v3074
      %v3152 = vadd.f32 %v3002, %v3077
      %v3153 = vadd.f32 %v3003, %v3080
      %v3154 = vadd.f32 %v3004, %v3083
      %v3155 = vadd.f32 %v3005, %v3086
      %v3156 = vadd.f32 %v3006, %v3089
      %v3157 = vadd.f32 %v3007, %v3092
      %v3158 = vadd.f32 %v3008, %v3095
      %v3159 = vadd.f32 %v3009, %v3098
      %v3160 = vadd.f32 %v3010, %v3101
      %v3161 = vadd.f32 %v3011, %v3104
      %v3162 = vadd.f32 %v3012, %v3107
      %v3163 = vadd.f32 %v3013, %v3110
      %v3164 = vadd.f32 %v3014, %v3113
      %v3165 = vadd.f32 %v3015, %v3116
      %v3166 = vadd.f32 %v3016, %v3119
      %v3167 = vadd.f32 %v3017, %v3122
      %v3168 = vadd.f32 %v3018, %v3125
      %v3169 = vadd.f32 %v3019, %v3128
      %v3170 = vadd.f32 %v3020, %v3131
      %v3171 = vadd.f32 %v3021, %v3134
      %v3172 = vadd.f32 %v3022, %v3137
      %v3173 = vadd.f32 %v3023, %v3140
      %v3174 = vld [vmem:[%s4] sm:$0x1]
      %v3176 = vperm.slane %v3174, 0
      %v3178 = vadd.f32 %v3142, %v3176
      %v3179 = vadd.f32 %v3143, %v3176
      %v3180 = vadd.f32 %v3144, %v3176
      %v3181 = vadd.f32 %v3145, %v3176
      %v3182 = vadd.f32 %v3146, %v3176
      %v3183 = vadd.f32 %v3147, %v3176
      %v3184 = vadd.f32 %v3148, %v3176
      %v3185 = vadd.f32 %v3149, %v3176
      %v3186 = vadd.f32 %v3150, %v3176
      %v3187 = vadd.f32 %v3151, %v3176
      %v3188 = vadd.f32 %v3152, %v3176
      %v3189 = vadd.f32 %v3153, %v3176
      %v3190 = vadd.f32 %v3154, %v3176
      %v3191 = vadd.f32 %v3155, %v3176
      %v3192 = vadd.f32 %v3156, %v3176
      %v3193 = vadd.f32 %v3157, %v3176
      %v3194 = vadd.f32 %v3158, %v3176
      %v3195 = vadd.f32 %v3159, %v3176
      %v3196 = vadd.f32 %v3160, %v3176
      %v3197 = vadd.f32 %v3161, %v3176
      %v3198 = vadd.f32 %v3162, %v3176
      %v3199 = vadd.f32 %v3163, %v3176
      %v3200 = vadd.f32 %v3164, %v3176
      %v3201 = vadd.f32 %v3165, %v3176
      %v3202 = vadd.f32 %v3166, %v3176
      %v3203 = vadd.f32 %v3167, %v3176
      %v3204 = vadd.f32 %v3168, %v3176
      %v3205 = vadd.f32 %v3169, %v3176
      %v3206 = vadd.f32 %v3170, %v3176
      %v3207 = vadd.f32 %v3171, %v3176
      %v3208 = vadd.f32 %v3172, %v3176
      %v3209 = vadd.f32 %v3173, %v3176
      %v3210 = vmax.f32 %v3178, 0.0
      %v3211 = vmax.f32 %v3179, 0.0
      %v3212 = vmax.f32 %v3180, 0.0
      %v3213 = vmax.f32 %v3181, 0.0
      %v3214 = vmax.f32 %v3182, 0.0
      %v3215 = vmax.f32 %v3183, 0.0
      %v3216 = vmax.f32 %v3184, 0.0
      %v3217 = vmax.f32 %v3185, 0.0
      %v3218 = vmax.f32 %v3186, 0.0
      %v3219 = vmax.f32 %v3187, 0.0
      %v3220 = vmax.f32 %v3188, 0.0
      %v3221 = vmax.f32 %v3189, 0.0
      %v3222 = vmax.f32 %v3190, 0.0
      %v3223 = vmax.f32 %v3191, 0.0
      %v3224 = vmax.f32 %v3192, 0.0
      %v3225 = vmax.f32 %v3193, 0.0
      %v3226 = vmax.f32 %v3194, 0.0
      %v3227 = vmax.f32 %v3195, 0.0
      %v3228 = vmax.f32 %v3196, 0.0
      %v3229 = vmax.f32 %v3197, 0.0
      %v3230 = vmax.f32 %v3198, 0.0
      %v3231 = vmax.f32 %v3199, 0.0
      %v3232 = vmax.f32 %v3200, 0.0
      %v3233 = vmax.f32 %v3201, 0.0
      %v3234 = vmax.f32 %v3202, 0.0
      %v3235 = vmax.f32 %v3203, 0.0
      %v3236 = vmax.f32 %v3204, 0.0
      %v3237 = vmax.f32 %v3205, 0.0
      %v3238 = vmax.f32 %v3206, 0.0
      %v3239 = vmax.f32 %v3207, 0.0
      %v3240 = vmax.f32 %v3208, 0.0
      %v3241 = vmax.f32 %v3209, 0.0
      %v3242 = vmul.f32 %v3210, %v787
      %v3243 = vmul.f32 %v3211, %v788
      %v3244 = vmul.f32 %v3212, %v789
      %v3245 = vmul.f32 %v3213, %v790
      %v3246 = vmul.f32 %v3214, %v791
      %v3247 = vmul.f32 %v3215, %v792
      %v3248 = vmul.f32 %v3216, %v793
      %v3249 = vmul.f32 %v3217, %v794
      %v3250 = vmul.f32 %v3218, %v795
      %v3251 = vmul.f32 %v3219, %v796
      %v3252 = vmul.f32 %v3220, %v797
      %v3253 = vmul.f32 %v3221, %v798
      %v3254 = vmul.f32 %v3222, %v799
      %v3255 = vmul.f32 %v3223, %v800
      %v3256 = vmul.f32 %v3224, %v801
      %v3257 = vmul.f32 %v3225, %v802
      %v3258 = vmul.f32 %v3226, %v803
      %v3259 = vmul.f32 %v3227, %v804
      %v3260 = vmul.f32 %v3228, %v805
      %v3261 = vmul.f32 %v3229, %v806
      %v3262 = vmul.f32 %v3230, %v807
      %v3263 = vmul.f32 %v3231, %v808
      %v3264 = vmul.f32 %v3232, %v809
      %v3265 = vmul.f32 %v3233, %v810
      %v3266 = vmul.f32 %v3234, %v811
      %v3267 = vmul.f32 %v3235, %v812
      %v3268 = vmul.f32 %v3236, %v813
      %v3269 = vmul.f32 %v3237, %v814
      %v3270 = vmul.f32 %v3238, %v815
      %v3271 = vmul.f32 %v3239, %v816
      %v3272 = vmul.f32 %v3240, %v817
      %v3273 = vmul.f32 %v3241, %v818
      %v3306 = vrot.slane %v3242, 7
      %v3307 = vrot.slane %v3243, 7
      %v3308 = vsel %vm1262, %v3306, %v3307
      %v3309 = vrot.slane %v3244, 7
      %v3310 = vsel %vm1262, %v3307, %v3309
      %v3311 = vrot.slane %v3245, 7
      %v3312 = vsel %vm1262, %v3309, %v3311
      %v3313 = vrot.slane %v3246, 7
      %v3314 = vsel %vm1262, %v3311, %v3313
      %v3315 = vrot.slane %v3247, 7
      %v3316 = vsel %vm1262, %v3313, %v3315
      %v3317 = vrot.slane %v3248, 7
      %v3318 = vsel %vm1262, %v3315, %v3317
      %v3319 = vrot.slane %v3249, 7
      %v3320 = vsel %vm1262, %v3317, %v3319
      %v3321 = vrot.slane %v3250, 7
      %v3322 = vsel %vm1262, %v3319, %v3321
      %v3323 = vrot.slane %v3251, 7
      %v3324 = vsel %vm1262, %v3321, %v3323
      %v3325 = vrot.slane %v3252, 7
      %v3326 = vsel %vm1262, %v3323, %v3325
      %v3327 = vrot.slane %v3253, 7
      %v3328 = vsel %vm1262, %v3325, %v3327
      %v3329 = vrot.slane %v3254, 7
      %v3330 = vsel %vm1262, %v3327, %v3329
      %v3331 = vrot.slane %v3255, 7
      %v3332 = vsel %vm1262, %v3329, %v3331
      %v3333 = vrot.slane %v3256, 7
      %v3334 = vsel %vm1262, %v3331, %v3333
      %v3335 = vrot.slane %v3257, 7
      %v3336 = vsel %vm1262, %v3333, %v3335
      %v3337 = vrot.slane %v3258, 7
      %v3338 = vsel %vm1262, %v3335, %v3337
      %v3339 = vrot.slane %v3259, 7
      %v3340 = vsel %vm1262, %v3337, %v3339
      %v3341 = vrot.slane %v3260, 7
      %v3342 = vsel %vm1262, %v3339, %v3341
      %v3343 = vrot.slane %v3261, 7
      %v3344 = vsel %vm1262, %v3341, %v3343
      %v3345 = vrot.slane %v3262, 7
      %v3346 = vsel %vm1262, %v3343, %v3345
      %v3347 = vrot.slane %v3263, 7
      %v3348 = vsel %vm1262, %v3345, %v3347
      %v3349 = vrot.slane %v3264, 7
      %v3350 = vsel %vm1262, %v3347, %v3349
      %v3351 = vrot.slane %v3265, 7
      %v3352 = vsel %vm1262, %v3349, %v3351
      %v3353 = vrot.slane %v3266, 7
      %v3354 = vsel %vm1262, %v3351, %v3353
      %v3355 = vrot.slane %v3267, 7
      %v3356 = vsel %vm1262, %v3353, %v3355
      %v3357 = vrot.slane %v3268, 7
      %v3358 = vsel %vm1262, %v3355, %v3357
      %v3359 = vrot.slane %v3269, 7
      %v3360 = vsel %vm1262, %v3357, %v3359
      %v3361 = vrot.slane %v3270, 7
      %v3362 = vsel %vm1262, %v3359, %v3361
      %v3363 = vrot.slane %v3271, 7
      %v3364 = vsel %vm1262, %v3361, %v3363
      %v3365 = vrot.slane %v3272, 7
      %v3366 = vsel %vm1262, %v3363, %v3365
      %v3367 = vrot.slane %v3273, 7
      %v3368 = vsel %vm1262, %v3365, %v3367
      %v3371 = vsel %vm1262, 0.0, %v3306
      %v3372 = vsel %vm1262, %v3367, 0.0
      %v3373 = vld [vmem:[%s5] sm:$0xff]
      %s3374 = scalar_lea.vmem %s5, 24
      %v3375 = vld [vmem:[%s3374] sm:$0xff]
      %v3377 = vsel %vm1333, %v3371, 0
      %v3379 = vsel %vm1333, %v3308, 0
      %v3381 = vsel %vm1333, %v3310, 0
      %v3383 = vsel %vm1333, %v3312, 0
      %v3385 = vsel %vm1333, %v3314, 0
      %v3387 = vsel %vm1333, %v3316, 0
      %v3389 = vsel %vm1333, %v3318, 0
      %v3391 = vsel %vm1333, %v3320, 0
      %v3393 = vsel %vm1333, %v3322, 0
      %v3395 = vsel %vm1333, %v3324, 0
      %v3397 = vsel %vm1333, %v3326, 0
      %v3399 = vsel %vm1333, %v3328, 0
      %v3401 = vsel %vm1333, %v3330, 0
      %v3403 = vsel %vm1333, %v3332, 0
      %v3405 = vsel %vm1333, %v3334, 0
      %v3407 = vsel %vm1333, %v3336, 0
      %v3409 = vsel %vm1333, %v3338, 0
      %v3411 = vsel %vm1333, %v3340, 0
      %v3413 = vsel %vm1333, %v3342, 0
      %v3415 = vsel %vm1333, %v3344, 0
      %v3417 = vsel %vm1333, %v3346, 0
      %v3419 = vsel %vm1333, %v3348, 0
      %v3421 = vsel %vm1333, %v3350, 0
      %v3423 = vsel %vm1333, %v3352, 0
      %v3425 = vsel %vm1333, %v3354, 0
      %v3427 = vsel %vm1333, %v3356, 0
      %v3429 = vsel %vm1333, %v3358, 0
      %v3431 = vsel %vm1333, %v3360, 0
      %v3433 = vsel %vm1333, %v3362, 0
      %v3435 = vsel %vm1333, %v3364, 0
      %v3437 = vsel %vm1333, %v3366, 0
      %v3439 = vsel %vm1333, %v3368, 0
      %3441 = vmatpush.msra.mxu0 0.0
      %3442 = vmatpush.msra.mxu0 0.0
      %3443 = vmatpush.msra.mxu0 0.0
      %3444 = vmatpush.msra.mxu0 0.0
      %3445 = vmatpush.msra.mxu0 0.0
      %3446 = vmatpush.msra.mxu0 0.0
      %3447 = vmatpush.msra.mxu0 0.0
      %3448 = vmatpush.msra.mxu0 0.0
      %3449 = vmatpush.msra.mxu0 0.0
      %3450 = vmatpush.msra.mxu0 0.0
      %3451 = vmatpush.msra.mxu0 0.0
      %3452 = vmatpush.msra.mxu0 0.0
      %3453 = vmatpush.msra.mxu0 0.0
      %3454 = vmatpush.msra.mxu0 0.0
      %3455 = vmatpush.msra.mxu0 0.0
      %3456 = vmatpush.msra.mxu0 %v3375
      %3457 = vmatmul.f32.gmra.mxu0 %v3377
      %v3458 = vpop.f32.mrf.mxu0
      %v3459 = vadd.f32 0.0, %v3458
      %3460 = vmatmul.f32.gmra.mxu0 %v3379
      %v3461 = vpop.f32.mrf.mxu0
      %v3462 = vadd.f32 0.0, %v3461
      %3463 = vmatmul.f32.gmra.mxu0 %v3381
      %v3464 = vpop.f32.mrf.mxu0
      %v3465 = vadd.f32 0.0, %v3464
      %3466 = vmatmul.f32.gmra.mxu0 %v3383
      %v3467 = vpop.f32.mrf.mxu0
      %v3468 = vadd.f32 0.0, %v3467
      %3469 = vmatmul.f32.gmra.mxu0 %v3385
      %v3470 = vpop.f32.mrf.mxu0
      %v3471 = vadd.f32 0.0, %v3470
      %3472 = vmatmul.f32.gmra.mxu0 %v3387
      %v3473 = vpop.f32.mrf.mxu0
      %v3474 = vadd.f32 0.0, %v3473
      %3475 = vmatmul.f32.gmra.mxu0 %v3389
      %v3476 = vpop.f32.mrf.mxu0
      %v3477 = vadd.f32 0.0, %v3476
      %3478 = vmatmul.f32.gmra.mxu0 %v3391
      %v3479 = vpop.f32.mrf.mxu0
      %v3480 = vadd.f32 0.0, %v3479
      %3481 = vmatmul.f32.gmra.mxu0 %v3393
      %v3482 = vpop.f32.mrf.mxu0
      %v3483 = vadd.f32 0.0, %v3482
      %3484 = vmatmul.f32.gmra.mxu0 %v3395
      %v3485 = vpop.f32.mrf.mxu0
      %v3486 = vadd.f32 0.0, %v3485
      %3487 = vmatmul.f32.gmra.mxu0 %v3397
      %v3488 = vpop.f32.mrf.mxu0
      %v3489 = vadd.f32 0.0, %v3488
      %3490 = vmatmul.f32.gmra.mxu0 %v3399
      %v3491 = vpop.f32.mrf.mxu0
      %v3492 = vadd.f32 0.0, %v3491
      %3493 = vmatmul.f32.gmra.mxu0 %v3401
      %v3494 = vpop.f32.mrf.mxu0
      %v3495 = vadd.f32 0.0, %v3494
      %3496 = vmatmul.f32.gmra.mxu0 %v3403
      %v3497 = vpop.f32.mrf.mxu0
      %v3498 = vadd.f32 0.0, %v3497
      %3499 = vmatmul.f32.gmra.mxu0 %v3405
      %v3500 = vpop.f32.mrf.mxu0
      %v3501 = vadd.f32 0.0, %v3500
      %3502 = vmatmul.f32.gmra.mxu0 %v3407
      %v3503 = vpop.f32.mrf.mxu0
      %v3504 = vadd.f32 0.0, %v3503
      %3505 = vmatmul.f32.gmra.mxu0 %v3409
      %v3506 = vpop.f32.mrf.mxu0
      %v3507 = vadd.f32 0.0, %v3506
      %3508 = vmatmul.f32.gmra.mxu0 %v3411
      %v3509 = vpop.f32.mrf.mxu0
      %v3510 = vadd.f32 0.0, %v3509
      %3511 = vmatmul.f32.gmra.mxu0 %v3413
      %v3512 = vpop.f32.mrf.mxu0
      %v3513 = vadd.f32 0.0, %v3512
      %3514 = vmatmul.f32.gmra.mxu0 %v3415
      %v3515 = vpop.f32.mrf.mxu0
      %v3516 = vadd.f32 0.0, %v3515
      %3517 = vmatmul.f32.gmra.mxu0 %v3417
      %v3518 = vpop.f32.mrf.mxu0
      %v3519 = vadd.f32 0.0, %v3518
      %3520 = vmatmul.f32.gmra.mxu0 %v3419
      %v3521 = vpop.f32.mrf.mxu0
      %v3522 = vadd.f32 0.0, %v3521
      %3523 = vmatmul.f32.gmra.mxu0 %v3421
      %v3524 = vpop.f32.mrf.mxu0
      %v3525 = vadd.f32 0.0, %v3524
      %3526 = vmatmul.f32.gmra.mxu0 %v3423
      %v3527 = vpop.f32.mrf.mxu0
      %v3528 = vadd.f32 0.0, %v3527
      %3529 = vmatmul.f32.gmra.mxu0 %v3425
      %v3530 = vpop.f32.mrf.mxu0
      %v3531 = vadd.f32 0.0, %v3530
      %3532 = vmatmul.f32.gmra.mxu0 %v3427
      %v3533 = vpop.f32.mrf.mxu0
      %v3534 = vadd.f32 0.0, %v3533
      %3535 = vmatmul.f32.gmra.mxu0 %v3429
      %v3536 = vpop.f32.mrf.mxu0
      %v3537 = vadd.f32 0.0, %v3536
      %3538 = vmatmul.f32.gmra.mxu0 %v3431
      %v3539 = vpop.f32.mrf.mxu0
      %v3540 = vadd.f32 0.0, %v3539
      %3541 = vmatmul.f32.gmra.mxu0 %v3433
      %v3542 = vpop.f32.mrf.mxu0
      %v3543 = vadd.f32 0.0, %v3542
      %3544 = vmatmul.f32.gmra.mxu0 %v3435
      %v3545 = vpop.f32.mrf.mxu0
      %v3546 = vadd.f32 0.0, %v3545
      %3547 = vmatmul.f32.gmra.mxu0 %v3437
      %v3548 = vpop.f32.mrf.mxu0
      %v3549 = vadd.f32 0.0, %v3548
      %3550 = vmatmul.f32.gmra.mxu0 %v3439
      %v3551 = vpop.f32.mrf.mxu0
      %v3552 = vadd.f32 0.0, %v3551
      %3553 = vdwg.mxu0
      %3554 = vmatpush.msra.mxu0 0.0
      %3555 = vmatpush.msra.mxu0 0.0
      %3556 = vmatpush.msra.mxu0 0.0
      %3557 = vmatpush.msra.mxu0 0.0
      %3558 = vmatpush.msra.mxu0 0.0
      %3559 = vmatpush.msra.mxu0 0.0
      %3560 = vmatpush.msra.mxu0 0.0
      %3561 = vmatpush.msra.mxu0 0.0
      %3562 = vmatpush.msra.mxu0 0.0
      %3563 = vmatpush.msra.mxu0 0.0
      %3564 = vmatpush.msra.mxu0 0.0
      %3565 = vmatpush.msra.mxu0 0.0
      %3566 = vmatpush.msra.mxu0 0.0
      %3567 = vmatpush.msra.mxu0 0.0
      %3568 = vmatpush.msra.mxu0 0.0
      %3569 = vmatpush.msra.mxu0 %v3373
      %3570 = vmatmul.f32.gmra.mxu0 %v1513
      %v3571 = vpop.f32.mrf.mxu0
      %v3572 = vadd.f32 %v3459, %v3571
      %3573 = vmatmul.f32.gmra.mxu0 %v1513
      %v3574 = vpop.f32.mrf.mxu0
      %v3575 = vadd.f32 %v3462, %v3574
      %3576 = vmatmul.f32.gmra.mxu0 %v3377
      %v3577 = vpop.f32.mrf.mxu0
      %v3578 = vadd.f32 %v3465, %v3577
      %3579 = vmatmul.f32.gmra.mxu0 %v3379
      %v3580 = vpop.f32.mrf.mxu0
      %v3581 = vadd.f32 %v3468, %v3580
      %3582 = vmatmul.f32.gmra.mxu0 %v3381
      %v3583 = vpop.f32.mrf.mxu0
      %v3584 = vadd.f32 %v3471, %v3583
      %3585 = vmatmul.f32.gmra.mxu0 %v3383
      %v3586 = vpop.f32.mrf.mxu0
      %v3587 = vadd.f32 %v3474, %v3586
      %3588 = vmatmul.f32.gmra.mxu0 %v3385
      %v3589 = vpop.f32.mrf.mxu0
      %v3590 = vadd.f32 %v3477, %v3589
      %3591 = vmatmul.f32.gmra.mxu0 %v3387
      %v3592 = vpop.f32.mrf.mxu0
      %v3593 = vadd.f32 %v3480, %v3592
      %3594 = vmatmul.f32.gmra.mxu0 %v3389
      %v3595 = vpop.f32.mrf.mxu0
      %v3596 = vadd.f32 %v3483, %v3595
      %3597 = vmatmul.f32.gmra.mxu0 %v3391
      %v3598 = vpop.f32.mrf.mxu0
      %v3599 = vadd.f32 %v3486, %v3598
      %3600 = vmatmul.f32.gmra.mxu0 %v3393
      %v3601 = vpop.f32.mrf.mxu0
      %v3602 = vadd.f32 %v3489, %v3601
      %3603 = vmatmul.f32.gmra.mxu0 %v3395
      %v3604 = vpop.f32.mrf.mxu0
      %v3605 = vadd.f32 %v3492, %v3604
      %3606 = vmatmul.f32.gmra.mxu0 %v3397
      %v3607 = vpop.f32.mrf.mxu0
      %v3608 = vadd.f32 %v3495, %v3607
      %3609 = vmatmul.f32.gmra.mxu0 %v3399
      %v3610 = vpop.f32.mrf.mxu0
      %v3611 = vadd.f32 %v3498, %v3610
      %3612 = vmatmul.f32.gmra.mxu0 %v3401
      %v3613 = vpop.f32.mrf.mxu0
      %v3614 = vadd.f32 %v3501, %v3613
      %3615 = vmatmul.f32.gmra.mxu0 %v3403
      %v3616 = vpop.f32.mrf.mxu0
      %v3617 = vadd.f32 %v3504, %v3616
      %3618 = vmatmul.f32.gmra.mxu0 %v3405
      %v3619 = vpop.f32.mrf.mxu0
      %v3620 = vadd.f32 %v3507, %v3619
      %3621 = vmatmul.f32.gmra.mxu0 %v3407
      %v3622 = vpop.f32.mrf.mxu0
      %v3623 = vadd.f32 %v3510, %v3622
      %3624 = vmatmul.f32.gmra.mxu0 %v3409
      %v3625 = vpop.f32.mrf.mxu0
      %v3626 = vadd.f32 %v3513, %v3625
      %3627 = vmatmul.f32.gmra.mxu0 %v3411
      %v3628 = vpop.f32.mrf.mxu0
      %v3629 = vadd.f32 %v3516, %v3628
      %3630 = vmatmul.f32.gmra.mxu0 %v3413
      %v3631 = vpop.f32.mrf.mxu0
      %v3632 = vadd.f32 %v3519, %v3631
      %3633 = vmatmul.f32.gmra.mxu0 %v3415
      %v3634 = vpop.f32.mrf.mxu0
      %v3635 = vadd.f32 %v3522, %v3634
      %3636 = vmatmul.f32.gmra.mxu0 %v3417
      %v3637 = vpop.f32.mrf.mxu0
      %v3638 = vadd.f32 %v3525, %v3637
      %3639 = vmatmul.f32.gmra.mxu0 %v3419
      %v3640 = vpop.f32.mrf.mxu0
      %v3641 = vadd.f32 %v3528, %v3640
      %3642 = vmatmul.f32.gmra.mxu0 %v3421
      %v3643 = vpop.f32.mrf.mxu0
      %v3644 = vadd.f32 %v3531, %v3643
      %3645 = vmatmul.f32.gmra.mxu0 %v3423
      %v3646 = vpop.f32.mrf.mxu0
      %v3647 = vadd.f32 %v3534, %v3646
      %3648 = vmatmul.f32.gmra.mxu0 %v3425
      %v3649 = vpop.f32.mrf.mxu0
      %v3650 = vadd.f32 %v3537, %v3649
      %3651 = vmatmul.f32.gmra.mxu0 %v3427
      %v3652 = vpop.f32.mrf.mxu0
      %v3653 = vadd.f32 %v3540, %v3652
      %3654 = vmatmul.f32.gmra.mxu0 %v3429
      %v3655 = vpop.f32.mrf.mxu0
      %v3656 = vadd.f32 %v3543, %v3655
      %3657 = vmatmul.f32.gmra.mxu0 %v3431
      %v3658 = vpop.f32.mrf.mxu0
      %v3659 = vadd.f32 %v3546, %v3658
      %3660 = vmatmul.f32.gmra.mxu0 %v3433
      %v3661 = vpop.f32.mrf.mxu0
      %v3662 = vadd.f32 %v3549, %v3661
      %3663 = vmatmul.f32.gmra.mxu0 %v3435
      %v3664 = vpop.f32.mrf.mxu0
      %v3665 = vadd.f32 %v3552, %v3664
      %3666 = vdwg.mxu0
      %s3667 = scalar_lea.vmem %s5, 48
      %v3668 = vld [vmem:[%s3667] sm:$0xff]
      %v3670 = vsel %vm1333, %v3372, 0
      %3672 = vmatpush.msra.mxu0 0.0
      %3673 = vmatpush.msra.mxu0 0.0
      %3674 = vmatpush.msra.mxu0 0.0
      %3675 = vmatpush.msra.mxu0 0.0
      %3676 = vmatpush.msra.mxu0 0.0
      %3677 = vmatpush.msra.mxu0 0.0
      %3678 = vmatpush.msra.mxu0 0.0
      %3679 = vmatpush.msra.mxu0 0.0
      %3680 = vmatpush.msra.mxu0 0.0
      %3681 = vmatpush.msra.mxu0 0.0
      %3682 = vmatpush.msra.mxu0 0.0
      %3683 = vmatpush.msra.mxu0 0.0
      %3684 = vmatpush.msra.mxu0 0.0
      %3685 = vmatpush.msra.mxu0 0.0
      %3686 = vmatpush.msra.mxu0 0.0
      %3687 = vmatpush.msra.mxu0 %v3668
      %3688 = vmatmul.f32.gmra.mxu0 %v3381
      %v3689 = vpop.f32.mrf.mxu0
      %v3690 = vadd.f32 0.0, %v3689
      %3691 = vmatmul.f32.gmra.mxu0 %v3383
      %v3692 = vpop.f32.mrf.mxu0
      %v3693 = vadd.f32 0.0, %v3692
      %3694 = vmatmul.f32.gmra.mxu0 %v3385
      %v3695 = vpop.f32.mrf.mxu0
      %v3696 = vadd.f32 0.0, %v3695
      %3697 = vmatmul.f32.gmra.mxu0 %v3387
      %v3698 = vpop.f32.mrf.mxu0
      %v3699 = vadd.f32 0.0, %v3698
      %3700 = vmatmul.f32.gmra.mxu0 %v3389
      %v3701 = vpop.f32.mrf.mxu0
      %v3702 = vadd.f32 0.0, %v3701
      %3703 = vmatmul.f32.gmra.mxu0 %v3391
      %v3704 = vpop.f32.mrf.mxu0
      %v3705 = vadd.f32 0.0, %v3704
      %3706 = vmatmul.f32.gmra.mxu0 %v3393
      %v3707 = vpop.f32.mrf.mxu0
      %v3708 = vadd.f32 0.0, %v3707
      %3709 = vmatmul.f32.gmra.mxu0 %v3395
      %v3710 = vpop.f32.mrf.mxu0
      %v3711 = vadd.f32 0.0, %v3710
      %3712 = vmatmul.f32.gmra.mxu0 %v3397
      %v3713 = vpop.f32.mrf.mxu0
      %v3714 = vadd.f32 0.0, %v3713
      %3715 = vmatmul.f32.gmra.mxu0 %v3399
      %v3716 = vpop.f32.mrf.mxu0
      %v3717 = vadd.f32 0.0, %v3716
      %3718 = vmatmul.f32.gmra.mxu0 %v3401
      %v3719 = vpop.f32.mrf.mxu0
      %v3720 = vadd.f32 0.0, %v3719
      %3721 = vmatmul.f32.gmra.mxu0 %v3403
      %v3722 = vpop.f32.mrf.mxu0
      %v3723 = vadd.f32 0.0, %v3722
      %3724 = vmatmul.f32.gmra.mxu0 %v3405
      %v3725 = vpop.f32.mrf.mxu0
      %v3726 = vadd.f32 0.0, %v3725
      %3727 = vmatmul.f32.gmra.mxu0 %v3407
      %v3728 = vpop.f32.mrf.mxu0
      %v3729 = vadd.f32 0.0, %v3728
      %3730 = vmatmul.f32.gmra.mxu0 %v3409
      %v3731 = vpop.f32.mrf.mxu0
      %v3732 = vadd.f32 0.0, %v3731
      %3733 = vmatmul.f32.gmra.mxu0 %v3411
      %v3734 = vpop.f32.mrf.mxu0
      %v3735 = vadd.f32 0.0, %v3734
      %3736 = vmatmul.f32.gmra.mxu0 %v3413
      %v3737 = vpop.f32.mrf.mxu0
      %v3738 = vadd.f32 0.0, %v3737
      %3739 = vmatmul.f32.gmra.mxu0 %v3415
      %v3740 = vpop.f32.mrf.mxu0
      %v3741 = vadd.f32 0.0, %v3740
      %3742 = vmatmul.f32.gmra.mxu0 %v3417
      %v3743 = vpop.f32.mrf.mxu0
      %v3744 = vadd.f32 0.0, %v3743
      %3745 = vmatmul.f32.gmra.mxu0 %v3419
      %v3746 = vpop.f32.mrf.mxu0
      %v3747 = vadd.f32 0.0, %v3746
      %3748 = vmatmul.f32.gmra.mxu0 %v3421
      %v3749 = vpop.f32.mrf.mxu0
      %v3750 = vadd.f32 0.0, %v3749
      %3751 = vmatmul.f32.gmra.mxu0 %v3423
      %v3752 = vpop.f32.mrf.mxu0
      %v3753 = vadd.f32 0.0, %v3752
      %3754 = vmatmul.f32.gmra.mxu0 %v3425
      %v3755 = vpop.f32.mrf.mxu0
      %v3756 = vadd.f32 0.0, %v3755
      %3757 = vmatmul.f32.gmra.mxu0 %v3427
      %v3758 = vpop.f32.mrf.mxu0
      %v3759 = vadd.f32 0.0, %v3758
      %3760 = vmatmul.f32.gmra.mxu0 %v3429
      %v3761 = vpop.f32.mrf.mxu0
      %v3762 = vadd.f32 0.0, %v3761
      %3763 = vmatmul.f32.gmra.mxu0 %v3431
      %v3764 = vpop.f32.mrf.mxu0
      %v3765 = vadd.f32 0.0, %v3764
      %3766 = vmatmul.f32.gmra.mxu0 %v3433
      %v3767 = vpop.f32.mrf.mxu0
      %v3768 = vadd.f32 0.0, %v3767
      %3769 = vmatmul.f32.gmra.mxu0 %v3435
      %v3770 = vpop.f32.mrf.mxu0
      %v3771 = vadd.f32 0.0, %v3770
      %3772 = vmatmul.f32.gmra.mxu0 %v3437
      %v3773 = vpop.f32.mrf.mxu0
      %v3774 = vadd.f32 0.0, %v3773
      %3775 = vmatmul.f32.gmra.mxu0 %v3439
      %v3776 = vpop.f32.mrf.mxu0
      %v3777 = vadd.f32 0.0, %v3776
      %3778 = vmatmul.f32.gmra.mxu0 %v3670
      %v3779 = vpop.f32.mrf.mxu0
      %v3780 = vadd.f32 0.0, %v3779
      %3781 = vmatmul.f32.gmra.mxu0 %v1513
      %v3782 = vpop.f32.mrf.mxu0
      %v3783 = vadd.f32 0.0, %v3782
      %3784 = vdwg.mxu0
      %v3785 = vadd.f32 %v3572, %v3690
      %v3786 = vadd.f32 %v3575, %v3693
      %v3787 = vadd.f32 %v3578, %v3696
      %v3788 = vadd.f32 %v3581, %v3699
      %v3789 = vadd.f32 %v3584, %v3702
      %v3790 = vadd.f32 %v3587, %v3705
      %v3791 = vadd.f32 %v3590, %v3708
      %v3792 = vadd.f32 %v3593, %v3711
      %v3793 = vadd.f32 %v3596, %v3714
      %v3794 = vadd.f32 %v3599, %v3717
      %v3795 = vadd.f32 %v3602, %v3720
      %v3796 = vadd.f32 %v3605, %v3723
      %v3797 = vadd.f32 %v3608, %v3726
      %v3798 = vadd.f32 %v3611, %v3729
      %v3799 = vadd.f32 %v3614, %v3732
      %v3800 = vadd.f32 %v3617, %v3735
      %v3801 = vadd.f32 %v3620, %v3738
      %v3802 = vadd.f32 %v3623, %v3741
      %v3803 = vadd.f32 %v3626, %v3744
      %v3804 = vadd.f32 %v3629, %v3747
      %v3805 = vadd.f32 %v3632, %v3750
      %v3806 = vadd.f32 %v3635, %v3753
      %v3807 = vadd.f32 %v3638, %v3756
      %v3808 = vadd.f32 %v3641, %v3759
      %v3809 = vadd.f32 %v3644, %v3762
      %v3810 = vadd.f32 %v3647, %v3765
      %v3811 = vadd.f32 %v3650, %v3768
      %v3812 = vadd.f32 %v3653, %v3771
      %v3813 = vadd.f32 %v3656, %v3774
      %v3814 = vadd.f32 %v3659, %v3777
      %v3815 = vadd.f32 %v3662, %v3780
      %v3816 = vadd.f32 %v3665, %v3783
      %v3849 = vrot.slane %v3210, 7
      %v3850 = vrot.slane %v3211, 7
      %v3851 = vsel %vm1262, %v3849, %v3850
      %v3852 = vrot.slane %v3212, 7
      %v3853 = vsel %vm1262, %v3850, %v3852
      %v3854 = vrot.slane %v3213, 7
      %v3855 = vsel %vm1262, %v3852, %v3854
      %v3856 = vrot.slane %v3214, 7
      %v3857 = vsel %vm1262, %v3854, %v3856
      %v3858 = vrot.slane %v3215, 7
      %v3859 = vsel %vm1262, %v3856, %v3858
      %v3860 = vrot.slane %v3216, 7
      %v3861 = vsel %vm1262, %v3858, %v3860
      %v3862 = vrot.slane %v3217, 7
      %v3863 = vsel %vm1262, %v3860, %v3862
      %v3864 = vrot.slane %v3218, 7
      %v3865 = vsel %vm1262, %v3862, %v3864
      %v3866 = vrot.slane %v3219, 7
      %v3867 = vsel %vm1262, %v3864, %v3866
      %v3868 = vrot.slane %v3220, 7
      %v3869 = vsel %vm1262, %v3866, %v3868
      %v3870 = vrot.slane %v3221, 7
      %v3871 = vsel %vm1262, %v3868, %v3870
      %v3872 = vrot.slane %v3222, 7
      %v3873 = vsel %vm1262, %v3870, %v3872
      %v3874 = vrot.slane %v3223, 7
      %v3875 = vsel %vm1262, %v3872, %v3874
      %v3876 = vrot.slane %v3224, 7
      %v3877 = vsel %vm1262, %v3874, %v3876
      %v3878 = vrot.slane %v3225, 7
      %v3879 = vsel %vm1262, %v3876, %v3878
      %v3880 = vrot.slane %v3226, 7
      %v3881 = vsel %vm1262, %v3878, %v3880
      %v3882 = vrot.slane %v3227, 7
      %v3883 = vsel %vm1262, %v3880, %v3882
      %v3884 = vrot.slane %v3228, 7
      %v3885 = vsel %vm1262, %v3882, %v3884
      %v3886 = vrot.slane %v3229, 7
      %v3887 = vsel %vm1262, %v3884, %v3886
      %v3888 = vrot.slane %v3230, 7
      %v3889 = vsel %vm1262, %v3886, %v3888
      %v3890 = vrot.slane %v3231, 7
      %v3891 = vsel %vm1262, %v3888, %v3890
      %v3892 = vrot.slane %v3232, 7
      %v3893 = vsel %vm1262, %v3890, %v3892
      %v3894 = vrot.slane %v3233, 7
      %v3895 = vsel %vm1262, %v3892, %v3894
      %v3896 = vrot.slane %v3234, 7
      %v3897 = vsel %vm1262, %v3894, %v3896
      %v3898 = vrot.slane %v3235, 7
      %v3899 = vsel %vm1262, %v3896, %v3898
      %v3900 = vrot.slane %v3236, 7
      %v3901 = vsel %vm1262, %v3898, %v3900
      %v3902 = vrot.slane %v3237, 7
      %v3903 = vsel %vm1262, %v3900, %v3902
      %v3904 = vrot.slane %v3238, 7
      %v3905 = vsel %vm1262, %v3902, %v3904
      %v3906 = vrot.slane %v3239, 7
      %v3907 = vsel %vm1262, %v3904, %v3906
      %v3908 = vrot.slane %v3240, 7
      %v3909 = vsel %vm1262, %v3906, %v3908
      %v3910 = vrot.slane %v3241, 7
      %v3911 = vsel %vm1262, %v3908, %v3910
      %v3914 = vsel %vm1262, 0.0, %v3849
      %v3915 = vsel %vm1262, %v3910, 0.0
      %s3916 = scalar_lea.vmem %s5, 8
      %v3917 = vld [vmem:[%s3916] sm:$0xff]
      %v3919 = vrot.slane %v3914, 1
      %v3920 = vsel %vm1880, %v1881, %v3919
      %v3921 = vrot.slane %v3851, 1
      %v3922 = vsel %vm1880, %v3919, %v3921
      %v3923 = vrot.slane %v3853, 1
      %v3924 = vsel %vm1880, %v3921, %v3923
      %v3925 = vrot.slane %v3855, 1
      %v3926 = vsel %vm1880, %v3923, %v3925
      %v3927 = vrot.slane %v3857, 1
      %v3928 = vsel %vm1880, %v3925, %v3927
      %v3929 = vrot.slane %v3859, 1
      %v3930 = vsel %vm1880, %v3927, %v3929
      %v3931 = vrot.slane %v3861, 1
      %v3932 = vsel %vm1880, %v3929, %v3931
      %v3933 = vrot.slane %v3863, 1
      %v3934 = vsel %vm1880, %v3931, %v3933
      %v3935 = vrot.slane %v3865, 1
      %v3936 = vsel %vm1880, %v3933, %v3935
      %v3937 = vrot.slane %v3867, 1
      %v3938 = vsel %vm1880, %v3935, %v3937
      %v3939 = vrot.slane %v3869, 1
      %v3940 = vsel %vm1880, %v3937, %v3939
      %v3941 = vrot.slane %v3871, 1
      %v3942 = vsel %vm1880, %v3939, %v3941
      %v3943 = vrot.slane %v3873, 1
      %v3944 = vsel %vm1880, %v3941, %v3943
      %v3945 = vrot.slane %v3875, 1
      %v3946 = vsel %vm1880, %v3943, %v3945
      %v3947 = vrot.slane %v3877, 1
      %v3948 = vsel %vm1880, %v3945, %v3947
      %v3949 = vrot.slane %v3879, 1
      %v3950 = vsel %vm1880, %v3947, %v3949
      %v3951 = vrot.slane %v3881, 1
      %v3952 = vsel %vm1880, %v3949, %v3951
      %v3953 = vrot.slane %v3883, 1
      %v3954 = vsel %vm1880, %v3951, %v3953
      %v3955 = vrot.slane %v3885, 1
      %v3956 = vsel %vm1880, %v3953, %v3955
      %v3957 = vrot.slane %v3887, 1
      %v3958 = vsel %vm1880, %v3955, %v3957
      %v3959 = vrot.slane %v3889, 1
      %v3960 = vsel %vm1880, %v3957, %v3959
      %v3961 = vrot.slane %v3891, 1
      %v3962 = vsel %vm1880, %v3959, %v3961
      %v3963 = vrot.slane %v3893, 1
      %v3964 = vsel %vm1880, %v3961, %v3963
      %v3965 = vrot.slane %v3895, 1
      %v3966 = vsel %vm1880, %v3963, %v3965
      %v3967 = vrot.slane %v3897, 1
      %v3968 = vsel %vm1880, %v3965, %v3967
      %v3969 = vrot.slane %v3899, 1
      %v3970 = vsel %vm1880, %v3967, %v3969
      %v3971 = vrot.slane %v3901, 1
      %v3972 = vsel %vm1880, %v3969, %v3971
      %v3973 = vrot.slane %v3903, 1
      %v3974 = vsel %vm1880, %v3971, %v3973
      %v3975 = vrot.slane %v3905, 1
      %v3976 = vsel %vm1880, %v3973, %v3975
      %v3977 = vrot.slane %v3907, 1
      %v3978 = vsel %vm1880, %v3975, %v3977
      %v3979 = vrot.slane %v3909, 1
      %v3980 = vsel %vm1880, %v3977, %v3979
      %v3981 = vsel %vm1333, %v3920, 0
      %v3983 = vsel %vm1333, %v3922, 0
      %v3985 = vsel %vm1333, %v3924, 0
      %v3987 = vsel %vm1333, %v3926, 0
      %v3989 = vsel %vm1333, %v3928, 0
      %v3991 = vsel %vm1333, %v3930, 0
      %v3993 = vsel %vm1333, %v3932, 0
      %v3995 = vsel %vm1333, %v3934, 0
      %v3997 = vsel %vm1333, %v3936, 0
      %v3999 = vsel %vm1333, %v3938, 0
      %v4001 = vsel %vm1333, %v3940, 0
      %v4003 = vsel %vm1333, %v3942, 0
      %v4005 = vsel %vm1333, %v3944, 0
      %v4007 = vsel %vm1333, %v3946, 0
      %v4009 = vsel %vm1333, %v3948, 0
      %v4011 = vsel %vm1333, %v3950, 0
      %v4013 = vsel %vm1333, %v3952, 0
      %v4015 = vsel %vm1333, %v3954, 0
      %v4017 = vsel %vm1333, %v3956, 0
      %v4019 = vsel %vm1333, %v3958, 0
      %v4021 = vsel %vm1333, %v3960, 0
      %v4023 = vsel %vm1333, %v3962, 0
      %v4025 = vsel %vm1333, %v3964, 0
      %v4027 = vsel %vm1333, %v3966, 0
      %v4029 = vsel %vm1333, %v3968, 0
      %v4031 = vsel %vm1333, %v3970, 0
      %v4033 = vsel %vm1333, %v3972, 0
      %v4035 = vsel %vm1333, %v3974, 0
      %v4037 = vsel %vm1333, %v3976, 0
      %v4039 = vsel %vm1333, %v3978, 0
      %v4041 = vsel %vm1333, %v3980, 0
      %4043 = vmatpush.msra.mxu0 0.0
      %4044 = vmatpush.msra.mxu0 0.0
      %4045 = vmatpush.msra.mxu0 0.0
      %4046 = vmatpush.msra.mxu0 0.0
      %4047 = vmatpush.msra.mxu0 0.0
      %4048 = vmatpush.msra.mxu0 0.0
      %4049 = vmatpush.msra.mxu0 0.0
      %4050 = vmatpush.msra.mxu0 0.0
      %4051 = vmatpush.msra.mxu0 0.0
      %4052 = vmatpush.msra.mxu0 0.0
      %4053 = vmatpush.msra.mxu0 0.0
      %4054 = vmatpush.msra.mxu0 0.0
      %4055 = vmatpush.msra.mxu0 0.0
      %4056 = vmatpush.msra.mxu0 0.0
      %4057 = vmatpush.msra.mxu0 0.0
      %4058 = vmatpush.msra.mxu0 %v3917
      %4059 = vmatmul.f32.gmra.mxu0 %v1945
      %v4060 = vpop.f32.mrf.mxu0
      %v4061 = vadd.f32 0.0, %v4060
      %4062 = vmatmul.f32.gmra.mxu0 %v3981
      %v4063 = vpop.f32.mrf.mxu0
      %v4064 = vadd.f32 0.0, %v4063
      %4065 = vmatmul.f32.gmra.mxu0 %v3983
      %v4066 = vpop.f32.mrf.mxu0
      %v4067 = vadd.f32 0.0, %v4066
      %4068 = vmatmul.f32.gmra.mxu0 %v3985
      %v4069 = vpop.f32.mrf.mxu0
      %v4070 = vadd.f32 0.0, %v4069
      %4071 = vmatmul.f32.gmra.mxu0 %v3987
      %v4072 = vpop.f32.mrf.mxu0
      %v4073 = vadd.f32 0.0, %v4072
      %4074 = vmatmul.f32.gmra.mxu0 %v3989
      %v4075 = vpop.f32.mrf.mxu0
      %v4076 = vadd.f32 0.0, %v4075
      %4077 = vmatmul.f32.gmra.mxu0 %v3991
      %v4078 = vpop.f32.mrf.mxu0
      %v4079 = vadd.f32 0.0, %v4078
      %4080 = vmatmul.f32.gmra.mxu0 %v3993
      %v4081 = vpop.f32.mrf.mxu0
      %v4082 = vadd.f32 0.0, %v4081
      %4083 = vmatmul.f32.gmra.mxu0 %v3995
      %v4084 = vpop.f32.mrf.mxu0
      %v4085 = vadd.f32 0.0, %v4084
      %4086 = vmatmul.f32.gmra.mxu0 %v3997
      %v4087 = vpop.f32.mrf.mxu0
      %v4088 = vadd.f32 0.0, %v4087
      %4089 = vmatmul.f32.gmra.mxu0 %v3999
      %v4090 = vpop.f32.mrf.mxu0
      %v4091 = vadd.f32 0.0, %v4090
      %4092 = vmatmul.f32.gmra.mxu0 %v4001
      %v4093 = vpop.f32.mrf.mxu0
      %v4094 = vadd.f32 0.0, %v4093
      %4095 = vmatmul.f32.gmra.mxu0 %v4003
      %v4096 = vpop.f32.mrf.mxu0
      %v4097 = vadd.f32 0.0, %v4096
      %4098 = vmatmul.f32.gmra.mxu0 %v4005
      %v4099 = vpop.f32.mrf.mxu0
      %v4100 = vadd.f32 0.0, %v4099
      %4101 = vmatmul.f32.gmra.mxu0 %v4007
      %v4102 = vpop.f32.mrf.mxu0
      %v4103 = vadd.f32 0.0, %v4102
      %4104 = vmatmul.f32.gmra.mxu0 %v4009
      %v4105 = vpop.f32.mrf.mxu0
      %v4106 = vadd.f32 0.0, %v4105
      %4107 = vmatmul.f32.gmra.mxu0 %v4011
      %v4108 = vpop.f32.mrf.mxu0
      %v4109 = vadd.f32 0.0, %v4108
      %4110 = vmatmul.f32.gmra.mxu0 %v4013
      %v4111 = vpop.f32.mrf.mxu0
      %v4112 = vadd.f32 0.0, %v4111
      %4113 = vmatmul.f32.gmra.mxu0 %v4015
      %v4114 = vpop.f32.mrf.mxu0
      %v4115 = vadd.f32 0.0, %v4114
      %4116 = vmatmul.f32.gmra.mxu0 %v4017
      %v4117 = vpop.f32.mrf.mxu0
      %v4118 = vadd.f32 0.0, %v4117
      %4119 = vmatmul.f32.gmra.mxu0 %v4019
      %v4120 = vpop.f32.mrf.mxu0
      %v4121 = vadd.f32 0.0, %v4120
      %4122 = vmatmul.f32.gmra.mxu0 %v4021
      %v4123 = vpop.f32.mrf.mxu0
      %v4124 = vadd.f32 0.0, %v4123
      %4125 = vmatmul.f32.gmra.mxu0 %v4023
      %v4126 = vpop.f32.mrf.mxu0
      %v4127 = vadd.f32 0.0, %v4126
      %4128 = vmatmul.f32.gmra.mxu0 %v4025
      %v4129 = vpop.f32.mrf.mxu0
      %v4130 = vadd.f32 0.0, %v4129
      %4131 = vmatmul.f32.gmra.mxu0 %v4027
      %v4132 = vpop.f32.mrf.mxu0
      %v4133 = vadd.f32 0.0, %v4132
      %4134 = vmatmul.f32.gmra.mxu0 %v4029
      %v4135 = vpop.f32.mrf.mxu0
      %v4136 = vadd.f32 0.0, %v4135
      %4137 = vmatmul.f32.gmra.mxu0 %v4031
      %v4138 = vpop.f32.mrf.mxu0
      %v4139 = vadd.f32 0.0, %v4138
      %4140 = vmatmul.f32.gmra.mxu0 %v4033
      %v4141 = vpop.f32.mrf.mxu0
      %v4142 = vadd.f32 0.0, %v4141
      %4143 = vmatmul.f32.gmra.mxu0 %v4035
      %v4144 = vpop.f32.mrf.mxu0
      %v4145 = vadd.f32 0.0, %v4144
      %4146 = vmatmul.f32.gmra.mxu0 %v4037
      %v4147 = vpop.f32.mrf.mxu0
      %v4148 = vadd.f32 0.0, %v4147
      %4149 = vmatmul.f32.gmra.mxu0 %v4039
      %v4150 = vpop.f32.mrf.mxu0
      %v4151 = vadd.f32 0.0, %v4150
      %4152 = vmatmul.f32.gmra.mxu0 %v4041
      %v4153 = vpop.f32.mrf.mxu0
      %v4154 = vadd.f32 0.0, %v4153
      %4155 = vdwg.mxu0
      %v4156 = vadd.f32 %v3785, %v4061
      %v4157 = vadd.f32 %v3786, %v4064
      %v4158 = vadd.f32 %v3787, %v4067
      %v4159 = vadd.f32 %v3788, %v4070
      %v4160 = vadd.f32 %v3789, %v4073
      %v4161 = vadd.f32 %v3790, %v4076
      %v4162 = vadd.f32 %v3791, %v4079
      %v4163 = vadd.f32 %v3792, %v4082
      %v4164 = vadd.f32 %v3793, %v4085
      %v4165 = vadd.f32 %v3794, %v4088
      %v4166 = vadd.f32 %v3795, %v4091
      %v4167 = vadd.f32 %v3796, %v4094
      %v4168 = vadd.f32 %v3797, %v4097
      %v4169 = vadd.f32 %v3798, %v4100
      %v4170 = vadd.f32 %v3799, %v4103
      %v4171 = vadd.f32 %v3800, %v4106
      %v4172 = vadd.f32 %v3801, %v4109
      %v4173 = vadd.f32 %v3802, %v4112
      %v4174 = vadd.f32 %v3803, %v4115
      %v4175 = vadd.f32 %v3804, %v4118
      %v4176 = vadd.f32 %v3805, %v4121
      %v4177 = vadd.f32 %v3806, %v4124
      %v4178 = vadd.f32 %v3807, %v4127
      %v4179 = vadd.f32 %v3808, %v4130
      %v4180 = vadd.f32 %v3809, %v4133
      %v4181 = vadd.f32 %v3810, %v4136
      %v4182 = vadd.f32 %v3811, %v4139
      %v4183 = vadd.f32 %v3812, %v4142
      %v4184 = vadd.f32 %v3813, %v4145
      %v4185 = vadd.f32 %v3814, %v4148
      %v4186 = vadd.f32 %v3815, %v4151
      %v4187 = vadd.f32 %v3816, %v4154
      %s4188 = scalar_lea.vmem %s5, 32
      %v4189 = vld [vmem:[%s4188] sm:$0xff]
      %v4191 = vrot.slane %v3911, 1
      %v4192 = vsel %vm1880, %v3979, %v4191
      %v4193 = vrot.slane %v3915, 1
      %v4194 = vsel %vm1880, %v4191, %v4193
      %v4195 = vsel %vm1333, %v4192, 0
      %v4197 = vsel %vm1333, %v4194, 0
      %4199 = vmatpush.msra.mxu0 0.0
      %4200 = vmatpush.msra.mxu0 0.0
      %4201 = vmatpush.msra.mxu0 0.0
      %4202 = vmatpush.msra.mxu0 0.0
      %4203 = vmatpush.msra.mxu0 0.0
      %4204 = vmatpush.msra.mxu0 0.0
      %4205 = vmatpush.msra.mxu0 0.0
      %4206 = vmatpush.msra.mxu0 0.0
      %4207 = vmatpush.msra.mxu0 0.0
      %4208 = vmatpush.msra.mxu0 0.0
      %4209 = vmatpush.msra.mxu0 0.0
      %4210 = vmatpush.msra.mxu0 0.0
      %4211 = vmatpush.msra.mxu0 0.0
      %4212 = vmatpush.msra.mxu0 0.0
      %4213 = vmatpush.msra.mxu0 0.0
      %4214 = vmatpush.msra.mxu0 %v4189
      %4215 = vmatmul.f32.gmra.mxu0 %v3983
      %v4216 = vpop.f32.mrf.mxu0
      %v4217 = vadd.f32 0.0, %v4216
      %4218 = vmatmul.f32.gmra.mxu0 %v3985
      %v4219 = vpop.f32.mrf.mxu0
      %v4220 = vadd.f32 0.0, %v4219
      %4221 = vmatmul.f32.gmra.mxu0 %v3987
      %v4222 = vpop.f32.mrf.mxu0
      %v4223 = vadd.f32 0.0, %v4222
      %4224 = vmatmul.f32.gmra.mxu0 %v3989
      %v4225 = vpop.f32.mrf.mxu0
      %v4226 = vadd.f32 0.0, %v4225
      %4227 = vmatmul.f32.gmra.mxu0 %v3991
      %v4228 = vpop.f32.mrf.mxu0
      %v4229 = vadd.f32 0.0, %v4228
      %4230 = vmatmul.f32.gmra.mxu0 %v3993
      %v4231 = vpop.f32.mrf.mxu0
      %v4232 = vadd.f32 0.0, %v4231
      %4233 = vmatmul.f32.gmra.mxu0 %v3995
      %v4234 = vpop.f32.mrf.mxu0
      %v4235 = vadd.f32 0.0, %v4234
      %4236 = vmatmul.f32.gmra.mxu0 %v3997
      %v4237 = vpop.f32.mrf.mxu0
      %v4238 = vadd.f32 0.0, %v4237
      %4239 = vmatmul.f32.gmra.mxu0 %v3999
      %v4240 = vpop.f32.mrf.mxu0
      %v4241 = vadd.f32 0.0, %v4240
      %4242 = vmatmul.f32.gmra.mxu0 %v4001
      %v4243 = vpop.f32.mrf.mxu0
      %v4244 = vadd.f32 0.0, %v4243
      %4245 = vmatmul.f32.gmra.mxu0 %v4003
      %v4246 = vpop.f32.mrf.mxu0
      %v4247 = vadd.f32 0.0, %v4246
      %4248 = vmatmul.f32.gmra.mxu0 %v4005
      %v4249 = vpop.f32.mrf.mxu0
      %v4250 = vadd.f32 0.0, %v4249
      %4251 = vmatmul.f32.gmra.mxu0 %v4007
      %v4252 = vpop.f32.mrf.mxu0
      %v4253 = vadd.f32 0.0, %v4252
      %4254 = vmatmul.f32.gmra.mxu0 %v4009
      %v4255 = vpop.f32.mrf.mxu0
      %v4256 = vadd.f32 0.0, %v4255
      %4257 = vmatmul.f32.gmra.mxu0 %v4011
      %v4258 = vpop.f32.mrf.mxu0
      %v4259 = vadd.f32 0.0, %v4258
      %4260 = vmatmul.f32.gmra.mxu0 %v4013
      %v4261 = vpop.f32.mrf.mxu0
      %v4262 = vadd.f32 0.0, %v4261
      %4263 = vmatmul.f32.gmra.mxu0 %v4015
      %v4264 = vpop.f32.mrf.mxu0
      %v4265 = vadd.f32 0.0, %v4264
      %4266 = vmatmul.f32.gmra.mxu0 %v4017
      %v4267 = vpop.f32.mrf.mxu0
      %v4268 = vadd.f32 0.0, %v4267
      %4269 = vmatmul.f32.gmra.mxu0 %v4019
      %v4270 = vpop.f32.mrf.mxu0
      %v4271 = vadd.f32 0.0, %v4270
      %4272 = vmatmul.f32.gmra.mxu0 %v4021
      %v4273 = vpop.f32.mrf.mxu0
      %v4274 = vadd.f32 0.0, %v4273
      %4275 = vmatmul.f32.gmra.mxu0 %v4023
      %v4276 = vpop.f32.mrf.mxu0
      %v4277 = vadd.f32 0.0, %v4276
      %4278 = vmatmul.f32.gmra.mxu0 %v4025
      %v4279 = vpop.f32.mrf.mxu0
      %v4280 = vadd.f32 0.0, %v4279
      %4281 = vmatmul.f32.gmra.mxu0 %v4027
      %v4282 = vpop.f32.mrf.mxu0
      %v4283 = vadd.f32 0.0, %v4282
      %4284 = vmatmul.f32.gmra.mxu0 %v4029
      %v4285 = vpop.f32.mrf.mxu0
      %v4286 = vadd.f32 0.0, %v4285
      %4287 = vmatmul.f32.gmra.mxu0 %v4031
      %v4288 = vpop.f32.mrf.mxu0
      %v4289 = vadd.f32 0.0, %v4288
      %4290 = vmatmul.f32.gmra.mxu0 %v4033
      %v4291 = vpop.f32.mrf.mxu0
      %v4292 = vadd.f32 0.0, %v4291
      %4293 = vmatmul.f32.gmra.mxu0 %v4035
      %v4294 = vpop.f32.mrf.mxu0
      %v4295 = vadd.f32 0.0, %v4294
      %4296 = vmatmul.f32.gmra.mxu0 %v4037
      %v4297 = vpop.f32.mrf.mxu0
      %v4298 = vadd.f32 0.0, %v4297
      %4299 = vmatmul.f32.gmra.mxu0 %v4039
      %v4300 = vpop.f32.mrf.mxu0
      %v4301 = vadd.f32 0.0, %v4300
      %4302 = vmatmul.f32.gmra.mxu0 %v4041
      %v4303 = vpop.f32.mrf.mxu0
      %v4304 = vadd.f32 0.0, %v4303
      %4305 = vmatmul.f32.gmra.mxu0 %v4195
      %v4306 = vpop.f32.mrf.mxu0
      %v4307 = vadd.f32 0.0, %v4306
      %4308 = vmatmul.f32.gmra.mxu0 %v4197
      %v4309 = vpop.f32.mrf.mxu0
      %v4310 = vadd.f32 0.0, %v4309
      %4311 = vdwg.mxu0
      %v4312 = vadd.f32 %v4156, %v4217
      %v4313 = vadd.f32 %v4157, %v4220
      %v4314 = vadd.f32 %v4158, %v4223
      %v4315 = vadd.f32 %v4159, %v4226
      %v4316 = vadd.f32 %v4160, %v4229
      %v4317 = vadd.f32 %v4161, %v4232
      %v4318 = vadd.f32 %v4162, %v4235
      %v4319 = vadd.f32 %v4163, %v4238
      %v4320 = vadd.f32 %v4164, %v4241
      %v4321 = vadd.f32 %v4165, %v4244
      %v4322 = vadd.f32 %v4166, %v4247
      %v4323 = vadd.f32 %v4167, %v4250
      %v4324 = vadd.f32 %v4168, %v4253
      %v4325 = vadd.f32 %v4169, %v4256
      %v4326 = vadd.f32 %v4170, %v4259
      %v4327 = vadd.f32 %v4171, %v4262
      %v4328 = vadd.f32 %v4172, %v4265
      %v4329 = vadd.f32 %v4173, %v4268
      %v4330 = vadd.f32 %v4174, %v4271
      %v4331 = vadd.f32 %v4175, %v4274
      %v4332 = vadd.f32 %v4176, %v4277
      %v4333 = vadd.f32 %v4177, %v4280
      %v4334 = vadd.f32 %v4178, %v4283
      %v4335 = vadd.f32 %v4179, %v4286
      %v4336 = vadd.f32 %v4180, %v4289
      %v4337 = vadd.f32 %v4181, %v4292
      %v4338 = vadd.f32 %v4182, %v4295
      %v4339 = vadd.f32 %v4183, %v4298
      %v4340 = vadd.f32 %v4184, %v4301
      %v4341 = vadd.f32 %v4185, %v4304
      %v4342 = vadd.f32 %v4186, %v4307
      %v4343 = vadd.f32 %v4187, %v4310
      %s4344 = scalar_lea.vmem %s5, 56
      %v4345 = vld [vmem:[%s4344] sm:$0xff]
      %v4346 = vsel %vm1880, %v4193, %v1881
      %v4347 = vsel %vm1333, %v4346, 0
      %4349 = vmatpush.msra.mxu0 0.0
      %4350 = vmatpush.msra.mxu0 0.0
      %4351 = vmatpush.msra.mxu0 0.0
      %4352 = vmatpush.msra.mxu0 0.0
      %4353 = vmatpush.msra.mxu0 0.0
      %4354 = vmatpush.msra.mxu0 0.0
      %4355 = vmatpush.msra.mxu0 0.0
      %4356 = vmatpush.msra.mxu0 0.0
      %4357 = vmatpush.msra.mxu0 0.0
      %4358 = vmatpush.msra.mxu0 0.0
      %4359 = vmatpush.msra.mxu0 0.0
      %4360 = vmatpush.msra.mxu0 0.0
      %4361 = vmatpush.msra.mxu0 0.0
      %4362 = vmatpush.msra.mxu0 0.0
      %4363 = vmatpush.msra.mxu0 0.0
      %4364 = vmatpush.msra.mxu0 %v4345
      %4365 = vmatmul.f32.gmra.mxu0 %v3987
      %v4366 = vpop.f32.mrf.mxu0
      %v4367 = vadd.f32 0.0, %v4366
      %4368 = vmatmul.f32.gmra.mxu0 %v3989
      %v4369 = vpop.f32.mrf.mxu0
      %v4370 = vadd.f32 0.0, %v4369
      %4371 = vmatmul.f32.gmra.mxu0 %v3991
      %v4372 = vpop.f32.mrf.mxu0
      %v4373 = vadd.f32 0.0, %v4372
      %4374 = vmatmul.f32.gmra.mxu0 %v3993
      %v4375 = vpop.f32.mrf.mxu0
      %v4376 = vadd.f32 0.0, %v4375
      %4377 = vmatmul.f32.gmra.mxu0 %v3995
      %v4378 = vpop.f32.mrf.mxu0
      %v4379 = vadd.f32 0.0, %v4378
      %4380 = vmatmul.f32.gmra.mxu0 %v3997
      %v4381 = vpop.f32.mrf.mxu0
      %v4382 = vadd.f32 0.0, %v4381
      %4383 = vmatmul.f32.gmra.mxu0 %v3999
      %v4384 = vpop.f32.mrf.mxu0
      %v4385 = vadd.f32 0.0, %v4384
      %4386 = vmatmul.f32.gmra.mxu0 %v4001
      %v4387 = vpop.f32.mrf.mxu0
      %v4388 = vadd.f32 0.0, %v4387
      %4389 = vmatmul.f32.gmra.mxu0 %v4003
      %v4390 = vpop.f32.mrf.mxu0
      %v4391 = vadd.f32 0.0, %v4390
      %4392 = vmatmul.f32.gmra.mxu0 %v4005
      %v4393 = vpop.f32.mrf.mxu0
      %v4394 = vadd.f32 0.0, %v4393
      %4395 = vmatmul.f32.gmra.mxu0 %v4007
      %v4396 = vpop.f32.mrf.mxu0
      %v4397 = vadd.f32 0.0, %v4396
      %4398 = vmatmul.f32.gmra.mxu0 %v4009
      %v4399 = vpop.f32.mrf.mxu0
      %v4400 = vadd.f32 0.0, %v4399
      %4401 = vmatmul.f32.gmra.mxu0 %v4011
      %v4402 = vpop.f32.mrf.mxu0
      %v4403 = vadd.f32 0.0, %v4402
      %4404 = vmatmul.f32.gmra.mxu0 %v4013
      %v4405 = vpop.f32.mrf.mxu0
      %v4406 = vadd.f32 0.0, %v4405
      %4407 = vmatmul.f32.gmra.mxu0 %v4015
      %v4408 = vpop.f32.mrf.mxu0
      %v4409 = vadd.f32 0.0, %v4408
      %4410 = vmatmul.f32.gmra.mxu0 %v4017
      %v4411 = vpop.f32.mrf.mxu0
      %v4412 = vadd.f32 0.0, %v4411
      %4413 = vmatmul.f32.gmra.mxu0 %v4019
      %v4414 = vpop.f32.mrf.mxu0
      %v4415 = vadd.f32 0.0, %v4414
      %4416 = vmatmul.f32.gmra.mxu0 %v4021
      %v4417 = vpop.f32.mrf.mxu0
      %v4418 = vadd.f32 0.0, %v4417
      %4419 = vmatmul.f32.gmra.mxu0 %v4023
      %v4420 = vpop.f32.mrf.mxu0
      %v4421 = vadd.f32 0.0, %v4420
      %4422 = vmatmul.f32.gmra.mxu0 %v4025
      %v4423 = vpop.f32.mrf.mxu0
      %v4424 = vadd.f32 0.0, %v4423
      %4425 = vmatmul.f32.gmra.mxu0 %v4027
      %v4426 = vpop.f32.mrf.mxu0
      %v4427 = vadd.f32 0.0, %v4426
      %4428 = vmatmul.f32.gmra.mxu0 %v4029
      %v4429 = vpop.f32.mrf.mxu0
      %v4430 = vadd.f32 0.0, %v4429
      %4431 = vmatmul.f32.gmra.mxu0 %v4031
      %v4432 = vpop.f32.mrf.mxu0
      %v4433 = vadd.f32 0.0, %v4432
      %4434 = vmatmul.f32.gmra.mxu0 %v4033
      %v4435 = vpop.f32.mrf.mxu0
      %v4436 = vadd.f32 0.0, %v4435
      %4437 = vmatmul.f32.gmra.mxu0 %v4035
      %v4438 = vpop.f32.mrf.mxu0
      %v4439 = vadd.f32 0.0, %v4438
      %4440 = vmatmul.f32.gmra.mxu0 %v4037
      %v4441 = vpop.f32.mrf.mxu0
      %v4442 = vadd.f32 0.0, %v4441
      %4443 = vmatmul.f32.gmra.mxu0 %v4039
      %v4444 = vpop.f32.mrf.mxu0
      %v4445 = vadd.f32 0.0, %v4444
      %4446 = vmatmul.f32.gmra.mxu0 %v4041
      %v4447 = vpop.f32.mrf.mxu0
      %v4448 = vadd.f32 0.0, %v4447
      %4449 = vmatmul.f32.gmra.mxu0 %v4195
      %v4450 = vpop.f32.mrf.mxu0
      %v4451 = vadd.f32 0.0, %v4450
      %4452 = vmatmul.f32.gmra.mxu0 %v4197
      %v4453 = vpop.f32.mrf.mxu0
      %v4454 = vadd.f32 0.0, %v4453
      %4455 = vmatmul.f32.gmra.mxu0 %v4347
      %v4456 = vpop.f32.mrf.mxu0
      %v4457 = vadd.f32 0.0, %v4456
      %4458 = vmatmul.f32.gmra.mxu0 %v1945
      %v4459 = vpop.f32.mrf.mxu0
      %v4460 = vadd.f32 0.0, %v4459
      %4461 = vdwg.mxu0
      %v4462 = vadd.f32 %v4312, %v4367
      %v4463 = vadd.f32 %v4313, %v4370
      %v4464 = vadd.f32 %v4314, %v4373
      %v4465 = vadd.f32 %v4315, %v4376
      %v4466 = vadd.f32 %v4316, %v4379
      %v4467 = vadd.f32 %v4317, %v4382
      %v4468 = vadd.f32 %v4318, %v4385
      %v4469 = vadd.f32 %v4319, %v4388
      %v4470 = vadd.f32 %v4320, %v4391
      %v4471 = vadd.f32 %v4321, %v4394
      %v4472 = vadd.f32 %v4322, %v4397
      %v4473 = vadd.f32 %v4323, %v4400
      %v4474 = vadd.f32 %v4324, %v4403
      %v4475 = vadd.f32 %v4325, %v4406
      %v4476 = vadd.f32 %v4326, %v4409
      %v4477 = vadd.f32 %v4327, %v4412
      %v4478 = vadd.f32 %v4328, %v4415
      %v4479 = vadd.f32 %v4329, %v4418
      %v4480 = vadd.f32 %v4330, %v4421
      %v4481 = vadd.f32 %v4331, %v4424
      %v4482 = vadd.f32 %v4332, %v4427
      %v4483 = vadd.f32 %v4333, %v4430
      %v4484 = vadd.f32 %v4334, %v4433
      %v4485 = vadd.f32 %v4335, %v4436
      %v4486 = vadd.f32 %v4336, %v4439
      %v4487 = vadd.f32 %v4337, %v4442
      %v4488 = vadd.f32 %v4338, %v4445
      %v4489 = vadd.f32 %v4339, %v4448
      %v4490 = vadd.f32 %v4340, %v4451
      %v4491 = vadd.f32 %v4341, %v4454
      %v4492 = vadd.f32 %v4342, %v4457
      %v4493 = vadd.f32 %v4343, %v4460
      %v4494 = vmul.f32 %v3210, %v883
      %v4495 = vmul.f32 %v3211, %v884
      %v4496 = vmul.f32 %v3212, %v885
      %v4497 = vmul.f32 %v3213, %v886
      %v4498 = vmul.f32 %v3214, %v887
      %v4499 = vmul.f32 %v3215, %v888
      %v4500 = vmul.f32 %v3216, %v889
      %v4501 = vmul.f32 %v3217, %v890
      %v4502 = vmul.f32 %v3218, %v891
      %v4503 = vmul.f32 %v3219, %v892
      %v4504 = vmul.f32 %v3220, %v893
      %v4505 = vmul.f32 %v3221, %v894
      %v4506 = vmul.f32 %v3222, %v895
      %v4507 = vmul.f32 %v3223, %v896
      %v4508 = vmul.f32 %v3224, %v897
      %v4509 = vmul.f32 %v3225, %v898
      %v4510 = vmul.f32 %v3226, %v899
      %v4511 = vmul.f32 %v3227, %v900
      %v4512 = vmul.f32 %v3228, %v901
      %v4513 = vmul.f32 %v3229, %v902
      %v4514 = vmul.f32 %v3230, %v903
      %v4515 = vmul.f32 %v3231, %v904
      %v4516 = vmul.f32 %v3232, %v905
      %v4517 = vmul.f32 %v3233, %v906
      %v4518 = vmul.f32 %v3234, %v907
      %v4519 = vmul.f32 %v3235, %v908
      %v4520 = vmul.f32 %v3236, %v909
      %v4521 = vmul.f32 %v3237, %v910
      %v4522 = vmul.f32 %v3238, %v911
      %v4523 = vmul.f32 %v3239, %v912
      %v4524 = vmul.f32 %v3240, %v913
      %v4525 = vmul.f32 %v3241, %v914
      %v4558 = vrot.slane %v4494, 7
      %v4559 = vrot.slane %v4495, 7
      %v4560 = vsel %vm1262, %v4558, %v4559
      %v4561 = vrot.slane %v4496, 7
      %v4562 = vsel %vm1262, %v4559, %v4561
      %v4563 = vrot.slane %v4497, 7
      %v4564 = vsel %vm1262, %v4561, %v4563
      %v4565 = vrot.slane %v4498, 7
      %v4566 = vsel %vm1262, %v4563, %v4565
      %v4567 = vrot.slane %v4499, 7
      %v4568 = vsel %vm1262, %v4565, %v4567
      %v4569 = vrot.slane %v4500, 7
      %v4570 = vsel %vm1262, %v4567, %v4569
      %v4571 = vrot.slane %v4501, 7
      %v4572 = vsel %vm1262, %v4569, %v4571
      %v4573 = vrot.slane %v4502, 7
      %v4574 = vsel %vm1262, %v4571, %v4573
      %v4575 = vrot.slane %v4503, 7
      %v4576 = vsel %vm1262, %v4573, %v4575
      %v4577 = vrot.slane %v4504, 7
      %v4578 = vsel %vm1262, %v4575, %v4577
      %v4579 = vrot.slane %v4505, 7
      %v4580 = vsel %vm1262, %v4577, %v4579
      %v4581 = vrot.slane %v4506, 7
      %v4582 = vsel %vm1262, %v4579, %v4581
      %v4583 = vrot.slane %v4507, 7
      %v4584 = vsel %vm1262, %v4581, %v4583
      %v4585 = vrot.slane %v4508, 7
      %v4586 = vsel %vm1262, %v4583, %v4585
      %v4587 = vrot.slane %v4509, 7
      %v4588 = vsel %vm1262, %v4585, %v4587
      %v4589 = vrot.slane %v4510, 7
      %v4590 = vsel %vm1262, %v4587, %v4589
      %v4591 = vrot.slane %v4511, 7
      %v4592 = vsel %vm1262, %v4589, %v4591
      %v4593 = vrot.slane %v4512, 7
      %v4594 = vsel %vm1262, %v4591, %v4593
      %v4595 = vrot.slane %v4513, 7
      %v4596 = vsel %vm1262, %v4593, %v4595
      %v4597 = vrot.slane %v4514, 7
      %v4598 = vsel %vm1262, %v4595, %v4597
      %v4599 = vrot.slane %v4515, 7
      %v4600 = vsel %vm1262, %v4597, %v4599
      %v4601 = vrot.slane %v4516, 7
      %v4602 = vsel %vm1262, %v4599, %v4601
      %v4603 = vrot.slane %v4517, 7
      %v4604 = vsel %vm1262, %v4601, %v4603
      %v4605 = vrot.slane %v4518, 7
      %v4606 = vsel %vm1262, %v4603, %v4605
      %v4607 = vrot.slane %v4519, 7
      %v4608 = vsel %vm1262, %v4605, %v4607
      %v4609 = vrot.slane %v4520, 7
      %v4610 = vsel %vm1262, %v4607, %v4609
      %v4611 = vrot.slane %v4521, 7
      %v4612 = vsel %vm1262, %v4609, %v4611
      %v4613 = vrot.slane %v4522, 7
      %v4614 = vsel %vm1262, %v4611, %v4613
      %v4615 = vrot.slane %v4523, 7
      %v4616 = vsel %vm1262, %v4613, %v4615
      %v4617 = vrot.slane %v4524, 7
      %v4618 = vsel %vm1262, %v4615, %v4617
      %v4619 = vrot.slane %v4525, 7
      %v4620 = vsel %vm1262, %v4617, %v4619
      %v4623 = vsel %vm1262, 0.0, %v4558
      %v4624 = vsel %vm1262, %v4619, 0.0
      %s4625 = scalar_lea.vmem %s5, 16
      %v4626 = vld [vmem:[%s4625] sm:$0xff]
      %v4628 = vrot.slane %v4623, 2
      %v4629 = vsel %vm2594, %v2595, %v4628
      %v4630 = vrot.slane %v4560, 2
      %v4631 = vsel %vm2594, %v4628, %v4630
      %v4632 = vrot.slane %v4562, 2
      %v4633 = vsel %vm2594, %v4630, %v4632
      %v4634 = vrot.slane %v4564, 2
      %v4635 = vsel %vm2594, %v4632, %v4634
      %v4636 = vrot.slane %v4566, 2
      %v4637 = vsel %vm2594, %v4634, %v4636
      %v4638 = vrot.slane %v4568, 2
      %v4639 = vsel %vm2594, %v4636, %v4638
      %v4640 = vrot.slane %v4570, 2
      %v4641 = vsel %vm2594, %v4638, %v4640
      %v4642 = vrot.slane %v4572, 2
      %v4643 = vsel %vm2594, %v4640, %v4642
      %v4644 = vrot.slane %v4574, 2
      %v4645 = vsel %vm2594, %v4642, %v4644
      %v4646 = vrot.slane %v4576, 2
      %v4647 = vsel %vm2594, %v4644, %v4646
      %v4648 = vrot.slane %v4578, 2
      %v4649 = vsel %vm2594, %v4646, %v4648
      %v4650 = vrot.slane %v4580, 2
      %v4651 = vsel %vm2594, %v4648, %v4650
      %v4652 = vrot.slane %v4582, 2
      %v4653 = vsel %vm2594, %v4650, %v4652
      %v4654 = vrot.slane %v4584, 2
      %v4655 = vsel %vm2594, %v4652, %v4654
      %v4656 = vrot.slane %v4586, 2
      %v4657 = vsel %vm2594, %v4654, %v4656
      %v4658 = vrot.slane %v4588, 2
      %v4659 = vsel %vm2594, %v4656, %v4658
      %v4660 = vrot.slane %v4590, 2
      %v4661 = vsel %vm2594, %v4658, %v4660
      %v4662 = vrot.slane %v4592, 2
      %v4663 = vsel %vm2594, %v4660, %v4662
      %v4664 = vrot.slane %v4594, 2
      %v4665 = vsel %vm2594, %v4662, %v4664
      %v4666 = vrot.slane %v4596, 2
      %v4667 = vsel %vm2594, %v4664, %v4666
      %v4668 = vrot.slane %v4598, 2
      %v4669 = vsel %vm2594, %v4666, %v4668
      %v4670 = vrot.slane %v4600, 2
      %v4671 = vsel %vm2594, %v4668, %v4670
      %v4672 = vrot.slane %v4602, 2
      %v4673 = vsel %vm2594, %v4670, %v4672
      %v4674 = vrot.slane %v4604, 2
      %v4675 = vsel %vm2594, %v4672, %v4674
      %v4676 = vrot.slane %v4606, 2
      %v4677 = vsel %vm2594, %v4674, %v4676
      %v4678 = vrot.slane %v4608, 2
      %v4679 = vsel %vm2594, %v4676, %v4678
      %v4680 = vrot.slane %v4610, 2
      %v4681 = vsel %vm2594, %v4678, %v4680
      %v4682 = vrot.slane %v4612, 2
      %v4683 = vsel %vm2594, %v4680, %v4682
      %v4684 = vrot.slane %v4614, 2
      %v4685 = vsel %vm2594, %v4682, %v4684
      %v4686 = vrot.slane %v4616, 2
      %v4687 = vsel %vm2594, %v4684, %v4686
      %v4688 = vrot.slane %v4618, 2
      %v4689 = vsel %vm2594, %v4686, %v4688
      %v4690 = vsel %vm1333, %v4629, 0
      %v4692 = vsel %vm1333, %v4631, 0
      %v4694 = vsel %vm1333, %v4633, 0
      %v4696 = vsel %vm1333, %v4635, 0
      %v4698 = vsel %vm1333, %v4637, 0
      %v4700 = vsel %vm1333, %v4639, 0
      %v4702 = vsel %vm1333, %v4641, 0
      %v4704 = vsel %vm1333, %v4643, 0
      %v4706 = vsel %vm1333, %v4645, 0
      %v4708 = vsel %vm1333, %v4647, 0
      %v4710 = vsel %vm1333, %v4649, 0
      %v4712 = vsel %vm1333, %v4651, 0
      %v4714 = vsel %vm1333, %v4653, 0
      %v4716 = vsel %vm1333, %v4655, 0
      %v4718 = vsel %vm1333, %v4657, 0
      %v4720 = vsel %vm1333, %v4659, 0
      %v4722 = vsel %vm1333, %v4661, 0
      %v4724 = vsel %vm1333, %v4663, 0
      %v4726 = vsel %vm1333, %v4665, 0
      %v4728 = vsel %vm1333, %v4667, 0
      %v4730 = vsel %vm1333, %v4669, 0
      %v4732 = vsel %vm1333, %v4671, 0
      %v4734 = vsel %vm1333, %v4673, 0
      %v4736 = vsel %vm1333, %v4675, 0
      %v4738 = vsel %vm1333, %v4677, 0
      %v4740 = vsel %vm1333, %v4679, 0
      %v4742 = vsel %vm1333, %v4681, 0
      %v4744 = vsel %vm1333, %v4683, 0
      %v4746 = vsel %vm1333, %v4685, 0
      %v4748 = vsel %vm1333, %v4687, 0
      %v4750 = vsel %vm1333, %v4689, 0
      %4752 = vmatpush.msra.mxu0 0.0
      %4753 = vmatpush.msra.mxu0 0.0
      %4754 = vmatpush.msra.mxu0 0.0
      %4755 = vmatpush.msra.mxu0 0.0
      %4756 = vmatpush.msra.mxu0 0.0
      %4757 = vmatpush.msra.mxu0 0.0
      %4758 = vmatpush.msra.mxu0 0.0
      %4759 = vmatpush.msra.mxu0 0.0
      %4760 = vmatpush.msra.mxu0 0.0
      %4761 = vmatpush.msra.mxu0 0.0
      %4762 = vmatpush.msra.mxu0 0.0
      %4763 = vmatpush.msra.mxu0 0.0
      %4764 = vmatpush.msra.mxu0 0.0
      %4765 = vmatpush.msra.mxu0 0.0
      %4766 = vmatpush.msra.mxu0 0.0
      %4767 = vmatpush.msra.mxu0 %v4626
      %4768 = vmatmul.f32.gmra.mxu0 %v2659
      %v4769 = vpop.f32.mrf.mxu0
      %v4770 = vadd.f32 0.0, %v4769
      %4771 = vmatmul.f32.gmra.mxu0 %v4690
      %v4772 = vpop.f32.mrf.mxu0
      %v4773 = vadd.f32 0.0, %v4772
      %4774 = vmatmul.f32.gmra.mxu0 %v4692
      %v4775 = vpop.f32.mrf.mxu0
      %v4776 = vadd.f32 0.0, %v4775
      %4777 = vmatmul.f32.gmra.mxu0 %v4694
      %v4778 = vpop.f32.mrf.mxu0
      %v4779 = vadd.f32 0.0, %v4778
      %4780 = vmatmul.f32.gmra.mxu0 %v4696
      %v4781 = vpop.f32.mrf.mxu0
      %v4782 = vadd.f32 0.0, %v4781
      %4783 = vmatmul.f32.gmra.mxu0 %v4698
      %v4784 = vpop.f32.mrf.mxu0
      %v4785 = vadd.f32 0.0, %v4784
      %4786 = vmatmul.f32.gmra.mxu0 %v4700
      %v4787 = vpop.f32.mrf.mxu0
      %v4788 = vadd.f32 0.0, %v4787
      %4789 = vmatmul.f32.gmra.mxu0 %v4702
      %v4790 = vpop.f32.mrf.mxu0
      %v4791 = vadd.f32 0.0, %v4790
      %4792 = vmatmul.f32.gmra.mxu0 %v4704
      %v4793 = vpop.f32.mrf.mxu0
      %v4794 = vadd.f32 0.0, %v4793
      %4795 = vmatmul.f32.gmra.mxu0 %v4706
      %v4796 = vpop.f32.mrf.mxu0
      %v4797 = vadd.f32 0.0, %v4796
      %4798 = vmatmul.f32.gmra.mxu0 %v4708
      %v4799 = vpop.f32.mrf.mxu0
      %v4800 = vadd.f32 0.0, %v4799
      %4801 = vmatmul.f32.gmra.mxu0 %v4710
      %v4802 = vpop.f32.mrf.mxu0
      %v4803 = vadd.f32 0.0, %v4802
      %4804 = vmatmul.f32.gmra.mxu0 %v4712
      %v4805 = vpop.f32.mrf.mxu0
      %v4806 = vadd.f32 0.0, %v4805
      %4807 = vmatmul.f32.gmra.mxu0 %v4714
      %v4808 = vpop.f32.mrf.mxu0
      %v4809 = vadd.f32 0.0, %v4808
      %4810 = vmatmul.f32.gmra.mxu0 %v4716
      %v4811 = vpop.f32.mrf.mxu0
      %v4812 = vadd.f32 0.0, %v4811
      %4813 = vmatmul.f32.gmra.mxu0 %v4718
      %v4814 = vpop.f32.mrf.mxu0
      %v4815 = vadd.f32 0.0, %v4814
      %4816 = vmatmul.f32.gmra.mxu0 %v4720
      %v4817 = vpop.f32.mrf.mxu0
      %v4818 = vadd.f32 0.0, %v4817
      %4819 = vmatmul.f32.gmra.mxu0 %v4722
      %v4820 = vpop.f32.mrf.mxu0
      %v4821 = vadd.f32 0.0, %v4820
      %4822 = vmatmul.f32.gmra.mxu0 %v4724
      %v4823 = vpop.f32.mrf.mxu0
      %v4824 = vadd.f32 0.0, %v4823
      %4825 = vmatmul.f32.gmra.mxu0 %v4726
      %v4826 = vpop.f32.mrf.mxu0
      %v4827 = vadd.f32 0.0, %v4826
      %4828 = vmatmul.f32.gmra.mxu0 %v4728
      %v4829 = vpop.f32.mrf.mxu0
      %v4830 = vadd.f32 0.0, %v4829
      %4831 = vmatmul.f32.gmra.mxu0 %v4730
      %v4832 = vpop.f32.mrf.mxu0
      %v4833 = vadd.f32 0.0, %v4832
      %4834 = vmatmul.f32.gmra.mxu0 %v4732
      %v4835 = vpop.f32.mrf.mxu0
      %v4836 = vadd.f32 0.0, %v4835
      %4837 = vmatmul.f32.gmra.mxu0 %v4734
      %v4838 = vpop.f32.mrf.mxu0
      %v4839 = vadd.f32 0.0, %v4838
      %4840 = vmatmul.f32.gmra.mxu0 %v4736
      %v4841 = vpop.f32.mrf.mxu0
      %v4842 = vadd.f32 0.0, %v4841
      %4843 = vmatmul.f32.gmra.mxu0 %v4738
      %v4844 = vpop.f32.mrf.mxu0
      %v4845 = vadd.f32 0.0, %v4844
      %4846 = vmatmul.f32.gmra.mxu0 %v4740
      %v4847 = vpop.f32.mrf.mxu0
      %v4848 = vadd.f32 0.0, %v4847
      %4849 = vmatmul.f32.gmra.mxu0 %v4742
      %v4850 = vpop.f32.mrf.mxu0
      %v4851 = vadd.f32 0.0, %v4850
      %4852 = vmatmul.f32.gmra.mxu0 %v4744
      %v4853 = vpop.f32.mrf.mxu0
      %v4854 = vadd.f32 0.0, %v4853
      %4855 = vmatmul.f32.gmra.mxu0 %v4746
      %v4856 = vpop.f32.mrf.mxu0
      %v4857 = vadd.f32 0.0, %v4856
      %4858 = vmatmul.f32.gmra.mxu0 %v4748
      %v4859 = vpop.f32.mrf.mxu0
      %v4860 = vadd.f32 0.0, %v4859
      %4861 = vmatmul.f32.gmra.mxu0 %v4750
      %v4862 = vpop.f32.mrf.mxu0
      %v4863 = vadd.f32 0.0, %v4862
      %4864 = vdwg.mxu0
      %v4865 = vadd.f32 %v4462, %v4770
      %v4866 = vadd.f32 %v4463, %v4773
      %v4867 = vadd.f32 %v4464, %v4776
      %v4868 = vadd.f32 %v4465, %v4779
      %v4869 = vadd.f32 %v4466, %v4782
      %v4870 = vadd.f32 %v4467, %v4785
      %v4871 = vadd.f32 %v4468, %v4788
      %v4872 = vadd.f32 %v4469, %v4791
      %v4873 = vadd.f32 %v4470, %v4794
      %v4874 = vadd.f32 %v4471, %v4797
      %v4875 = vadd.f32 %v4472, %v4800
      %v4876 = vadd.f32 %v4473, %v4803
      %v4877 = vadd.f32 %v4474, %v4806
      %v4878 = vadd.f32 %v4475, %v4809
      %v4879 = vadd.f32 %v4476, %v4812
      %v4880 = vadd.f32 %v4477, %v4815
      %v4881 = vadd.f32 %v4478, %v4818
      %v4882 = vadd.f32 %v4479, %v4821
      %v4883 = vadd.f32 %v4480, %v4824
      %v4884 = vadd.f32 %v4481, %v4827
      %v4885 = vadd.f32 %v4482, %v4830
      %v4886 = vadd.f32 %v4483, %v4833
      %v4887 = vadd.f32 %v4484, %v4836
      %v4888 = vadd.f32 %v4485, %v4839
      %v4889 = vadd.f32 %v4486, %v4842
      %v4890 = vadd.f32 %v4487, %v4845
      %v4891 = vadd.f32 %v4488, %v4848
      %v4892 = vadd.f32 %v4489, %v4851
      %v4893 = vadd.f32 %v4490, %v4854
      %v4894 = vadd.f32 %v4491, %v4857
      %v4895 = vadd.f32 %v4492, %v4860
      %v4896 = vadd.f32 %v4493, %v4863
      %s4897 = scalar_lea.vmem %s5, 40
      %v4898 = vld [vmem:[%s4897] sm:$0xff]
      %v4900 = vrot.slane %v4620, 2
      %v4901 = vsel %vm2594, %v4688, %v4900
      %v4902 = vrot.slane %v4624, 2
      %v4903 = vsel %vm2594, %v4900, %v4902
      %v4904 = vsel %vm1333, %v4901, 0
      %v4906 = vsel %vm1333, %v4903, 0
      %4908 = vmatpush.msra.mxu0 0.0
      %4909 = vmatpush.msra.mxu0 0.0
      %4910 = vmatpush.msra.mxu0 0.0
      %4911 = vmatpush.msra.mxu0 0.0
      %4912 = vmatpush.msra.mxu0 0.0
      %4913 = vmatpush.msra.mxu0 0.0
      %4914 = vmatpush.msra.mxu0 0.0
      %4915 = vmatpush.msra.mxu0 0.0
      %4916 = vmatpush.msra.mxu0 0.0
      %4917 = vmatpush.msra.mxu0 0.0
      %4918 = vmatpush.msra.mxu0 0.0
      %4919 = vmatpush.msra.mxu0 0.0
      %4920 = vmatpush.msra.mxu0 0.0
      %4921 = vmatpush.msra.mxu0 0.0
      %4922 = vmatpush.msra.mxu0 0.0
      %4923 = vmatpush.msra.mxu0 %v4898
      %4924 = vmatmul.f32.gmra.mxu0 %v4692
      %v4925 = vpop.f32.mrf.mxu0
      %v4926 = vadd.f32 0.0, %v4925
      %4927 = vmatmul.f32.gmra.mxu0 %v4694
      %v4928 = vpop.f32.mrf.mxu0
      %v4929 = vadd.f32 0.0, %v4928
      %4930 = vmatmul.f32.gmra.mxu0 %v4696
      %v4931 = vpop.f32.mrf.mxu0
      %v4932 = vadd.f32 0.0, %v4931
      %4933 = vmatmul.f32.gmra.mxu0 %v4698
      %v4934 = vpop.f32.mrf.mxu0
      %v4935 = vadd.f32 0.0, %v4934
      %4936 = vmatmul.f32.gmra.mxu0 %v4700
      %v4937 = vpop.f32.mrf.mxu0
      %v4938 = vadd.f32 0.0, %v4937
      %4939 = vmatmul.f32.gmra.mxu0 %v4702
      %v4940 = vpop.f32.mrf.mxu0
      %v4941 = vadd.f32 0.0, %v4940
      %4942 = vmatmul.f32.gmra.mxu0 %v4704
      %v4943 = vpop.f32.mrf.mxu0
      %v4944 = vadd.f32 0.0, %v4943
      %4945 = vmatmul.f32.gmra.mxu0 %v4706
      %v4946 = vpop.f32.mrf.mxu0
      %v4947 = vadd.f32 0.0, %v4946
      %4948 = vmatmul.f32.gmra.mxu0 %v4708
      %v4949 = vpop.f32.mrf.mxu0
      %v4950 = vadd.f32 0.0, %v4949
      %4951 = vmatmul.f32.gmra.mxu0 %v4710
      %v4952 = vpop.f32.mrf.mxu0
      %v4953 = vadd.f32 0.0, %v4952
      %4954 = vmatmul.f32.gmra.mxu0 %v4712
      %v4955 = vpop.f32.mrf.mxu0
      %v4956 = vadd.f32 0.0, %v4955
      %4957 = vmatmul.f32.gmra.mxu0 %v4714
      %v4958 = vpop.f32.mrf.mxu0
      %v4959 = vadd.f32 0.0, %v4958
      %4960 = vmatmul.f32.gmra.mxu0 %v4716
      %v4961 = vpop.f32.mrf.mxu0
      %v4962 = vadd.f32 0.0, %v4961
      %4963 = vmatmul.f32.gmra.mxu0 %v4718
      %v4964 = vpop.f32.mrf.mxu0
      %v4965 = vadd.f32 0.0, %v4964
      %4966 = vmatmul.f32.gmra.mxu0 %v4720
      %v4967 = vpop.f32.mrf.mxu0
      %v4968 = vadd.f32 0.0, %v4967
      %4969 = vmatmul.f32.gmra.mxu0 %v4722
      %v4970 = vpop.f32.mrf.mxu0
      %v4971 = vadd.f32 0.0, %v4970
      %4972 = vmatmul.f32.gmra.mxu0 %v4724
      %v4973 = vpop.f32.mrf.mxu0
      %v4974 = vadd.f32 0.0, %v4973
      %4975 = vmatmul.f32.gmra.mxu0 %v4726
      %v4976 = vpop.f32.mrf.mxu0
      %v4977 = vadd.f32 0.0, %v4976
      %4978 = vmatmul.f32.gmra.mxu0 %v4728
      %v4979 = vpop.f32.mrf.mxu0
      %v4980 = vadd.f32 0.0, %v4979
      %4981 = vmatmul.f32.gmra.mxu0 %v4730
      %v4982 = vpop.f32.mrf.mxu0
      %v4983 = vadd.f32 0.0, %v4982
      %4984 = vmatmul.f32.gmra.mxu0 %v4732
      %v4985 = vpop.f32.mrf.mxu0
      %v4986 = vadd.f32 0.0, %v4985
      %4987 = vmatmul.f32.gmra.mxu0 %v4734
      %v4988 = vpop.f32.mrf.mxu0
      %v4989 = vadd.f32 0.0, %v4988
      %4990 = vmatmul.f32.gmra.mxu0 %v4736
      %v4991 = vpop.f32.mrf.mxu0
      %v4992 = vadd.f32 0.0, %v4991
      %4993 = vmatmul.f32.gmra.mxu0 %v4738
      %v4994 = vpop.f32.mrf.mxu0
      %v4995 = vadd.f32 0.0, %v4994
      %4996 = vmatmul.f32.gmra.mxu0 %v4740
      %v4997 = vpop.f32.mrf.mxu0
      %v4998 = vadd.f32 0.0, %v4997
      %4999 = vmatmul.f32.gmra.mxu0 %v4742
      %v5000 = vpop.f32.mrf.mxu0
      %v5001 = vadd.f32 0.0, %v5000
      %5002 = vmatmul.f32.gmra.mxu0 %v4744
      %v5003 = vpop.f32.mrf.mxu0
      %v5004 = vadd.f32 0.0, %v5003
      %5005 = vmatmul.f32.gmra.mxu0 %v4746
      %v5006 = vpop.f32.mrf.mxu0
      %v5007 = vadd.f32 0.0, %v5006
      %5008 = vmatmul.f32.gmra.mxu0 %v4748
      %v5009 = vpop.f32.mrf.mxu0
      %v5010 = vadd.f32 0.0, %v5009
      %5011 = vmatmul.f32.gmra.mxu0 %v4750
      %v5012 = vpop.f32.mrf.mxu0
      %v5013 = vadd.f32 0.0, %v5012
      %5014 = vmatmul.f32.gmra.mxu0 %v4904
      %v5015 = vpop.f32.mrf.mxu0
      %v5016 = vadd.f32 0.0, %v5015
      %5017 = vmatmul.f32.gmra.mxu0 %v4906
      %v5018 = vpop.f32.mrf.mxu0
      %v5019 = vadd.f32 0.0, %v5018
      %5020 = vdwg.mxu0
      %v5021 = vadd.f32 %v4865, %v4926
      %v5022 = vadd.f32 %v4866, %v4929
      %v5023 = vadd.f32 %v4867, %v4932
      %v5024 = vadd.f32 %v4868, %v4935
      %v5025 = vadd.f32 %v4869, %v4938
      %v5026 = vadd.f32 %v4870, %v4941
      %v5027 = vadd.f32 %v4871, %v4944
      %v5028 = vadd.f32 %v4872, %v4947
      %v5029 = vadd.f32 %v4873, %v4950
      %v5030 = vadd.f32 %v4874, %v4953
      %v5031 = vadd.f32 %v4875, %v4956
      %v5032 = vadd.f32 %v4876, %v4959
      %v5033 = vadd.f32 %v4877, %v4962
      %v5034 = vadd.f32 %v4878, %v4965
      %v5035 = vadd.f32 %v4879, %v4968
      %v5036 = vadd.f32 %v4880, %v4971
      %v5037 = vadd.f32 %v4881, %v4974
      %v5038 = vadd.f32 %v4882, %v4977
      %v5039 = vadd.f32 %v4883, %v4980
      %v5040 = vadd.f32 %v4884, %v4983
      %v5041 = vadd.f32 %v4885, %v4986
      %v5042 = vadd.f32 %v4886, %v4989
      %v5043 = vadd.f32 %v4887, %v4992
      %v5044 = vadd.f32 %v4888, %v4995
      %v5045 = vadd.f32 %v4889, %v4998
      %v5046 = vadd.f32 %v4890, %v5001
      %v5047 = vadd.f32 %v4891, %v5004
      %v5048 = vadd.f32 %v4892, %v5007
      %v5049 = vadd.f32 %v4893, %v5010
      %v5050 = vadd.f32 %v4894, %v5013
      %v5051 = vadd.f32 %v4895, %v5016
      %v5052 = vadd.f32 %v4896, %v5019
      %s5053 = scalar_lea.vmem %s5, 64
      %v5054 = vld [vmem:[%s5053] sm:$0xff]
      %v5055 = vsel %vm2594, %v4902, %v2595
      %v5056 = vsel %vm1333, %v5055, 0
      %5058 = vmatpush.msra.mxu0 0.0
      %5059 = vmatpush.msra.mxu0 0.0
      %5060 = vmatpush.msra.mxu0 0.0
      %5061 = vmatpush.msra.mxu0 0.0
      %5062 = vmatpush.msra.mxu0 0.0
      %5063 = vmatpush.msra.mxu0 0.0
      %5064 = vmatpush.msra.mxu0 0.0
      %5065 = vmatpush.msra.mxu0 0.0
      %5066 = vmatpush.msra.mxu0 0.0
      %5067 = vmatpush.msra.mxu0 0.0
      %5068 = vmatpush.msra.mxu0 0.0
      %5069 = vmatpush.msra.mxu0 0.0
      %5070 = vmatpush.msra.mxu0 0.0
      %5071 = vmatpush.msra.mxu0 0.0
      %5072 = vmatpush.msra.mxu0 0.0
      %5073 = vmatpush.msra.mxu0 %v5054
      %5074 = vmatmul.f32.gmra.mxu0 %v4696
      %v5075 = vpop.f32.mrf.mxu0
      %v5076 = vadd.f32 0.0, %v5075
      %5077 = vmatmul.f32.gmra.mxu0 %v4698
      %v5078 = vpop.f32.mrf.mxu0
      %v5079 = vadd.f32 0.0, %v5078
      %5080 = vmatmul.f32.gmra.mxu0 %v4700
      %v5081 = vpop.f32.mrf.mxu0
      %v5082 = vadd.f32 0.0, %v5081
      %5083 = vmatmul.f32.gmra.mxu0 %v4702
      %v5084 = vpop.f32.mrf.mxu0
      %v5085 = vadd.f32 0.0, %v5084
      %5086 = vmatmul.f32.gmra.mxu0 %v4704
      %v5087 = vpop.f32.mrf.mxu0
      %v5088 = vadd.f32 0.0, %v5087
      %5089 = vmatmul.f32.gmra.mxu0 %v4706
      %v5090 = vpop.f32.mrf.mxu0
      %v5091 = vadd.f32 0.0, %v5090
      %5092 = vmatmul.f32.gmra.mxu0 %v4708
      %v5093 = vpop.f32.mrf.mxu0
      %v5094 = vadd.f32 0.0, %v5093
      %5095 = vmatmul.f32.gmra.mxu0 %v4710
      %v5096 = vpop.f32.mrf.mxu0
      %v5097 = vadd.f32 0.0, %v5096
      %5098 = vmatmul.f32.gmra.mxu0 %v4712
      %v5099 = vpop.f32.mrf.mxu0
      %v5100 = vadd.f32 0.0, %v5099
      %5101 = vmatmul.f32.gmra.mxu0 %v4714
      %v5102 = vpop.f32.mrf.mxu0
      %v5103 = vadd.f32 0.0, %v5102
      %5104 = vmatmul.f32.gmra.mxu0 %v4716
      %v5105 = vpop.f32.mrf.mxu0
      %v5106 = vadd.f32 0.0, %v5105
      %5107 = vmatmul.f32.gmra.mxu0 %v4718
      %v5108 = vpop.f32.mrf.mxu0
      %v5109 = vadd.f32 0.0, %v5108
      %5110 = vmatmul.f32.gmra.mxu0 %v4720
      %v5111 = vpop.f32.mrf.mxu0
      %v5112 = vadd.f32 0.0, %v5111
      %5113 = vmatmul.f32.gmra.mxu0 %v4722
      %v5114 = vpop.f32.mrf.mxu0
      %v5115 = vadd.f32 0.0, %v5114
      %5116 = vmatmul.f32.gmra.mxu0 %v4724
      %v5117 = vpop.f32.mrf.mxu0
      %v5118 = vadd.f32 0.0, %v5117
      %5119 = vmatmul.f32.gmra.mxu0 %v4726
      %v5120 = vpop.f32.mrf.mxu0
      %v5121 = vadd.f32 0.0, %v5120
      %5122 = vmatmul.f32.gmra.mxu0 %v4728
      %v5123 = vpop.f32.mrf.mxu0
      %v5124 = vadd.f32 0.0, %v5123
      %5125 = vmatmul.f32.gmra.mxu0 %v4730
      %v5126 = vpop.f32.mrf.mxu0
      %v5127 = vadd.f32 0.0, %v5126
      %5128 = vmatmul.f32.gmra.mxu0 %v4732
      %v5129 = vpop.f32.mrf.mxu0
      %v5130 = vadd.f32 0.0, %v5129
      %5131 = vmatmul.f32.gmra.mxu0 %v4734
      %v5132 = vpop.f32.mrf.mxu0
      %v5133 = vadd.f32 0.0, %v5132
      %5134 = vmatmul.f32.gmra.mxu0 %v4736
      %v5135 = vpop.f32.mrf.mxu0
      %v5136 = vadd.f32 0.0, %v5135
      %5137 = vmatmul.f32.gmra.mxu0 %v4738
      %v5138 = vpop.f32.mrf.mxu0
      %v5139 = vadd.f32 0.0, %v5138
      %5140 = vmatmul.f32.gmra.mxu0 %v4740
      %v5141 = vpop.f32.mrf.mxu0
      %v5142 = vadd.f32 0.0, %v5141
      %5143 = vmatmul.f32.gmra.mxu0 %v4742
      %v5144 = vpop.f32.mrf.mxu0
      %v5145 = vadd.f32 0.0, %v5144
      %5146 = vmatmul.f32.gmra.mxu0 %v4744
      %v5147 = vpop.f32.mrf.mxu0
      %v5148 = vadd.f32 0.0, %v5147
      %5149 = vmatmul.f32.gmra.mxu0 %v4746
      %v5150 = vpop.f32.mrf.mxu0
      %v5151 = vadd.f32 0.0, %v5150
      %5152 = vmatmul.f32.gmra.mxu0 %v4748
      %v5153 = vpop.f32.mrf.mxu0
      %v5154 = vadd.f32 0.0, %v5153
      %5155 = vmatmul.f32.gmra.mxu0 %v4750
      %v5156 = vpop.f32.mrf.mxu0
      %v5157 = vadd.f32 0.0, %v5156
      %5158 = vmatmul.f32.gmra.mxu0 %v4904
      %v5159 = vpop.f32.mrf.mxu0
      %v5160 = vadd.f32 0.0, %v5159
      %5161 = vmatmul.f32.gmra.mxu0 %v4906
      %v5162 = vpop.f32.mrf.mxu0
      %v5163 = vadd.f32 0.0, %v5162
      %5164 = vmatmul.f32.gmra.mxu0 %v5056
      %v5165 = vpop.f32.mrf.mxu0
      %v5166 = vadd.f32 0.0, %v5165
      %5167 = vmatmul.f32.gmra.mxu0 %v2659
      %v5168 = vpop.f32.mrf.mxu0
      %v5169 = vadd.f32 0.0, %v5168
      %5170 = vdwg.mxu0
      %v5171 = vadd.f32 %v5021, %v5076
      %v5172 = vadd.f32 %v5022, %v5079
      %v5173 = vadd.f32 %v5023, %v5082
      %v5174 = vadd.f32 %v5024, %v5085
      %v5175 = vadd.f32 %v5025, %v5088
      %v5176 = vadd.f32 %v5026, %v5091
      %v5177 = vadd.f32 %v5027, %v5094
      %v5178 = vadd.f32 %v5028, %v5097
      %v5179 = vadd.f32 %v5029, %v5100
      %v5180 = vadd.f32 %v5030, %v5103
      %v5181 = vadd.f32 %v5031, %v5106
      %v5182 = vadd.f32 %v5032, %v5109
      %v5183 = vadd.f32 %v5033, %v5112
      %v5184 = vadd.f32 %v5034, %v5115
      %v5185 = vadd.f32 %v5035, %v5118
      %v5186 = vadd.f32 %v5036, %v5121
      %v5187 = vadd.f32 %v5037, %v5124
      %v5188 = vadd.f32 %v5038, %v5127
      %v5189 = vadd.f32 %v5039, %v5130
      %v5190 = vadd.f32 %v5040, %v5133
      %v5191 = vadd.f32 %v5041, %v5136
      %v5192 = vadd.f32 %v5042, %v5139
      %v5193 = vadd.f32 %v5043, %v5142
      %v5194 = vadd.f32 %v5044, %v5145
      %v5195 = vadd.f32 %v5045, %v5148
      %v5196 = vadd.f32 %v5046, %v5151
      %v5197 = vadd.f32 %v5047, %v5154
      %v5198 = vadd.f32 %v5048, %v5157
      %v5199 = vadd.f32 %v5049, %v5160
      %v5200 = vadd.f32 %v5050, %v5163
      %v5201 = vadd.f32 %v5051, %v5166
      %v5202 = vadd.f32 %v5052, %v5169
      %v5203 = vld [vmem:[%s7] sm:$0xff]
      %v5204 = vld [vmem:[%s7 + $0x8] sm:$0xff]
      %v5205 = vld [vmem:[%s7 + $0x10] sm:$0xff]
      %v5206 = vld [vmem:[%s7 + $0x18] sm:$0xff]
      %v5207 = vld [vmem:[%s7 + $0x20] sm:$0xff]
      %v5208 = vld [vmem:[%s7 + $0x28] sm:$0xff]
      %v5209 = vld [vmem:[%s7 + $0x30] sm:$0xff]
      %v5210 = vld [vmem:[%s7 + $0x38] sm:$0xff]
      %v5211 = vld [vmem:[%s7 + $0x40] sm:$0xff]
      %v5212 = vld [vmem:[%s7 + $0x48] sm:$0xff]
      %v5213 = vld [vmem:[%s7 + $0x50] sm:$0xff]
      %v5214 = vld [vmem:[%s7 + $0x58] sm:$0xff]
      %v5215 = vld [vmem:[%s7 + $0x60] sm:$0xff]
      %v5216 = vld [vmem:[%s7 + $0x68] sm:$0xff]
      %v5217 = vld [vmem:[%s7 + $0x70] sm:$0xff]
      %v5218 = vld [vmem:[%s7 + $0x78] sm:$0xff]
      %v5219 = vld [vmem:[%s6] sm:$0x1]
      %v5221 = vperm.slane %v5219, 0
      %5223 = vmatpush.msra.mxu0 %v5186
      %5224 = vmatpush.msra.mxu0 %v5185
      %5225 = vmatpush.msra.mxu0 %v5184
      %5226 = vmatpush.msra.mxu0 %v5183
      %5227 = vmatpush.msra.mxu0 %v5182
      %5228 = vmatpush.msra.mxu0 %v5181
      %5229 = vmatpush.msra.mxu0 %v5180
      %5230 = vmatpush.msra.mxu0 %v5179
      %5231 = vmatpush.msra.mxu0 %v5178
      %5232 = vmatpush.msra.mxu0 %v5177
      %5233 = vmatpush.msra.mxu0 %v5176
      %5234 = vmatpush.msra.mxu0 %v5175
      %5235 = vmatpush.msra.mxu0 %v5174
      %5236 = vmatpush.msra.mxu0 %v5173
      %5237 = vmatpush.msra.mxu0 %v5172
      %5238 = vmatpush.msra.mxu0 %v5171
      %5239 = vmatmul.f32.gmra.mxu0 %v5203
      %v5240 = vpop.f32.mrf.mxu0
      %v5241 = vadd.f32 %v5221, %v5240
      %5242 = vmatmul.f32.gmra.mxu0 %v5205
      %v5243 = vpop.f32.mrf.mxu0
      %v5244 = vadd.f32 %v5221, %v5243
      %5245 = vmatmul.f32.gmra.mxu0 %v5207
      %v5246 = vpop.f32.mrf.mxu0
      %v5247 = vadd.f32 %v5221, %v5246
      %5248 = vmatmul.f32.gmra.mxu0 %v5209
      %v5249 = vpop.f32.mrf.mxu0
      %v5250 = vadd.f32 %v5221, %v5249
      %5251 = vmatmul.f32.gmra.mxu0 %v5211
      %v5252 = vpop.f32.mrf.mxu0
      %v5253 = vadd.f32 %v5221, %v5252
      %5254 = vmatmul.f32.gmra.mxu0 %v5213
      %v5255 = vpop.f32.mrf.mxu0
      %v5256 = vadd.f32 %v5221, %v5255
      %5257 = vmatmul.f32.gmra.mxu0 %v5215
      %v5258 = vpop.f32.mrf.mxu0
      %v5259 = vadd.f32 %v5221, %v5258
      %5260 = vmatmul.f32.gmra.mxu0 %v5217
      %v5261 = vpop.f32.mrf.mxu0
      %v5262 = vadd.f32 %v5221, %v5261
      %5263 = vdwg.mxu0
      %5264 = vmatpush.msra.mxu0 %v5202
      %5265 = vmatpush.msra.mxu0 %v5201
      %5266 = vmatpush.msra.mxu0 %v5200
      %5267 = vmatpush.msra.mxu0 %v5199
      %5268 = vmatpush.msra.mxu0 %v5198
      %5269 = vmatpush.msra.mxu0 %v5197
      %5270 = vmatpush.msra.mxu0 %v5196
      %5271 = vmatpush.msra.mxu0 %v5195
      %5272 = vmatpush.msra.mxu0 %v5194
      %5273 = vmatpush.msra.mxu0 %v5193
      %5274 = vmatpush.msra.mxu0 %v5192
      %5275 = vmatpush.msra.mxu0 %v5191
      %5276 = vmatpush.msra.mxu0 %v5190
      %5277 = vmatpush.msra.mxu0 %v5189
      %5278 = vmatpush.msra.mxu0 %v5188
      %5279 = vmatpush.msra.mxu0 %v5187
      %5280 = vmatmul.f32.gmra.mxu0 %v5204
      %v5281 = vpop.f32.mrf.mxu0
      %v5282 = vadd.f32 %v5241, %v5281
      %5283 = vmatmul.f32.gmra.mxu0 %v5206
      %v5284 = vpop.f32.mrf.mxu0
      %v5285 = vadd.f32 %v5244, %v5284
      %5286 = vmatmul.f32.gmra.mxu0 %v5208
      %v5287 = vpop.f32.mrf.mxu0
      %v5288 = vadd.f32 %v5247, %v5287
      %5289 = vmatmul.f32.gmra.mxu0 %v5210
      %v5290 = vpop.f32.mrf.mxu0
      %v5291 = vadd.f32 %v5250, %v5290
      %5292 = vmatmul.f32.gmra.mxu0 %v5212
      %v5293 = vpop.f32.mrf.mxu0
      %v5294 = vadd.f32 %v5253, %v5293
      %5295 = vmatmul.f32.gmra.mxu0 %v5214
      %v5296 = vpop.f32.mrf.mxu0
      %v5297 = vadd.f32 %v5256, %v5296
      %5298 = vmatmul.f32.gmra.mxu0 %v5216
      %v5299 = vpop.f32.mrf.mxu0
      %v5300 = vadd.f32 %v5259, %v5299
      %5301 = vmatmul.f32.gmra.mxu0 %v5218
      %v5302 = vpop.f32.mrf.mxu0
      %v5303 = vadd.f32 %v5262, %v5302
      %5304 = vdwg.mxu0
      %v5305 = vmax.f32 %v5282, 0.0
      %v5306 = vmax.f32 %v5285, 0.0
      %v5307 = vmax.f32 %v5288, 0.0
      %v5308 = vmax.f32 %v5291, 0.0
      %v5309 = vmax.f32 %v5294, 0.0
      %v5310 = vmax.f32 %v5297, 0.0
      %v5311 = vmax.f32 %v5300, 0.0
      %v5312 = vmax.f32 %v5303, 0.0
      %5313 = vst.msk [vmem:[%s305] sm:$0xff] %vm1333, %v5305
      %5314 = vst.msk [vmem:[%s305 + $0x8] sm:$0xff] %vm1333, %v5306
      %5315 = vst.msk [vmem:[%s305 + $0x10] sm:$0xff] %vm1333, %v5307
      %5316 = vst.msk [vmem:[%s305 + $0x18] sm:$0xff] %vm1333, %v5308
      %5317 = vst.msk [vmem:[%s305 + $0x20] sm:$0xff] %vm1333, %v5309
      %5318 = vst.msk [vmem:[%s305 + $0x28] sm:$0xff] %vm1333, %v5310
      %5319 = vst.msk [vmem:[%s305 + $0x30] sm:$0xff] %vm1333, %v5311
      %5320 = vst.msk [vmem:[%s305 + $0x38] sm:$0xff] %vm1333, %v5312
      %p5321 = scmp.lt.s32.totalorder %s19, 1
      %s5322 = scalar_select %p5321, %s19, 1
      %s5323 = smul.addr %s5322, 8
      %s5324 = smul.addr %s5323, 8
      %s5325 = scalar_lea.vmem %s8, %s5324
      // Predicated region
      $region53: #{tpu_custom_call.1} parent=51 // pred_check
        %p5326 = pneg %p210
      $region54: #{tpu_custom_call.1} parent=51 // pred_check_branch
        %5328 = sbr.rel (%p5326) target = $region56
      $region55: #{tpu_custom_call.1} parent=51 // pred_region
        _
      $region56: #{tpu_custom_call.1} parent=51 // pred_fallthru
        _
    $region52: #{tpu_custom_call.1} parent=5 // pred_fallthru
      _
    %p5329 = scmp.le.s32.totalorder 2, %s14
    // Predicated region
    $region57: #{tpu_custom_call.1} parent=5 // pred_check
      %p5330 = pneg %p5329
    $region58: #{tpu_custom_call.1} parent=5 // pred_check_branch
      %5332 = sbr.rel (%p5330) target = $region60
    $region59: #{tpu_custom_call.1} parent=5 // pred_region
      %s5333 = ssub.s32 %s14, 2
      // Predicated region
      $region61: #{tpu_custom_call.1} parent=59 // pred_check
        %p5334 = pneg %p216
      $region62: #{tpu_custom_call.1} parent=59 // pred_check_branch
        %5336 = sbr.rel (%p5334) target = $region64
      $region63: #{tpu_custom_call.1} parent=59 // pred_region
        %p5337 = scmp.lt.s32.totalorder %s20, 1
        %s5338 = scalar_select %p5337, %s20, 1
        %s5339 = smul.addr %s5338, 8
        %s5340 = smul.addr %s5339, 8
        %s5341 = scalar_lea.vmem %s8, %s5340
      $region64: #{tpu_custom_call.1} parent=59 // pred_fallthru
        _
    $region60: #{tpu_custom_call.1} parent=5 // pred_fallthru
      _
  $region6: #{tpu_custom_call.1} parent=0 // loop_footer
    %s18 = sadd.s32 1, %s14
  $region7: #{tpu_custom_call.1} parent=0 // loop_footer_branch
    %13 = sbr.rel target = $region3
  $region8: #{tpu_custom_call.1} parent=0 // loop_exit
    _

</llo_original>
